<compile_context>
chip_gen: v7x
topology: tpu7x:2x2x1
jax: 0.10.0
libtpu: 0.0.40
codegen_flags: <defaults>
</compile_context>

<pallas_src>
import math
import numpy as np
import jax
import jax.numpy as jnp
from jax.experimental import pallas as pl
from jax.experimental.pallas import tpu as pltpu

# ---------------- model config (small, consistent with the module) ----------
BATCH = 2
SEQ = 8
D_MODEL = 32
NUM_HEADS = 4
D_K = D_MODEL // NUM_HEADS
ROPE_BASE = 10000.0
MASK_FILL = -1000000000.0          # matches masked_fill(mask == 0, -1e9)
INV_SQRT_DK = 1.0 / math.sqrt(D_K)


# ---------------- float32-accurate matmul helper (3-pass bf16 on the MXU) ---
def _split_bf16(x):
    hi = x.astype(jnp.bfloat16)
    lo = (x - hi.astype(jnp.float32)).astype(jnp.bfloat16)
    return hi, lo


def f32_dot(a, b, dims=(((1,), (0,)), ((), ()))):
    """Matmul with ~float32 accuracy via hi/lo bf16 decomposition.

    a @ b == (a_hi + a_lo) @ (b_hi + b_lo) ~= a_hi@b_hi + a_lo@b_hi + a_hi@b_lo
    (the dropped a_lo@b_lo term is ~2^-18 relative).  Each pass is the
    canonical bf16-in / f32-accumulate MXU matmul, so accuracy does not depend
    on the backend's default f32-matmul precision.
    """
    a_hi, a_lo = _split_bf16(a)
    b_hi, b_lo = _split_bf16(b)

    def dg(u, v):
        return jax.lax.dot_general(u, v, dims, preferred_element_type=jnp.float32)

    return dg(a_hi, b_hi) + dg(a_lo, b_hi) + dg(a_hi, b_lo)


# ---------------- Pallas kernel ---------------------------------------------
def mha_kernel(x_ref, w_ref, b_ref, trig_ref, o_ref):
    B, S, D = o_ref.shape
    H, dk = NUM_HEADS, D_K

    xq = x_ref[0]                        # (B*S, D)
    xk = x_ref[1]
    xv = x_ref[2]

    # packed operands: weights already transposed on the host,
    # 1/sqrt(d_k) folded into wq_t / bq.
    wq_t = w_ref[0]                      # (D, D)
    wk_t = w_ref[1]
    wv_t = w_ref[2]
    wo_t = w_ref[3]
    rot = w_ref[4]                       # block-diagonal rotate_half matrix
    bq = b_ref[0:1, :]                   # (1, D)
    bk = b_ref[1:2, :]
    bv = b_ref[2:3, :]
    bo = b_ref[3:4, :]
    cos = trig_ref[0]                    # (B*S, D), per-head cos tiled to full D
    sin = trig_ref[1]

    # full-width projections for all heads and both batch elements at once
    q = f32_dot(xq, wq_t) + bq           # (B*S, D), already scaled by 1/sqrt(dk)
    k = f32_dot(xk, wk_t) + bk
    v = f32_dot(xv, wv_t) + bv

    # rotary embedding on the fused layout: x*cos + rotate_half(x)*sin,
    # rotate_half realized as one matmul with a block-diag perm/sign matrix
    q = q * cos + f32_dot(q, rot) * sin
    k = k * cos + f32_dot(k, rot) * sin

    # additive causal mask built in-kernel (0 where row >= col, -1e9 elsewhere)
    row_i = jax.lax.broadcasted_iota(jnp.int32, (S, S), 0)
    col_i = jax.lax.broadcasted_iota(jnp.int32, (S, S), 1)
    mask_bias = jnp.where(row_i >= col_i, 0.0, MASK_FILL).astype(jnp.float32)

    contract_last = (((1,), (1,)), ((), ()))   # q @ k^T without a transpose

    # per-batch, per-head attention, fully unrolled (B=2, H=4)
    for b in range(B):
        r0 = b * S
        qb = q[r0:r0 + S, :]             # (S, D)
        kb = k[r0:r0 + S, :]
        vb = v[r0:r0 + S, :]
        out_b = None
        for h in range(H):
            lo, hi = h * dk, (h + 1) * dk
            qh = qb[:, lo:hi]            # (S, dk)
            kh = kb[:, lo:hi]
            vh = vb[:, lo:hi]

            scores = f32_dot(qh, kh, dims=contract_last) + mask_bias   # (S, S)
            m = jnp.max(scores, axis=-1, keepdims=True)
            e = jnp.exp(scores - m)
            p = e / jnp.sum(e, axis=-1, keepdims=True)                 # exact

            ctx_h = f32_dot(p, vh)                                     # (S, dk)
            # accumulate the output projection per head (no concat)
            part = f32_dot(ctx_h, wo_t[lo:hi, :])                      # (S, D)
            out_b = part if out_b is None else out_b + part
        o_ref[b] = out_b + bo


def mha_forward(x_all, w_all, biases, trig, batch, seq):
    """Runs the MultiHeadAttention forward pass with the Pallas kernel."""
    rows, D = x_all.shape[1], x_all.shape[2]
    return pl.pallas_call(
        mha_kernel,
        out_shape=jax.ShapeDtypeStruct((batch, seq, D), jnp.float32),
        grid=(1,),                                            # single step
        in_specs=[
            pl.BlockSpec((3, rows, D), lambda i: (0, 0, 0)),  # xq/xk/xv slab
            pl.BlockSpec((5, D, D), lambda i: (0, 0, 0)),     # WqT,WkT,WvT,WoT,R
            pl.BlockSpec((4, D), lambda i: (0, 0)),           # bq,bk,bv,bo
            pl.BlockSpec((2, rows, D), lambda i: (0, 0, 0)),  # cos, sin (tiled)
        ],
        out_specs=pl.BlockSpec((batch, seq, D), lambda i: (0, 0, 0)),
        compiler_params=pltpu.CompilerParams(
            dimension_semantics=("arbitrary",)),
    )(x_all, w_all, biases, trig)


# ---------------- parameter / buffer construction ---------------------------
def init_params(key):
    """Xavier-uniform weights, N(0, 0.2) biases -- same init as the module."""
    ks = jax.random.split(key, 8)
    a = math.sqrt(6.0 / (D_MODEL + D_MODEL))

    def w(k):
        return jax.random.uniform(k, (D_MODEL, D_MODEL), jnp.float32, -a, a)

    def b(k):
        return 0.2 * jax.random.normal(k, (D_MODEL,), jnp.float32)

    return (w(ks[0]), b(ks[1]),   # proj_q
            w(ks[2]), b(ks[3]),   # proj_k
            w(ks[4]), b(ks[5]),   # proj_v
            w(ks[6]), b(ks[7]))   # linear_out


def rotary_tables(seq_len, dim, base=ROPE_BASE):
    inv_freq = 1.0 / (base ** (np.arange(0, dim, 2, dtype=np.float32) / dim))
    t = np.arange(seq_len, dtype=np.float32)
    freqs = np.einsum("i,j->ij", t, inv_freq)       # (S, dim/2)
    emb = np.concatenate([freqs, freqs], axis=-1)   # (S, dim)
    return jnp.asarray(np.cos(emb)), jnp.asarray(np.sin(emb))


def pack_inputs(xq, xk, xv):
    """One (3, B*S, D) slab -> a single input DMA."""
    B, S, D = xq.shape
    return jnp.stack([xq, xk, xv], axis=0).reshape(3, B * S, D)


def pack_operands(params, cos, sin, batch):
    """Host-side layout plumbing: transpose weights, fold 1/sqrt(d_k) into the
    q projection, build the block-diagonal rotate_half matrix, tile cos/sin to
    the fused (B*S, D) layout, and pack small operands into slabs."""
    Wq, bq, Wk, bk, Wv, bv, Wo, bo = params
    H, dk, D = NUM_HEADS, D_K, D_MODEL

    # x @ R == rotate_half(x) applied independently within each head chunk
    R = np.zeros((D, D), dtype=np.float32)
    half = dk // 2
    for h in range(H):
        base = h * dk
        for j in range(half):
            R[base + j + half, base + j] = -1.0
            R[base + j, base + j + half] = 1.0

    w_all = jnp.stack([Wq.T * INV_SQRT_DK,        # scale folded into Wq^T
                       Wk.T, Wv.T, Wo.T,
                       jnp.asarray(R)], axis=0)                          # (5,D,D)
    biases = jnp.stack([bq * INV_SQRT_DK, bk, bv, bo], axis=0)           # (4,D)
    cos_full = jnp.tile(jnp.tile(cos, (1, H)), (batch, 1))               # (B*S,D)
    sin_full = jnp.tile(jnp.tile(sin, (1, H)), (batch, 1))
    trig = jnp.stack([cos_full, sin_full], axis=0)                       # (2,B*S,D)
    return w_all, biases, trig


# ---------------- float64 NumPy reference (mirrors the PyTorch forward) -----
def reference_mha_np(xq, xk, xv, params, cos, sin):
    p64 = [np.asarray(p, np.float64) for p in params]
    Wq, bq, Wk, bk, Wv, bv, Wo, bo = p64
    xq = np.asarray(xq, np.float64)
    xk = np.asarray(xk, np.float64)
    xv = np.asarray(xv, np.float64)
    B, S, D = xq.shape
    H, dk = NUM_HEADS, D_K

    def split_heads(x):
        return x.reshape(B, S, H, dk).transpose(0, 2, 1, 3)   # (B, H, S, dk)

    q = split_heads(xq @ Wq.T + bq)
    k = split_heads(xk @ Wk.T + bk)
    v = split_heads(xv @ Wv.T + bv)

    def rot_half(x):
        x1, x2 = np.split(x, 2, axis=-1)
        return np.concatenate([-x2, x1], axis=-1)

    c = np.asarray(cos, np.float64)[None, None]
    s = np.asarray(sin, np.float64)[None, None]
    q = q * c + rot_half(q) * s
    k = k * c + rot_half(k) * s

    scores = np.einsum("bhqd,bhkd->bhqk", q, k) / math.sqrt(dk)
    causal = np.tril(np.ones((S, S), dtype=np.float64))
    scores = np.where(causal[None, None] == 0.0, MASK_FILL, scores)
    scores = scores - scores.max(-1, keepdims=True)
    e = np.exp(scores)
    p = e / e.sum(-1, keepdims=True)
    ctx = np.einsum("bhqk,bhkd->bhqd", p, v)
    ctx = ctx.transpose(0, 2, 1, 3).reshape(B, S, D)
    return ctx @ Wo.T + bo


# ---------------- main -------------------------------------------------------
if __name__ == "__main__":
    key = jax.random.PRNGKey(0)
    k_params, k_q, k_k, k_v = jax.random.split(key, 4)

    params = init_params(k_params)
    cos, sin = rotary_tables(SEQ, D_K)
    w_all, biases, trig = pack_operands(params, cos, sin, BATCH)

    xq = jax.random.normal(k_q, (BATCH, SEQ, D_MODEL), jnp.float32)
    xk = jax.random.normal(k_k, (BATCH, SEQ, D_MODEL), jnp.float32)
    xv = jax.random.normal(k_v, (BATCH, SEQ, D_MODEL), jnp.float32)
    x_all = pack_inputs(xq, xk, xv)

    out = mha_forward(x_all, w_all, biases, trig, BATCH, SEQ)
    out = jax.block_until_ready(out)

    ref = reference_mha_np(xq, xk, xv, params, cos, sin)
    np.testing.assert_allclose(np.asarray(out), ref.astype(np.float32),
                               rtol=2e-3, atol=2e-3)

    print("KERNEL_OK")
</pallas_src>

<mosaic_0001>
module attributes {stable_mosaic.version = 11 : i64} {
  func.func @mha_kernel(%arg0: i32, %arg1: memref<3x16x32xf32, #tpu.memory_space<vmem>>, %arg2: memref<5x32x32xf32, #tpu.memory_space<vmem>>, %arg3: memref<4x32xf32, #tpu.memory_space<vmem>>, %arg4: memref<2x16x32xf32, #tpu.memory_space<vmem>>, %arg5: memref<2x8x32xf32, #tpu.memory_space<vmem>>) attributes {dimension_semantics = [#tpu.dimension_semantics<arbitrary>], iteration_bounds = array<i64: 1>, scalar_prefetch = 0 : i64, scratch_operands = 0 : i64, tpu.core_type = #tpu.core_type<tc>, window_params = [{pipeline_mode = #tpu.pipeline_mode<synchronous>, transform_indices = @transform_0, window_bounds = array<i64: 3, 16, 32>}, {pipeline_mode = #tpu.pipeline_mode<synchronous>, transform_indices = @transform_1, window_bounds = array<i64: 5, 32, 32>}, {pipeline_mode = #tpu.pipeline_mode<synchronous>, transform_indices = @transform_2, window_bounds = array<i64: 4, 32>}, {pipeline_mode = #tpu.pipeline_mode<synchronous>, transform_indices = @transform_3, window_bounds = array<i64: 2, 16, 32>}, {pipeline_mode = #tpu.pipeline_mode<synchronous>, transform_indices = @transform_4, window_bounds = array<i64: 2, 8, 32>}]} {
    %c0 = arith.constant 0 : index
    %c0_0 = arith.constant 0 : index
    %c0_1 = arith.constant 0 : index
    %0 = vector.load %arg1[%c0, %c0_0, %c0_1] : memref<3x16x32xf32, #tpu.memory_space<vmem>>, vector<1x16x32xf32>
    %1 = vector.shape_cast %0 : vector<1x16x32xf32> to vector<16x32xf32>
    %c1 = arith.constant 1 : index
    %c0_2 = arith.constant 0 : index
    %c0_3 = arith.constant 0 : index
    %2 = vector.load %arg1[%c1, %c0_2, %c0_3] : memref<3x16x32xf32, #tpu.memory_space<vmem>>, vector<1x16x32xf32>
    %3 = vector.shape_cast %2 : vector<1x16x32xf32> to vector<16x32xf32>
    %c2 = arith.constant 2 : index
    %c0_4 = arith.constant 0 : index
    %c0_5 = arith.constant 0 : index
    %4 = vector.load %arg1[%c2, %c0_4, %c0_5] : memref<3x16x32xf32, #tpu.memory_space<vmem>>, vector<1x16x32xf32>
    %5 = vector.shape_cast %4 : vector<1x16x32xf32> to vector<16x32xf32>
    %c0_6 = arith.constant 0 : index
    %c0_7 = arith.constant 0 : index
    %c0_8 = arith.constant 0 : index
    %6 = vector.load %arg2[%c0_6, %c0_7, %c0_8] : memref<5x32x32xf32, #tpu.memory_space<vmem>>, vector<1x32x32xf32>
    %7 = vector.shape_cast %6 : vector<1x32x32xf32> to vector<32x32xf32>
    %c1_9 = arith.constant 1 : index
    %c0_10 = arith.constant 0 : index
    %c0_11 = arith.constant 0 : index
    %8 = vector.load %arg2[%c1_9, %c0_10, %c0_11] : memref<5x32x32xf32, #tpu.memory_space<vmem>>, vector<1x32x32xf32>
    %9 = vector.shape_cast %8 : vector<1x32x32xf32> to vector<32x32xf32>
    %c2_12 = arith.constant 2 : index
    %c0_13 = arith.constant 0 : index
    %c0_14 = arith.constant 0 : index
    %10 = vector.load %arg2[%c2_12, %c0_13, %c0_14] : memref<5x32x32xf32, #tpu.memory_space<vmem>>, vector<1x32x32xf32>
    %11 = vector.shape_cast %10 : vector<1x32x32xf32> to vector<32x32xf32>
    %c3 = arith.constant 3 : index
    %c0_15 = arith.constant 0 : index
    %c0_16 = arith.constant 0 : index
    %12 = vector.load %arg2[%c3, %c0_15, %c0_16] : memref<5x32x32xf32, #tpu.memory_space<vmem>>, vector<1x32x32xf32>
    %13 = vector.shape_cast %12 : vector<1x32x32xf32> to vector<32x32xf32>
    %c4 = arith.constant 4 : index
    %c0_17 = arith.constant 0 : index
    %c0_18 = arith.constant 0 : index
    %14 = vector.load %arg2[%c4, %c0_17, %c0_18] : memref<5x32x32xf32, #tpu.memory_space<vmem>>, vector<1x32x32xf32>
    %15 = vector.shape_cast %14 : vector<1x32x32xf32> to vector<32x32xf32>
    %c0_19 = arith.constant 0 : index
    %c0_20 = arith.constant 0 : index
    %16 = vector.load %arg3[%c0_19, %c0_20] : memref<4x32xf32, #tpu.memory_space<vmem>>, vector<1x32xf32>
    %c1_21 = arith.constant 1 : index
    %c0_22 = arith.constant 0 : index
    %17 = vector.load %arg3[%c1_21, %c0_22] : memref<4x32xf32, #tpu.memory_space<vmem>>, vector<1x32xf32>
    %c2_23 = arith.constant 2 : index
    %c0_24 = arith.constant 0 : index
    %18 = vector.load %arg3[%c2_23, %c0_24] : memref<4x32xf32, #tpu.memory_space<vmem>>, vector<1x32xf32>
    %c3_25 = arith.constant 3 : index
    %c0_26 = arith.constant 0 : index
    %19 = vector.load %arg3[%c3_25, %c0_26] : memref<4x32xf32, #tpu.memory_space<vmem>>, vector<1x32xf32>
    %c0_27 = arith.constant 0 : index
    %c0_28 = arith.constant 0 : index
    %c0_29 = arith.constant 0 : index
    %20 = vector.load %arg4[%c0_27, %c0_28, %c0_29] : memref<2x16x32xf32, #tpu.memory_space<vmem>>, vector<1x16x32xf32>
    %21 = vector.shape_cast %20 : vector<1x16x32xf32> to vector<16x32xf32>
    %c1_30 = arith.constant 1 : index
    %c0_31 = arith.constant 0 : index
    %c0_32 = arith.constant 0 : index
    %22 = vector.load %arg4[%c1_30, %c0_31, %c0_32] : memref<2x16x32xf32, #tpu.memory_space<vmem>>, vector<1x16x32xf32>
    %23 = vector.shape_cast %22 : vector<1x16x32xf32> to vector<16x32xf32>
    %24 = arith.truncf %1 : vector<16x32xf32> to vector<16x32xbf16>
    %25 = arith.extf %24 : vector<16x32xbf16> to vector<16x32xf32>
    %26 = arith.subf %1, %25 : vector<16x32xf32>
    %27 = arith.truncf %26 : vector<16x32xf32> to vector<16x32xbf16>
    %28 = arith.truncf %7 : vector<32x32xf32> to vector<32x32xbf16>
    %29 = arith.extf %28 : vector<32x32xbf16> to vector<32x32xf32>
    %30 = arith.subf %7, %29 : vector<32x32xf32>
    %31 = arith.truncf %30 : vector<32x32xf32> to vector<32x32xbf16>
    %cst = arith.constant dense<0.000000e+00> : vector<16x32xf32>
    %32 = tpu.matmul %24, %28, %cst {dimension_numbers = #tpu.dot_dimension_numbers<[1], [0], [0], [1], [0, 0, 1, 1], [], []>} : vector<16x32xbf16>, vector<32x32xbf16>, vector<16x32xf32> -> vector<16x32xf32>
    %cst_33 = arith.constant dense<0.000000e+00> : vector<16x32xf32>
    %33 = tpu.matmul %27, %28, %cst_33 {dimension_numbers = #tpu.dot_dimension_numbers<[1], [0], [0], [1], [0, 0, 1, 1], [], []>} : vector<16x32xbf16>, vector<32x32xbf16>, vector<16x32xf32> -> vector<16x32xf32>
    %34 = arith.addf %32, %33 : vector<16x32xf32>
    %cst_34 = arith.constant dense<0.000000e+00> : vector<16x32xf32>
    %35 = tpu.matmul %24, %31, %cst_34 {dimension_numbers = #tpu.dot_dimension_numbers<[1], [0], [0], [1], [0, 0, 1, 1], [], []>} : vector<16x32xbf16>, vector<32x32xbf16>, vector<16x32xf32> -> vector<16x32xf32>
    %36 = arith.addf %34, %35 : vector<16x32xf32>
    %37 = vector.broadcast %16 : vector<1x32xf32> to vector<16x32xf32>
    %38 = arith.addf %36, %37 : vector<16x32xf32>
    %39 = arith.truncf %3 : vector<16x32xf32> to vector<16x32xbf16>
    %40 = arith.extf %39 : vector<16x32xbf16> to vector<16x32xf32>
    %41 = arith.subf %3, %40 : vector<16x32xf32>
    %42 = arith.truncf %41 : vector<16x32xf32> to vector<16x32xbf16>
    %43 = arith.truncf %9 : vector<32x32xf32> to vector<32x32xbf16>
    %44 = arith.extf %43 : vector<32x32xbf16> to vector<32x32xf32>
    %45 = arith.subf %9, %44 : vector<32x32xf32>
    %46 = arith.truncf %45 : vector<32x32xf32> to vector<32x32xbf16>
    %cst_35 = arith.constant dense<0.000000e+00> : vector<16x32xf32>
    %47 = tpu.matmul %39, %43, %cst_35 {dimension_numbers = #tpu.dot_dimension_numbers<[1], [0], [0], [1], [0, 0, 1, 1], [], []>} : vector<16x32xbf16>, vector<32x32xbf16>, vector<16x32xf32> -> vector<16x32xf32>
    %cst_36 = arith.constant dense<0.000000e+00> : vector<16x32xf32>
    %48 = tpu.matmul %42, %43, %cst_36 {dimension_numbers = #tpu.dot_dimension_numbers<[1], [0], [0], [1], [0, 0, 1, 1], [], []>} : vector<16x32xbf16>, vector<32x32xbf16>, vector<16x32xf32> -> vector<16x32xf32>
    %49 = arith.addf %47, %48 : vector<16x32xf32>
    %cst_37 = arith.constant dense<0.000000e+00> : vector<16x32xf32>
    %50 = tpu.matmul %39, %46, %cst_37 {dimension_numbers = #tpu.dot_dimension_numbers<[1], [0], [0], [1], [0, 0, 1, 1], [], []>} : vector<16x32xbf16>, vector<32x32xbf16>, vector<16x32xf32> -> vector<16x32xf32>
    %51 = arith.addf %49, %50 : vector<16x32xf32>
    %52 = vector.broadcast %17 : vector<1x32xf32> to vector<16x32xf32>
    %53 = arith.addf %51, %52 : vector<16x32xf32>
    %54 = arith.truncf %5 : vector<16x32xf32> to vector<16x32xbf16>
    %55 = arith.extf %54 : vector<16x32xbf16> to vector<16x32xf32>
    %56 = arith.subf %5, %55 : vector<16x32xf32>
    %57 = arith.truncf %56 : vector<16x32xf32> to vector<16x32xbf16>
    %58 = arith.truncf %11 : vector<32x32xf32> to vector<32x32xbf16>
    %59 = arith.extf %58 : vector<32x32xbf16> to vector<32x32xf32>
    %60 = arith.subf %11, %59 : vector<32x32xf32>
    %61 = arith.truncf %60 : vector<32x32xf32> to vector<32x32xbf16>
    %cst_38 = arith.constant dense<0.000000e+00> : vector<16x32xf32>
    %62 = tpu.matmul %54, %58, %cst_38 {dimension_numbers = #tpu.dot_dimension_numbers<[1], [0], [0], [1], [0, 0, 1, 1], [], []>} : vector<16x32xbf16>, vector<32x32xbf16>, vector<16x32xf32> -> vector<16x32xf32>
    %cst_39 = arith.constant dense<0.000000e+00> : vector<16x32xf32>
    %63 = tpu.matmul %57, %58, %cst_39 {dimension_numbers = #tpu.dot_dimension_numbers<[1], [0], [0], [1], [0, 0, 1, 1], [], []>} : vector<16x32xbf16>, vector<32x32xbf16>, vector<16x32xf32> -> vector<16x32xf32>
    %64 = arith.addf %62, %63 : vector<16x32xf32>
    %cst_40 = arith.constant dense<0.000000e+00> : vector<16x32xf32>
    %65 = tpu.matmul %54, %61, %cst_40 {dimension_numbers = #tpu.dot_dimension_numbers<[1], [0], [0], [1], [0, 0, 1, 1], [], []>} : vector<16x32xbf16>, vector<32x32xbf16>, vector<16x32xf32> -> vector<16x32xf32>
    %66 = arith.addf %64, %65 : vector<16x32xf32>
    %67 = vector.broadcast %18 : vector<1x32xf32> to vector<16x32xf32>
    %68 = arith.addf %66, %67 : vector<16x32xf32>
    %69 = arith.mulf %38, %21 : vector<16x32xf32>
    %70 = arith.truncf %38 : vector<16x32xf32> to vector<16x32xbf16>
    %71 = arith.extf %70 : vector<16x32xbf16> to vector<16x32xf32>
    %72 = arith.subf %38, %71 : vector<16x32xf32>
    %73 = arith.truncf %72 : vector<16x32xf32> to vector<16x32xbf16>
    %74 = arith.truncf %15 : vector<32x32xf32> to vector<32x32xbf16>
    %75 = arith.extf %74 : vector<32x32xbf16> to vector<32x32xf32>
    %76 = arith.subf %15, %75 : vector<32x32xf32>
    %77 = arith.truncf %76 : vector<32x32xf32> to vector<32x32xbf16>
    %cst_41 = arith.constant dense<0.000000e+00> : vector<16x32xf32>
    %78 = tpu.matmul %70, %74, %cst_41 {dimension_numbers = #tpu.dot_dimension_numbers<[1], [0], [0], [1], [0, 0, 1, 1], [], []>} : vector<16x32xbf16>, vector<32x32xbf16>, vector<16x32xf32> -> vector<16x32xf32>
    %cst_42 = arith.constant dense<0.000000e+00> : vector<16x32xf32>
    %79 = tpu.matmul %73, %74, %cst_42 {dimension_numbers = #tpu.dot_dimension_numbers<[1], [0], [0], [1], [0, 0, 1, 1], [], []>} : vector<16x32xbf16>, vector<32x32xbf16>, vector<16x32xf32> -> vector<16x32xf32>
    %80 = arith.addf %78, %79 : vector<16x32xf32>
    %cst_43 = arith.constant dense<0.000000e+00> : vector<16x32xf32>
    %81 = tpu.matmul %70, %77, %cst_43 {dimension_numbers = #tpu.dot_dimension_numbers<[1], [0], [0], [1], [0, 0, 1, 1], [], []>} : vector<16x32xbf16>, vector<32x32xbf16>, vector<16x32xf32> -> vector<16x32xf32>
    %82 = arith.addf %80, %81 : vector<16x32xf32>
    %83 = arith.mulf %82, %23 : vector<16x32xf32>
    %84 = arith.addf %69, %83 : vector<16x32xf32>
    %85 = arith.mulf %53, %21 : vector<16x32xf32>
    %86 = arith.truncf %53 : vector<16x32xf32> to vector<16x32xbf16>
    %87 = arith.extf %86 : vector<16x32xbf16> to vector<16x32xf32>
    %88 = arith.subf %53, %87 : vector<16x32xf32>
    %89 = arith.truncf %88 : vector<16x32xf32> to vector<16x32xbf16>
    %90 = arith.truncf %15 : vector<32x32xf32> to vector<32x32xbf16>
    %91 = arith.extf %90 : vector<32x32xbf16> to vector<32x32xf32>
    %92 = arith.subf %15, %91 : vector<32x32xf32>
    %93 = arith.truncf %92 : vector<32x32xf32> to vector<32x32xbf16>
    %cst_44 = arith.constant dense<0.000000e+00> : vector<16x32xf32>
    %94 = tpu.matmul %86, %90, %cst_44 {dimension_numbers = #tpu.dot_dimension_numbers<[1], [0], [0], [1], [0, 0, 1, 1], [], []>} : vector<16x32xbf16>, vector<32x32xbf16>, vector<16x32xf32> -> vector<16x32xf32>
    %cst_45 = arith.constant dense<0.000000e+00> : vector<16x32xf32>
    %95 = tpu.matmul %89, %90, %cst_45 {dimension_numbers = #tpu.dot_dimension_numbers<[1], [0], [0], [1], [0, 0, 1, 1], [], []>} : vector<16x32xbf16>, vector<32x32xbf16>, vector<16x32xf32> -> vector<16x32xf32>
    %96 = arith.addf %94, %95 : vector<16x32xf32>
    %cst_46 = arith.constant dense<0.000000e+00> : vector<16x32xf32>
    %97 = tpu.matmul %86, %93, %cst_46 {dimension_numbers = #tpu.dot_dimension_numbers<[1], [0], [0], [1], [0, 0, 1, 1], [], []>} : vector<16x32xbf16>, vector<32x32xbf16>, vector<16x32xf32> -> vector<16x32xf32>
    %98 = arith.addf %96, %97 : vector<16x32xf32>
    %99 = arith.mulf %98, %23 : vector<16x32xf32>
    %100 = arith.addf %85, %99 : vector<16x32xf32>
    %101 = tpu.iota {dimensions = array<i32: 0>} : vector<8x8xi32>
    %102 = tpu.iota {dimensions = array<i32: 1>} : vector<8x8xi32>
    %103 = arith.cmpi sge, %101, %102 : vector<8x8xi32>
    %cst_47 = arith.constant 0.000000e+00 : f32
    %cst_48 = arith.constant -1.000000e+09 : f32
    %104 = vector.broadcast %cst_47 : f32 to vector<8x8xf32>
    %105 = vector.broadcast %cst_48 : f32 to vector<8x8xf32>
    %106 = arith.select %103, %104, %105 : vector<8x8xi1>, vector<8x8xf32>
    %107 = vector.extract_strided_slice %84 {offsets = [0, 0], sizes = [8, 32], strides = [1, 1]} : vector<16x32xf32> to vector<8x32xf32>
    %108 = vector.extract_strided_slice %100 {offsets = [0, 0], sizes = [8, 32], strides = [1, 1]} : vector<16x32xf32> to vector<8x32xf32>
    %109 = vector.extract_strided_slice %68 {offsets = [0, 0], sizes = [8, 32], strides = [1, 1]} : vector<16x32xf32> to vector<8x32xf32>
    %110 = vector.extract_strided_slice %107 {offsets = [0, 0], sizes = [8, 8], strides = [1, 1]} : vector<8x32xf32> to vector<8x8xf32>
    %111 = vector.extract_strided_slice %108 {offsets = [0, 0], sizes = [8, 8], strides = [1, 1]} : vector<8x32xf32> to vector<8x8xf32>
    %112 = vector.extract_strided_slice %109 {offsets = [0, 0], sizes = [8, 8], strides = [1, 1]} : vector<8x32xf32> to vector<8x8xf32>
    %113 = arith.truncf %110 : vector<8x8xf32> to vector<8x8xbf16>
    %114 = arith.extf %113 : vector<8x8xbf16> to vector<8x8xf32>
    %115 = arith.subf %110, %114 : vector<8x8xf32>
    %116 = arith.truncf %115 : vector<8x8xf32> to vector<8x8xbf16>
    %117 = arith.truncf %111 : vector<8x8xf32> to vector<8x8xbf16>
    %118 = arith.extf %117 : vector<8x8xbf16> to vector<8x8xf32>
    %119 = arith.subf %111, %118 : vector<8x8xf32>
    %120 = arith.truncf %119 : vector<8x8xf32> to vector<8x8xbf16>
    %cst_49 = arith.constant dense<0.000000e+00> : vector<8x8xf32>
    %121 = tpu.matmul %113, %117, %cst_49 {dimension_numbers = #tpu.dot_dimension_numbers<[1], [1], [0], [0], [0, 0, 1, 0], [], []>} : vector<8x8xbf16>, vector<8x8xbf16>, vector<8x8xf32> -> vector<8x8xf32>
    %cst_50 = arith.constant dense<0.000000e+00> : vector<8x8xf32>
    %122 = tpu.matmul %116, %117, %cst_50 {dimension_numbers = #tpu.dot_dimension_numbers<[1], [1], [0], [0], [0, 0, 1, 0], [], []>} : vector<8x8xbf16>, vector<8x8xbf16>, vector<8x8xf32> -> vector<8x8xf32>
    %123 = arith.addf %121, %122 : vector<8x8xf32>
    %cst_51 = arith.constant dense<0.000000e+00> : vector<8x8xf32>
    %124 = tpu.matmul %113, %120, %cst_51 {dimension_numbers = #tpu.dot_dimension_numbers<[1], [1], [0], [0], [0, 0, 1, 0], [], []>} : vector<8x8xbf16>, vector<8x8xbf16>, vector<8x8xf32> -> vector<8x8xf32>
    %125 = arith.addf %123, %124 : vector<8x8xf32>
    %126 = arith.addf %125, %106 : vector<8x8xf32>
    %cst_52 = arith.constant dense<0xFF800000> : vector<8xf32>
    %127 = vector.multi_reduction <maximumf>, %126, %cst_52 [1] : vector<8x8xf32> to vector<8xf32>
    %128 = vector.shape_cast %127 : vector<8xf32> to vector<8x1xf32>
    %129 = vector.broadcast %128 : vector<8x1xf32> to vector<8x8xf32>
    %130 = arith.subf %126, %129 : vector<8x8xf32>
    %131 = math.exp %130 : vector<8x8xf32>
    %cst_53 = arith.constant dense<0.000000e+00> : vector<8xf32>
    %132 = vector.multi_reduction <add>, %131, %cst_53 [1] : vector<8x8xf32> to vector<8xf32>
    %133 = vector.shape_cast %132 : vector<8xf32> to vector<8x1xf32>
    %134 = vector.broadcast %133 : vector<8x1xf32> to vector<8x8xf32>
    %135 = arith.divf %131, %134 : vector<8x8xf32>
    %136 = arith.truncf %135 : vector<8x8xf32> to vector<8x8xbf16>
    %137 = arith.extf %136 : vector<8x8xbf16> to vector<8x8xf32>
    %138 = arith.subf %135, %137 : vector<8x8xf32>
    %139 = arith.truncf %138 : vector<8x8xf32> to vector<8x8xbf16>
    %140 = arith.truncf %112 : vector<8x8xf32> to vector<8x8xbf16>
    %141 = arith.extf %140 : vector<8x8xbf16> to vector<8x8xf32>
    %142 = arith.subf %112, %141 : vector<8x8xf32>
    %143 = arith.truncf %142 : vector<8x8xf32> to vector<8x8xbf16>
    %cst_54 = arith.constant dense<0.000000e+00> : vector<8x8xf32>
    %144 = tpu.matmul %136, %140, %cst_54 {dimension_numbers = #tpu.dot_dimension_numbers<[1], [0], [0], [1], [0, 0, 1, 1], [], []>} : vector<8x8xbf16>, vector<8x8xbf16>, vector<8x8xf32> -> vector<8x8xf32>
    %cst_55 = arith.constant dense<0.000000e+00> : vector<8x8xf32>
    %145 = tpu.matmul %139, %140, %cst_55 {dimension_numbers = #tpu.dot_dimension_numbers<[1], [0], [0], [1], [0, 0, 1, 1], [], []>} : vector<8x8xbf16>, vector<8x8xbf16>, vector<8x8xf32> -> vector<8x8xf32>
    %146 = arith.addf %144, %145 : vector<8x8xf32>
    %cst_56 = arith.constant dense<0.000000e+00> : vector<8x8xf32>
    %147 = tpu.matmul %136, %143, %cst_56 {dimension_numbers = #tpu.dot_dimension_numbers<[1], [0], [0], [1], [0, 0, 1, 1], [], []>} : vector<8x8xbf16>, vector<8x8xbf16>, vector<8x8xf32> -> vector<8x8xf32>
    %148 = arith.addf %146, %147 : vector<8x8xf32>
    %149 = vector.extract_strided_slice %13 {offsets = [0, 0], sizes = [8, 32], strides = [1, 1]} : vector<32x32xf32> to vector<8x32xf32>
    %150 = arith.truncf %148 : vector<8x8xf32> to vector<8x8xbf16>
    %151 = arith.extf %150 : vector<8x8xbf16> to vector<8x8xf32>
    %152 = arith.subf %148, %151 : vector<8x8xf32>
    %153 = arith.truncf %152 : vector<8x8xf32> to vector<8x8xbf16>
    %154 = arith.truncf %149 : vector<8x32xf32> to vector<8x32xbf16>
    %155 = arith.extf %154 : vector<8x32xbf16> to vector<8x32xf32>
    %156 = arith.subf %149, %155 : vector<8x32xf32>
    %157 = arith.truncf %156 : vector<8x32xf32> to vector<8x32xbf16>
    %cst_57 = arith.constant dense<0.000000e+00> : vector<8x32xf32>
    %158 = tpu.matmul %150, %154, %cst_57 {dimension_numbers = #tpu.dot_dimension_numbers<[1], [0], [0], [1], [0, 0, 1, 1], [], []>} : vector<8x8xbf16>, vector<8x32xbf16>, vector<8x32xf32> -> vector<8x32xf32>
    %cst_58 = arith.constant dense<0.000000e+00> : vector<8x32xf32>
    %159 = tpu.matmul %153, %154, %cst_58 {dimension_numbers = #tpu.dot_dimension_numbers<[1], [0], [0], [1], [0, 0, 1, 1], [], []>} : vector<8x8xbf16>, vector<8x32xbf16>, vector<8x32xf32> -> vector<8x32xf32>
    %160 = arith.addf %158, %159 : vector<8x32xf32>
    %cst_59 = arith.constant dense<0.000000e+00> : vector<8x32xf32>
    %161 = tpu.matmul %150, %157, %cst_59 {dimension_numbers = #tpu.dot_dimension_numbers<[1], [0], [0], [1], [0, 0, 1, 1], [], []>} : vector<8x8xbf16>, vector<8x32xbf16>, vector<8x32xf32> -> vector<8x32xf32>
    %162 = arith.addf %160, %161 : vector<8x32xf32>
    %163 = vector.extract_strided_slice %107 {offsets = [0, 8], sizes = [8, 8], strides = [1, 1]} : vector<8x32xf32> to vector<8x8xf32>
    %164 = vector.extract_strided_slice %108 {offsets = [0, 8], sizes = [8, 8], strides = [1, 1]} : vector<8x32xf32> to vector<8x8xf32>
    %165 = vector.extract_strided_slice %109 {offsets = [0, 8], sizes = [8, 8], strides = [1, 1]} : vector<8x32xf32> to vector<8x8xf32>
    %166 = arith.truncf %163 : vector<8x8xf32> to vector<8x8xbf16>
    %167 = arith.extf %166 : vector<8x8xbf16> to vector<8x8xf32>
    %168 = arith.subf %163, %167 : vector<8x8xf32>
    %169 = arith.truncf %168 : vector<8x8xf32> to vector<8x8xbf16>
    %170 = arith.truncf %164 : vector<8x8xf32> to vector<8x8xbf16>
    %171 = arith.extf %170 : vector<8x8xbf16> to vector<8x8xf32>
    %172 = arith.subf %164, %171 : vector<8x8xf32>
    %173 = arith.truncf %172 : vector<8x8xf32> to vector<8x8xbf16>
    %cst_60 = arith.constant dense<0.000000e+00> : vector<8x8xf32>
    %174 = tpu.matmul %166, %170, %cst_60 {dimension_numbers = #tpu.dot_dimension_numbers<[1], [1], [0], [0], [0, 0, 1, 0], [], []>} : vector<8x8xbf16>, vector<8x8xbf16>, vector<8x8xf32> -> vector<8x8xf32>
    %cst_61 = arith.constant dense<0.000000e+00> : vector<8x8xf32>
    %175 = tpu.matmul %169, %170, %cst_61 {dimension_numbers = #tpu.dot_dimension_numbers<[1], [1], [0], [0], [0, 0, 1, 0], [], []>} : vector<8x8xbf16>, vector<8x8xbf16>, vector<8x8xf32> -> vector<8x8xf32>
    %176 = arith.addf %174, %175 : vector<8x8xf32>
    %cst_62 = arith.constant dense<0.000000e+00> : vector<8x8xf32>
    %177 = tpu.matmul %166, %173, %cst_62 {dimension_numbers = #tpu.dot_dimension_numbers<[1], [1], [0], [0], [0, 0, 1, 0], [], []>} : vector<8x8xbf16>, vector<8x8xbf16>, vector<8x8xf32> -> vector<8x8xf32>
    %178 = arith.addf %176, %177 : vector<8x8xf32>
    %179 = arith.addf %178, %106 : vector<8x8xf32>
    %cst_63 = arith.constant dense<0xFF800000> : vector<8xf32>
    %180 = vector.multi_reduction <maximumf>, %179, %cst_63 [1] : vector<8x8xf32> to vector<8xf32>
    %181 = vector.shape_cast %180 : vector<8xf32> to vector<8x1xf32>
    %182 = vector.broadcast %181 : vector<8x1xf32> to vector<8x8xf32>
    %183 = arith.subf %179, %182 : vector<8x8xf32>
    %184 = math.exp %183 : vector<8x8xf32>
    %cst_64 = arith.constant dense<0.000000e+00> : vector<8xf32>
    %185 = vector.multi_reduction <add>, %184, %cst_64 [1] : vector<8x8xf32> to vector<8xf32>
    %186 = vector.shape_cast %185 : vector<8xf32> to vector<8x1xf32>
    %187 = vector.broadcast %186 : vector<8x1xf32> to vector<8x8xf32>
    %188 = arith.divf %184, %187 : vector<8x8xf32>
    %189 = arith.truncf %188 : vector<8x8xf32> to vector<8x8xbf16>
    %190 = arith.extf %189 : vector<8x8xbf16> to vector<8x8xf32>
    %191 = arith.subf %188, %190 : vector<8x8xf32>
    %192 = arith.truncf %191 : vector<8x8xf32> to vector<8x8xbf16>
    %193 = arith.truncf %165 : vector<8x8xf32> to vector<8x8xbf16>
    %194 = arith.extf %193 : vector<8x8xbf16> to vector<8x8xf32>
    %195 = arith.subf %165, %194 : vector<8x8xf32>
    %196 = arith.truncf %195 : vector<8x8xf32> to vector<8x8xbf16>
    %cst_65 = arith.constant dense<0.000000e+00> : vector<8x8xf32>
    %197 = tpu.matmul %189, %193, %cst_65 {dimension_numbers = #tpu.dot_dimension_numbers<[1], [0], [0], [1], [0, 0, 1, 1], [], []>} : vector<8x8xbf16>, vector<8x8xbf16>, vector<8x8xf32> -> vector<8x8xf32>
    %cst_66 = arith.constant dense<0.000000e+00> : vector<8x8xf32>
    %198 = tpu.matmul %192, %193, %cst_66 {dimension_numbers = #tpu.dot_dimension_numbers<[1], [0], [0], [1], [0, 0, 1, 1], [], []>} : vector<8x8xbf16>, vector<8x8xbf16>, vector<8x8xf32> -> vector<8x8xf32>
    %199 = arith.addf %197, %198 : vector<8x8xf32>
    %cst_67 = arith.constant dense<0.000000e+00> : vector<8x8xf32>
    %200 = tpu.matmul %189, %196, %cst_67 {dimension_numbers = #tpu.dot_dimension_numbers<[1], [0], [0], [1], [0, 0, 1, 1], [], []>} : vector<8x8xbf16>, vector<8x8xbf16>, vector<8x8xf32> -> vector<8x8xf32>
    %201 = arith.addf %199, %200 : vector<8x8xf32>
    %202 = vector.extract_strided_slice %13 {offsets = [8, 0], sizes = [8, 32], strides = [1, 1]} : vector<32x32xf32> to vector<8x32xf32>
    %203 = arith.truncf %201 : vector<8x8xf32> to vector<8x8xbf16>
    %204 = arith.extf %203 : vector<8x8xbf16> to vector<8x8xf32>
    %205 = arith.subf %201, %204 : vector<8x8xf32>
    %206 = arith.truncf %205 : vector<8x8xf32> to vector<8x8xbf16>
    %207 = arith.truncf %202 : vector<8x32xf32> to vector<8x32xbf16>
    %208 = arith.extf %207 : vector<8x32xbf16> to vector<8x32xf32>
    %209 = arith.subf %202, %208 : vector<8x32xf32>
    %210 = arith.truncf %209 : vector<8x32xf32> to vector<8x32xbf16>
    %cst_68 = arith.constant dense<0.000000e+00> : vector<8x32xf32>
    %211 = tpu.matmul %203, %207, %cst_68 {dimension_numbers = #tpu.dot_dimension_numbers<[1], [0], [0], [1], [0, 0, 1, 1], [], []>} : vector<8x8xbf16>, vector<8x32xbf16>, vector<8x32xf32> -> vector<8x32xf32>
    %cst_69 = arith.constant dense<0.000000e+00> : vector<8x32xf32>
    %212 = tpu.matmul %206, %207, %cst_69 {dimension_numbers = #tpu.dot_dimension_numbers<[1], [0], [0], [1], [0, 0, 1, 1], [], []>} : vector<8x8xbf16>, vector<8x32xbf16>, vector<8x32xf32> -> vector<8x32xf32>
    %213 = arith.addf %211, %212 : vector<8x32xf32>
    %cst_70 = arith.constant dense<0.000000e+00> : vector<8x32xf32>
    %214 = tpu.matmul %203, %210, %cst_70 {dimension_numbers = #tpu.dot_dimension_numbers<[1], [0], [0], [1], [0, 0, 1, 1], [], []>} : vector<8x8xbf16>, vector<8x32xbf16>, vector<8x32xf32> -> vector<8x32xf32>
    %215 = arith.addf %213, %214 : vector<8x32xf32>
    %216 = arith.addf %162, %215 : vector<8x32xf32>
    %217 = vector.extract_strided_slice %107 {offsets = [0, 16], sizes = [8, 8], strides = [1, 1]} : vector<8x32xf32> to vector<8x8xf32>
    %218 = vector.extract_strided_slice %108 {offsets = [0, 16], sizes = [8, 8], strides = [1, 1]} : vector<8x32xf32> to vector<8x8xf32>
    %219 = vector.extract_strided_slice %109 {offsets = [0, 16], sizes = [8, 8], strides = [1, 1]} : vector<8x32xf32> to vector<8x8xf32>
    %220 = arith.truncf %217 : vector<8x8xf32> to vector<8x8xbf16>
    %221 = arith.extf %220 : vector<8x8xbf16> to vector<8x8xf32>
    %222 = arith.subf %217, %221 : vector<8x8xf32>
    %223 = arith.truncf %222 : vector<8x8xf32> to vector<8x8xbf16>
    %224 = arith.truncf %218 : vector<8x8xf32> to vector<8x8xbf16>
    %225 = arith.extf %224 : vector<8x8xbf16> to vector<8x8xf32>
    %226 = arith.subf %218, %225 : vector<8x8xf32>
    %227 = arith.truncf %226 : vector<8x8xf32> to vector<8x8xbf16>
    %cst_71 = arith.constant dense<0.000000e+00> : vector<8x8xf32>
    %228 = tpu.matmul %220, %224, %cst_71 {dimension_numbers = #tpu.dot_dimension_numbers<[1], [1], [0], [0], [0, 0, 1, 0], [], []>} : vector<8x8xbf16>, vector<8x8xbf16>, vector<8x8xf32> -> vector<8x8xf32>
    %cst_72 = arith.constant dense<0.000000e+00> : vector<8x8xf32>
    %229 = tpu.matmul %223, %224, %cst_72 {dimension_numbers = #tpu.dot_dimension_numbers<[1], [1], [0], [0], [0, 0, 1, 0], [], []>} : vector<8x8xbf16>, vector<8x8xbf16>, vector<8x8xf32> -> vector<8x8xf32>
    %230 = arith.addf %228, %229 : vector<8x8xf32>
    %cst_73 = arith.constant dense<0.000000e+00> : vector<8x8xf32>
    %231 = tpu.matmul %220, %227, %cst_73 {dimension_numbers = #tpu.dot_dimension_numbers<[1], [1], [0], [0], [0, 0, 1, 0], [], []>} : vector<8x8xbf16>, vector<8x8xbf16>, vector<8x8xf32> -> vector<8x8xf32>
    %232 = arith.addf %230, %231 : vector<8x8xf32>
    %233 = arith.addf %232, %106 : vector<8x8xf32>
    %cst_74 = arith.constant dense<0xFF800000> : vector<8xf32>
    %234 = vector.multi_reduction <maximumf>, %233, %cst_74 [1] : vector<8x8xf32> to vector<8xf32>
    %235 = vector.shape_cast %234 : vector<8xf32> to vector<8x1xf32>
    %236 = vector.broadcast %235 : vector<8x1xf32> to vector<8x8xf32>
    %237 = arith.subf %233, %236 : vector<8x8xf32>
    %238 = math.exp %237 : vector<8x8xf32>
    %cst_75 = arith.constant dense<0.000000e+00> : vector<8xf32>
    %239 = vector.multi_reduction <add>, %238, %cst_75 [1] : vector<8x8xf32> to vector<8xf32>
    %240 = vector.shape_cast %239 : vector<8xf32> to vector<8x1xf32>
    %241 = vector.broadcast %240 : vector<8x1xf32> to vector<8x8xf32>
    %242 = arith.divf %238, %241 : vector<8x8xf32>
    %243 = arith.truncf %242 : vector<8x8xf32> to vector<8x8xbf16>
    %244 = arith.extf %243 : vector<8x8xbf16> to vector<8x8xf32>
    %245 = arith.subf %242, %244 : vector<8x8xf32>
    %246 = arith.truncf %245 : vector<8x8xf32> to vector<8x8xbf16>
    %247 = arith.truncf %219 : vector<8x8xf32> to vector<8x8xbf16>
    %248 = arith.extf %247 : vector<8x8xbf16> to vector<8x8xf32>
    %249 = arith.subf %219, %248 : vector<8x8xf32>
    %250 = arith.truncf %249 : vector<8x8xf32> to vector<8x8xbf16>
    %cst_76 = arith.constant dense<0.000000e+00> : vector<8x8xf32>
    %251 = tpu.matmul %243, %247, %cst_76 {dimension_numbers = #tpu.dot_dimension_numbers<[1], [0], [0], [1], [0, 0, 1, 1], [], []>} : vector<8x8xbf16>, vector<8x8xbf16>, vector<8x8xf32> -> vector<8x8xf32>
    %cst_77 = arith.constant dense<0.000000e+00> : vector<8x8xf32>
    %252 = tpu.matmul %246, %247, %cst_77 {dimension_numbers = #tpu.dot_dimension_numbers<[1], [0], [0], [1], [0, 0, 1, 1], [], []>} : vector<8x8xbf16>, vector<8x8xbf16>, vector<8x8xf32> -> vector<8x8xf32>
    %253 = arith.addf %251, %252 : vector<8x8xf32>
    %cst_78 = arith.constant dense<0.000000e+00> : vector<8x8xf32>
    %254 = tpu.matmul %243, %250, %cst_78 {dimension_numbers = #tpu.dot_dimension_numbers<[1], [0], [0], [1], [0, 0, 1, 1], [], []>} : vector<8x8xbf16>, vector<8x8xbf16>, vector<8x8xf32> -> vector<8x8xf32>
    %255 = arith.addf %253, %254 : vector<8x8xf32>
    %256 = vector.extract_strided_slice %13 {offsets = [16, 0], sizes = [8, 32], strides = [1, 1]} : vector<32x32xf32> to vector<8x32xf32>
    %257 = arith.truncf %255 : vector<8x8xf32> to vector<8x8xbf16>
    %258 = arith.extf %257 : vector<8x8xbf16> to vector<8x8xf32>
    %259 = arith.subf %255, %258 : vector<8x8xf32>
    %260 = arith.truncf %259 : vector<8x8xf32> to vector<8x8xbf16>
    %261 = arith.truncf %256 : vector<8x32xf32> to vector<8x32xbf16>
    %262 = arith.extf %261 : vector<8x32xbf16> to vector<8x32xf32>
    %263 = arith.subf %256, %262 : vector<8x32xf32>
    %264 = arith.truncf %263 : vector<8x32xf32> to vector<8x32xbf16>
    %cst_79 = arith.constant dense<0.000000e+00> : vector<8x32xf32>
    %265 = tpu.matmul %257, %261, %cst_79 {dimension_numbers = #tpu.dot_dimension_numbers<[1], [0], [0], [1], [0, 0, 1, 1], [], []>} : vector<8x8xbf16>, vector<8x32xbf16>, vector<8x32xf32> -> vector<8x32xf32>
    %cst_80 = arith.constant dense<0.000000e+00> : vector<8x32xf32>
    %266 = tpu.matmul %260, %261, %cst_80 {dimension_numbers = #tpu.dot_dimension_numbers<[1], [0], [0], [1], [0, 0, 1, 1], [], []>} : vector<8x8xbf16>, vector<8x32xbf16>, vector<8x32xf32> -> vector<8x32xf32>
    %267 = arith.addf %265, %266 : vector<8x32xf32>
    %cst_81 = arith.constant dense<0.000000e+00> : vector<8x32xf32>
    %268 = tpu.matmul %257, %264, %cst_81 {dimension_numbers = #tpu.dot_dimension_numbers<[1], [0], [0], [1], [0, 0, 1, 1], [], []>} : vector<8x8xbf16>, vector<8x32xbf16>, vector<8x32xf32> -> vector<8x32xf32>
    %269 = arith.addf %267, %268 : vector<8x32xf32>
    %270 = arith.addf %216, %269 : vector<8x32xf32>
    %271 = vector.extract_strided_slice %107 {offsets = [0, 24], sizes = [8, 8], strides = [1, 1]} : vector<8x32xf32> to vector<8x8xf32>
    %272 = vector.extract_strided_slice %108 {offsets = [0, 24], sizes = [8, 8], strides = [1, 1]} : vector<8x32xf32> to vector<8x8xf32>
    %273 = vector.extract_strided_slice %109 {offsets = [0, 24], sizes = [8, 8], strides = [1, 1]} : vector<8x32xf32> to vector<8x8xf32>
    %274 = arith.truncf %271 : vector<8x8xf32> to vector<8x8xbf16>
    %275 = arith.extf %274 : vector<8x8xbf16> to vector<8x8xf32>
    %276 = arith.subf %271, %275 : vector<8x8xf32>
    %277 = arith.truncf %276 : vector<8x8xf32> to vector<8x8xbf16>
    %278 = arith.truncf %272 : vector<8x8xf32> to vector<8x8xbf16>
    %279 = arith.extf %278 : vector<8x8xbf16> to vector<8x8xf32>
    %280 = arith.subf %272, %279 : vector<8x8xf32>
    %281 = arith.truncf %280 : vector<8x8xf32> to vector<8x8xbf16>
    %cst_82 = arith.constant dense<0.000000e+00> : vector<8x8xf32>
    %282 = tpu.matmul %274, %278, %cst_82 {dimension_numbers = #tpu.dot_dimension_numbers<[1], [1], [0], [0], [0, 0, 1, 0], [], []>} : vector<8x8xbf16>, vector<8x8xbf16>, vector<8x8xf32> -> vector<8x8xf32>
    %cst_83 = arith.constant dense<0.000000e+00> : vector<8x8xf32>
    %283 = tpu.matmul %277, %278, %cst_83 {dimension_numbers = #tpu.dot_dimension_numbers<[1], [1], [0], [0], [0, 0, 1, 0], [], []>} : vector<8x8xbf16>, vector<8x8xbf16>, vector<8x8xf32> -> vector<8x8xf32>
    %284 = arith.addf %282, %283 : vector<8x8xf32>
    %cst_84 = arith.constant dense<0.000000e+00> : vector<8x8xf32>
    %285 = tpu.matmul %274, %281, %cst_84 {dimension_numbers = #tpu.dot_dimension_numbers<[1], [1], [0], [0], [0, 0, 1, 0], [], []>} : vector<8x8xbf16>, vector<8x8xbf16>, vector<8x8xf32> -> vector<8x8xf32>
    %286 = arith.addf %284, %285 : vector<8x8xf32>
    %287 = arith.addf %286, %106 : vector<8x8xf32>
    %cst_85 = arith.constant dense<0xFF800000> : vector<8xf32>
    %288 = vector.multi_reduction <maximumf>, %287, %cst_85 [1] : vector<8x8xf32> to vector<8xf32>
    %289 = vector.shape_cast %288 : vector<8xf32> to vector<8x1xf32>
    %290 = vector.broadcast %289 : vector<8x1xf32> to vector<8x8xf32>
    %291 = arith.subf %287, %290 : vector<8x8xf32>
    %292 = math.exp %291 : vector<8x8xf32>
    %cst_86 = arith.constant dense<0.000000e+00> : vector<8xf32>
    %293 = vector.multi_reduction <add>, %292, %cst_86 [1] : vector<8x8xf32> to vector<8xf32>
    %294 = vector.shape_cast %293 : vector<8xf32> to vector<8x1xf32>
    %295 = vector.broadcast %294 : vector<8x1xf32> to vector<8x8xf32>
    %296 = arith.divf %292, %295 : vector<8x8xf32>
    %297 = arith.truncf %296 : vector<8x8xf32> to vector<8x8xbf16>
    %298 = arith.extf %297 : vector<8x8xbf16> to vector<8x8xf32>
    %299 = arith.subf %296, %298 : vector<8x8xf32>
    %300 = arith.truncf %299 : vector<8x8xf32> to vector<8x8xbf16>
    %301 = arith.truncf %273 : vector<8x8xf32> to vector<8x8xbf16>
    %302 = arith.extf %301 : vector<8x8xbf16> to vector<8x8xf32>
    %303 = arith.subf %273, %302 : vector<8x8xf32>
    %304 = arith.truncf %303 : vector<8x8xf32> to vector<8x8xbf16>
    %cst_87 = arith.constant dense<0.000000e+00> : vector<8x8xf32>
    %305 = tpu.matmul %297, %301, %cst_87 {dimension_numbers = #tpu.dot_dimension_numbers<[1], [0], [0], [1], [0, 0, 1, 1], [], []>} : vector<8x8xbf16>, vector<8x8xbf16>, vector<8x8xf32> -> vector<8x8xf32>
    %cst_88 = arith.constant dense<0.000000e+00> : vector<8x8xf32>
    %306 = tpu.matmul %300, %301, %cst_88 {dimension_numbers = #tpu.dot_dimension_numbers<[1], [0], [0], [1], [0, 0, 1, 1], [], []>} : vector<8x8xbf16>, vector<8x8xbf16>, vector<8x8xf32> -> vector<8x8xf32>
    %307 = arith.addf %305, %306 : vector<8x8xf32>
    %cst_89 = arith.constant dense<0.000000e+00> : vector<8x8xf32>
    %308 = tpu.matmul %297, %304, %cst_89 {dimension_numbers = #tpu.dot_dimension_numbers<[1], [0], [0], [1], [0, 0, 1, 1], [], []>} : vector<8x8xbf16>, vector<8x8xbf16>, vector<8x8xf32> -> vector<8x8xf32>
    %309 = arith.addf %307, %308 : vector<8x8xf32>
    %310 = vector.extract_strided_slice %13 {offsets = [24, 0], sizes = [8, 32], strides = [1, 1]} : vector<32x32xf32> to vector<8x32xf32>
    %311 = arith.truncf %309 : vector<8x8xf32> to vector<8x8xbf16>
    %312 = arith.extf %311 : vector<8x8xbf16> to vector<8x8xf32>
    %313 = arith.subf %309, %312 : vector<8x8xf32>
    %314 = arith.truncf %313 : vector<8x8xf32> to vector<8x8xbf16>
    %315 = arith.truncf %310 : vector<8x32xf32> to vector<8x32xbf16>
    %316 = arith.extf %315 : vector<8x32xbf16> to vector<8x32xf32>
    %317 = arith.subf %310, %316 : vector<8x32xf32>
    %318 = arith.truncf %317 : vector<8x32xf32> to vector<8x32xbf16>
    %cst_90 = arith.constant dense<0.000000e+00> : vector<8x32xf32>
    %319 = tpu.matmul %311, %315, %cst_90 {dimension_numbers = #tpu.dot_dimension_numbers<[1], [0], [0], [1], [0, 0, 1, 1], [], []>} : vector<8x8xbf16>, vector<8x32xbf16>, vector<8x32xf32> -> vector<8x32xf32>
    %cst_91 = arith.constant dense<0.000000e+00> : vector<8x32xf32>
    %320 = tpu.matmul %314, %315, %cst_91 {dimension_numbers = #tpu.dot_dimension_numbers<[1], [0], [0], [1], [0, 0, 1, 1], [], []>} : vector<8x8xbf16>, vector<8x32xbf16>, vector<8x32xf32> -> vector<8x32xf32>
    %321 = arith.addf %319, %320 : vector<8x32xf32>
    %cst_92 = arith.constant dense<0.000000e+00> : vector<8x32xf32>
    %322 = tpu.matmul %311, %318, %cst_92 {dimension_numbers = #tpu.dot_dimension_numbers<[1], [0], [0], [1], [0, 0, 1, 1], [], []>} : vector<8x8xbf16>, vector<8x32xbf16>, vector<8x32xf32> -> vector<8x32xf32>
    %323 = arith.addf %321, %322 : vector<8x32xf32>
    %324 = arith.addf %270, %323 : vector<8x32xf32>
    %325 = vector.broadcast %19 : vector<1x32xf32> to vector<8x32xf32>
    %326 = arith.addf %324, %325 : vector<8x32xf32>
    %c0_93 = arith.constant 0 : index
    %c0_94 = arith.constant 0 : index
    %c0_95 = arith.constant 0 : index
    %327 = vector.load %arg5[%c0_93, %c0_94, %c0_95] : memref<2x8x32xf32, #tpu.memory_space<vmem>>, vector<1x8x32xf32>
    %328 = vector.shape_cast %327 : vector<1x8x32xf32> to vector<8x32xf32>
    %329 = vector.shape_cast %326 : vector<8x32xf32> to vector<1x8x32xf32>
    tpu.vector_store %arg5[%c0_93, %c0_94, %c0_95], %329 {strides = array<i32>} : memref<2x8x32xf32, #tpu.memory_space<vmem>>, vector<1x8x32xf32>,
    %330 = vector.extract_strided_slice %84 {offsets = [8, 0], sizes = [8, 32], strides = [1, 1]} : vector<16x32xf32> to vector<8x32xf32>
    %331 = vector.extract_strided_slice %100 {offsets = [8, 0], sizes = [8, 32], strides = [1, 1]} : vector<16x32xf32> to vector<8x32xf32>
    %332 = vector.extract_strided_slice %68 {offsets = [8, 0], sizes = [8, 32], strides = [1, 1]} : vector<16x32xf32> to vector<8x32xf32>
    %333 = vector.extract_strided_slice %330 {offsets = [0, 0], sizes = [8, 8], strides = [1, 1]} : vector<8x32xf32> to vector<8x8xf32>
    %334 = vector.extract_strided_slice %331 {offsets = [0, 0], sizes = [8, 8], strides = [1, 1]} : vector<8x32xf32> to vector<8x8xf32>
    %335 = vector.extract_strided_slice %332 {offsets = [0, 0], sizes = [8, 8], strides = [1, 1]} : vector<8x32xf32> to vector<8x8xf32>
    %336 = arith.truncf %333 : vector<8x8xf32> to vector<8x8xbf16>
    %337 = arith.extf %336 : vector<8x8xbf16> to vector<8x8xf32>
    %338 = arith.subf %333, %337 : vector<8x8xf32>
    %339 = arith.truncf %338 : vector<8x8xf32> to vector<8x8xbf16>
    %340 = arith.truncf %334 : vector<8x8xf32> to vector<8x8xbf16>
    %341 = arith.extf %340 : vector<8x8xbf16> to vector<8x8xf32>
    %342 = arith.subf %334, %341 : vector<8x8xf32>
    %343 = arith.truncf %342 : vector<8x8xf32> to vector<8x8xbf16>
    %cst_96 = arith.constant dense<0.000000e+00> : vector<8x8xf32>
    %344 = tpu.matmul %336, %340, %cst_96 {dimension_numbers = #tpu.dot_dimension_numbers<[1], [1], [0], [0], [0, 0, 1, 0], [], []>} : vector<8x8xbf16>, vector<8x8xbf16>, vector<8x8xf32> -> vector<8x8xf32>
    %cst_97 = arith.constant dense<0.000000e+00> : vector<8x8xf32>
    %345 = tpu.matmul %339, %340, %cst_97 {dimension_numbers = #tpu.dot_dimension_numbers<[1], [1], [0], [0], [0, 0, 1, 0], [], []>} : vector<8x8xbf16>, vector<8x8xbf16>, vector<8x8xf32> -> vector<8x8xf32>
    %346 = arith.addf %344, %345 : vector<8x8xf32>
    %cst_98 = arith.constant dense<0.000000e+00> : vector<8x8xf32>
    %347 = tpu.matmul %336, %343, %cst_98 {dimension_numbers = #tpu.dot_dimension_numbers<[1], [1], [0], [0], [0, 0, 1, 0], [], []>} : vector<8x8xbf16>, vector<8x8xbf16>, vector<8x8xf32> -> vector<8x8xf32>
    %348 = arith.addf %346, %347 : vector<8x8xf32>
    %349 = arith.addf %348, %106 : vector<8x8xf32>
    %cst_99 = arith.constant dense<0xFF800000> : vector<8xf32>
    %350 = vector.multi_reduction <maximumf>, %349, %cst_99 [1] : vector<8x8xf32> to vector<8xf32>
    %351 = vector.shape_cast %350 : vector<8xf32> to vector<8x1xf32>
    %352 = vector.broadcast %351 : vector<8x1xf32> to vector<8x8xf32>
    %353 = arith.subf %349, %352 : vector<8x8xf32>
    %354 = math.exp %353 : vector<8x8xf32>
    %cst_100 = arith.constant dense<0.000000e+00> : vector<8xf32>
    %355 = vector.multi_reduction <add>, %354, %cst_100 [1] : vector<8x8xf32> to vector<8xf32>
    %356 = vector.shape_cast %355 : vector<8xf32> to vector<8x1xf32>
    %357 = vector.broadcast %356 : vector<8x1xf32> to vector<8x8xf32>
    %358 = arith.divf %354, %357 : vector<8x8xf32>
    %359 = arith.truncf %358 : vector<8x8xf32> to vector<8x8xbf16>
    %360 = arith.extf %359 : vector<8x8xbf16> to vector<8x8xf32>
    %361 = arith.subf %358, %360 : vector<8x8xf32>
    %362 = arith.truncf %361 : vector<8x8xf32> to vector<8x8xbf16>
    %363 = arith.truncf %335 : vector<8x8xf32> to vector<8x8xbf16>
    %364 = arith.extf %363 : vector<8x8xbf16> to vector<8x8xf32>
    %365 = arith.subf %335, %364 : vector<8x8xf32>
    %366 = arith.truncf %365 : vector<8x8xf32> to vector<8x8xbf16>
    %cst_101 = arith.constant dense<0.000000e+00> : vector<8x8xf32>
    %367 = tpu.matmul %359, %363, %cst_101 {dimension_numbers = #tpu.dot_dimension_numbers<[1], [0], [0], [1], [0, 0, 1, 1], [], []>} : vector<8x8xbf16>, vector<8x8xbf16>, vector<8x8xf32> -> vector<8x8xf32>
    %cst_102 = arith.constant dense<0.000000e+00> : vector<8x8xf32>
    %368 = tpu.matmul %362, %363, %cst_102 {dimension_numbers = #tpu.dot_dimension_numbers<[1], [0], [0], [1], [0, 0, 1, 1], [], []>} : vector<8x8xbf16>, vector<8x8xbf16>, vector<8x8xf32> -> vector<8x8xf32>
    %369 = arith.addf %367, %368 : vector<8x8xf32>
    %cst_103 = arith.constant dense<0.000000e+00> : vector<8x8xf32>
    %370 = tpu.matmul %359, %366, %cst_103 {dimension_numbers = #tpu.dot_dimension_numbers<[1], [0], [0], [1], [0, 0, 1, 1], [], []>} : vector<8x8xbf16>, vector<8x8xbf16>, vector<8x8xf32> -> vector<8x8xf32>
    %371 = arith.addf %369, %370 : vector<8x8xf32>
    %372 = vector.extract_strided_slice %13 {offsets = [0, 0], sizes = [8, 32], strides = [1, 1]} : vector<32x32xf32> to vector<8x32xf32>
    %373 = arith.truncf %371 : vector<8x8xf32> to vector<8x8xbf16>
    %374 = arith.extf %373 : vector<8x8xbf16> to vector<8x8xf32>
    %375 = arith.subf %371, %374 : vector<8x8xf32>
    %376 = arith.truncf %375 : vector<8x8xf32> to vector<8x8xbf16>
    %377 = arith.truncf %372 : vector<8x32xf32> to vector<8x32xbf16>
    %378 = arith.extf %377 : vector<8x32xbf16> to vector<8x32xf32>
    %379 = arith.subf %372, %378 : vector<8x32xf32>
    %380 = arith.truncf %379 : vector<8x32xf32> to vector<8x32xbf16>
    %cst_104 = arith.constant dense<0.000000e+00> : vector<8x32xf32>
    %381 = tpu.matmul %373, %377, %cst_104 {dimension_numbers = #tpu.dot_dimension_numbers<[1], [0], [0], [1], [0, 0, 1, 1], [], []>} : vector<8x8xbf16>, vector<8x32xbf16>, vector<8x32xf32> -> vector<8x32xf32>
    %cst_105 = arith.constant dense<0.000000e+00> : vector<8x32xf32>
    %382 = tpu.matmul %376, %377, %cst_105 {dimension_numbers = #tpu.dot_dimension_numbers<[1], [0], [0], [1], [0, 0, 1, 1], [], []>} : vector<8x8xbf16>, vector<8x32xbf16>, vector<8x32xf32> -> vector<8x32xf32>
    %383 = arith.addf %381, %382 : vector<8x32xf32>
    %cst_106 = arith.constant dense<0.000000e+00> : vector<8x32xf32>
    %384 = tpu.matmul %373, %380, %cst_106 {dimension_numbers = #tpu.dot_dimension_numbers<[1], [0], [0], [1], [0, 0, 1, 1], [], []>} : vector<8x8xbf16>, vector<8x32xbf16>, vector<8x32xf32> -> vector<8x32xf32>
    %385 = arith.addf %383, %384 : vector<8x32xf32>
    %386 = vector.extract_strided_slice %330 {offsets = [0, 8], sizes = [8, 8], strides = [1, 1]} : vector<8x32xf32> to vector<8x8xf32>
    %387 = vector.extract_strided_slice %331 {offsets = [0, 8], sizes = [8, 8], strides = [1, 1]} : vector<8x32xf32> to vector<8x8xf32>
    %388 = vector.extract_strided_slice %332 {offsets = [0, 8], sizes = [8, 8], strides = [1, 1]} : vector<8x32xf32> to vector<8x8xf32>
    %389 = arith.truncf %386 : vector<8x8xf32> to vector<8x8xbf16>
    %390 = arith.extf %389 : vector<8x8xbf16> to vector<8x8xf32>
    %391 = arith.subf %386, %390 : vector<8x8xf32>
    %392 = arith.truncf %391 : vector<8x8xf32> to vector<8x8xbf16>
    %393 = arith.truncf %387 : vector<8x8xf32> to vector<8x8xbf16>
    %394 = arith.extf %393 : vector<8x8xbf16> to vector<8x8xf32>
    %395 = arith.subf %387, %394 : vector<8x8xf32>
    %396 = arith.truncf %395 : vector<8x8xf32> to vector<8x8xbf16>
    %cst_107 = arith.constant dense<0.000000e+00> : vector<8x8xf32>
    %397 = tpu.matmul %389, %393, %cst_107 {dimension_numbers = #tpu.dot_dimension_numbers<[1], [1], [0], [0], [0, 0, 1, 0], [], []>} : vector<8x8xbf16>, vector<8x8xbf16>, vector<8x8xf32> -> vector<8x8xf32>
    %cst_108 = arith.constant dense<0.000000e+00> : vector<8x8xf32>
    %398 = tpu.matmul %392, %393, %cst_108 {dimension_numbers = #tpu.dot_dimension_numbers<[1], [1], [0], [0], [0, 0, 1, 0], [], []>} : vector<8x8xbf16>, vector<8x8xbf16>, vector<8x8xf32> -> vector<8x8xf32>
    %399 = arith.addf %397, %398 : vector<8x8xf32>
    %cst_109 = arith.constant dense<0.000000e+00> : vector<8x8xf32>
    %400 = tpu.matmul %389, %396, %cst_109 {dimension_numbers = #tpu.dot_dimension_numbers<[1], [1], [0], [0], [0, 0, 1, 0], [], []>} : vector<8x8xbf16>, vector<8x8xbf16>, vector<8x8xf32> -> vector<8x8xf32>
    %401 = arith.addf %399, %400 : vector<8x8xf32>
    %402 = arith.addf %401, %106 : vector<8x8xf32>
    %cst_110 = arith.constant dense<0xFF800000> : vector<8xf32>
    %403 = vector.multi_reduction <maximumf>, %402, %cst_110 [1] : vector<8x8xf32> to vector<8xf32>
    %404 = vector.shape_cast %403 : vector<8xf32> to vector<8x1xf32>
    %405 = vector.broadcast %404 : vector<8x1xf32> to vector<8x8xf32>
    %406 = arith.subf %402, %405 : vector<8x8xf32>
    %407 = math.exp %406 : vector<8x8xf32>
    %cst_111 = arith.constant dense<0.000000e+00> : vector<8xf32>
    %408 = vector.multi_reduction <add>, %407, %cst_111 [1] : vector<8x8xf32> to vector<8xf32>
    %409 = vector.shape_cast %408 : vector<8xf32> to vector<8x1xf32>
    %410 = vector.broadcast %409 : vector<8x1xf32> to vector<8x8xf32>
    %411 = arith.divf %407, %410 : vector<8x8xf32>
    %412 = arith.truncf %411 : vector<8x8xf32> to vector<8x8xbf16>
    %413 = arith.extf %412 : vector<8x8xbf16> to vector<8x8xf32>
    %414 = arith.subf %411, %413 : vector<8x8xf32>
    %415 = arith.truncf %414 : vector<8x8xf32> to vector<8x8xbf16>
    %416 = arith.truncf %388 : vector<8x8xf32> to vector<8x8xbf16>
    %417 = arith.extf %416 : vector<8x8xbf16> to vector<8x8xf32>
    %418 = arith.subf %388, %417 : vector<8x8xf32>
    %419 = arith.truncf %418 : vector<8x8xf32> to vector<8x8xbf16>
    %cst_112 = arith.constant dense<0.000000e+00> : vector<8x8xf32>
    %420 = tpu.matmul %412, %416, %cst_112 {dimension_numbers = #tpu.dot_dimension_numbers<[1], [0], [0], [1], [0, 0, 1, 1], [], []>} : vector<8x8xbf16>, vector<8x8xbf16>, vector<8x8xf32> -> vector<8x8xf32>
    %cst_113 = arith.constant dense<0.000000e+00> : vector<8x8xf32>
    %421 = tpu.matmul %415, %416, %cst_113 {dimension_numbers = #tpu.dot_dimension_numbers<[1], [0], [0], [1], [0, 0, 1, 1], [], []>} : vector<8x8xbf16>, vector<8x8xbf16>, vector<8x8xf32> -> vector<8x8xf32>
    %422 = arith.addf %420, %421 : vector<8x8xf32>
    %cst_114 = arith.constant dense<0.000000e+00> : vector<8x8xf32>
    %423 = tpu.matmul %412, %419, %cst_114 {dimension_numbers = #tpu.dot_dimension_numbers<[1], [0], [0], [1], [0, 0, 1, 1], [], []>} : vector<8x8xbf16>, vector<8x8xbf16>, vector<8x8xf32> -> vector<8x8xf32>
    %424 = arith.addf %422, %423 : vector<8x8xf32>
    %425 = vector.extract_strided_slice %13 {offsets = [8, 0], sizes = [8, 32], strides = [1, 1]} : vector<32x32xf32> to vector<8x32xf32>
    %426 = arith.truncf %424 : vector<8x8xf32> to vector<8x8xbf16>
    %427 = arith.extf %426 : vector<8x8xbf16> to vector<8x8xf32>
    %428 = arith.subf %424, %427 : vector<8x8xf32>
    %429 = arith.truncf %428 : vector<8x8xf32> to vector<8x8xbf16>
    %430 = arith.truncf %425 : vector<8x32xf32> to vector<8x32xbf16>
    %431 = arith.extf %430 : vector<8x32xbf16> to vector<8x32xf32>
    %432 = arith.subf %425, %431 : vector<8x32xf32>
    %433 = arith.truncf %432 : vector<8x32xf32> to vector<8x32xbf16>
    %cst_115 = arith.constant dense<0.000000e+00> : vector<8x32xf32>
    %434 = tpu.matmul %426, %430, %cst_115 {dimension_numbers = #tpu.dot_dimension_numbers<[1], [0], [0], [1], [0, 0, 1, 1], [], []>} : vector<8x8xbf16>, vector<8x32xbf16>, vector<8x32xf32> -> vector<8x32xf32>
    %cst_116 = arith.constant dense<0.000000e+00> : vector<8x32xf32>
    %435 = tpu.matmul %429, %430, %cst_116 {dimension_numbers = #tpu.dot_dimension_numbers<[1], [0], [0], [1], [0, 0, 1, 1], [], []>} : vector<8x8xbf16>, vector<8x32xbf16>, vector<8x32xf32> -> vector<8x32xf32>
    %436 = arith.addf %434, %435 : vector<8x32xf32>
    %cst_117 = arith.constant dense<0.000000e+00> : vector<8x32xf32>
    %437 = tpu.matmul %426, %433, %cst_117 {dimension_numbers = #tpu.dot_dimension_numbers<[1], [0], [0], [1], [0, 0, 1, 1], [], []>} : vector<8x8xbf16>, vector<8x32xbf16>, vector<8x32xf32> -> vector<8x32xf32>
    %438 = arith.addf %436, %437 : vector<8x32xf32>
    %439 = arith.addf %385, %438 : vector<8x32xf32>
    %440 = vector.extract_strided_slice %330 {offsets = [0, 16], sizes = [8, 8], strides = [1, 1]} : vector<8x32xf32> to vector<8x8xf32>
    %441 = vector.extract_strided_slice %331 {offsets = [0, 16], sizes = [8, 8], strides = [1, 1]} : vector<8x32xf32> to vector<8x8xf32>
    %442 = vector.extract_strided_slice %332 {offsets = [0, 16], sizes = [8, 8], strides = [1, 1]} : vector<8x32xf32> to vector<8x8xf32>
    %443 = arith.truncf %440 : vector<8x8xf32> to vector<8x8xbf16>
    %444 = arith.extf %443 : vector<8x8xbf16> to vector<8x8xf32>
    %445 = arith.subf %440, %444 : vector<8x8xf32>
    %446 = arith.truncf %445 : vector<8x8xf32> to vector<8x8xbf16>
    %447 = arith.truncf %441 : vector<8x8xf32> to vector<8x8xbf16>
    %448 = arith.extf %447 : vector<8x8xbf16> to vector<8x8xf32>
    %449 = arith.subf %441, %448 : vector<8x8xf32>
    %450 = arith.truncf %449 : vector<8x8xf32> to vector<8x8xbf16>
    %cst_118 = arith.constant dense<0.000000e+00> : vector<8x8xf32>
    %451 = tpu.matmul %443, %447, %cst_118 {dimension_numbers = #tpu.dot_dimension_numbers<[1], [1], [0], [0], [0, 0, 1, 0], [], []>} : vector<8x8xbf16>, vector<8x8xbf16>, vector<8x8xf32> -> vector<8x8xf32>
    %cst_119 = arith.constant dense<0.000000e+00> : vector<8x8xf32>
    %452 = tpu.matmul %446, %447, %cst_119 {dimension_numbers = #tpu.dot_dimension_numbers<[1], [1], [0], [0], [0, 0, 1, 0], [], []>} : vector<8x8xbf16>, vector<8x8xbf16>, vector<8x8xf32> -> vector<8x8xf32>
    %453 = arith.addf %451, %452 : vector<8x8xf32>
    %cst_120 = arith.constant dense<0.000000e+00> : vector<8x8xf32>
    %454 = tpu.matmul %443, %450, %cst_120 {dimension_numbers = #tpu.dot_dimension_numbers<[1], [1], [0], [0], [0, 0, 1, 0], [], []>} : vector<8x8xbf16>, vector<8x8xbf16>, vector<8x8xf32> -> vector<8x8xf32>
    %455 = arith.addf %453, %454 : vector<8x8xf32>
    %456 = arith.addf %455, %106 : vector<8x8xf32>
    %cst_121 = arith.constant dense<0xFF800000> : vector<8xf32>
    %457 = vector.multi_reduction <maximumf>, %456, %cst_121 [1] : vector<8x8xf32> to vector<8xf32>
    %458 = vector.shape_cast %457 : vector<8xf32> to vector<8x1xf32>
    %459 = vector.broadcast %458 : vector<8x1xf32> to vector<8x8xf32>
    %460 = arith.subf %456, %459 : vector<8x8xf32>
    %461 = math.exp %460 : vector<8x8xf32>
    %cst_122 = arith.constant dense<0.000000e+00> : vector<8xf32>
    %462 = vector.multi_reduction <add>, %461, %cst_122 [1] : vector<8x8xf32> to vector<8xf32>
    %463 = vector.shape_cast %462 : vector<8xf32> to vector<8x1xf32>
    %464 = vector.broadcast %463 : vector<8x1xf32> to vector<8x8xf32>
    %465 = arith.divf %461, %464 : vector<8x8xf32>
    %466 = arith.truncf %465 : vector<8x8xf32> to vector<8x8xbf16>
    %467 = arith.extf %466 : vector<8x8xbf16> to vector<8x8xf32>
    %468 = arith.subf %465, %467 : vector<8x8xf32>
    %469 = arith.truncf %468 : vector<8x8xf32> to vector<8x8xbf16>
    %470 = arith.truncf %442 : vector<8x8xf32> to vector<8x8xbf16>
    %471 = arith.extf %470 : vector<8x8xbf16> to vector<8x8xf32>
    %472 = arith.subf %442, %471 : vector<8x8xf32>
    %473 = arith.truncf %472 : vector<8x8xf32> to vector<8x8xbf16>
    %cst_123 = arith.constant dense<0.000000e+00> : vector<8x8xf32>
    %474 = tpu.matmul %466, %470, %cst_123 {dimension_numbers = #tpu.dot_dimension_numbers<[1], [0], [0], [1], [0, 0, 1, 1], [], []>} : vector<8x8xbf16>, vector<8x8xbf16>, vector<8x8xf32> -> vector<8x8xf32>
    %cst_124 = arith.constant dense<0.000000e+00> : vector<8x8xf32>
    %475 = tpu.matmul %469, %470, %cst_124 {dimension_numbers = #tpu.dot_dimension_numbers<[1], [0], [0], [1], [0, 0, 1, 1], [], []>} : vector<8x8xbf16>, vector<8x8xbf16>, vector<8x8xf32> -> vector<8x8xf32>
    %476 = arith.addf %474, %475 : vector<8x8xf32>
    %cst_125 = arith.constant dense<0.000000e+00> : vector<8x8xf32>
    %477 = tpu.matmul %466, %473, %cst_125 {dimension_numbers = #tpu.dot_dimension_numbers<[1], [0], [0], [1], [0, 0, 1, 1], [], []>} : vector<8x8xbf16>, vector<8x8xbf16>, vector<8x8xf32> -> vector<8x8xf32>
    %478 = arith.addf %476, %477 : vector<8x8xf32>
    %479 = vector.extract_strided_slice %13 {offsets = [16, 0], sizes = [8, 32], strides = [1, 1]} : vector<32x32xf32> to vector<8x32xf32>
    %480 = arith.truncf %478 : vector<8x8xf32> to vector<8x8xbf16>
    %481 = arith.extf %480 : vector<8x8xbf16> to vector<8x8xf32>
    %482 = arith.subf %478, %481 : vector<8x8xf32>
    %483 = arith.truncf %482 : vector<8x8xf32> to vector<8x8xbf16>
    %484 = arith.truncf %479 : vector<8x32xf32> to vector<8x32xbf16>
    %485 = arith.extf %484 : vector<8x32xbf16> to vector<8x32xf32>
    %486 = arith.subf %479, %485 : vector<8x32xf32>
    %487 = arith.truncf %486 : vector<8x32xf32> to vector<8x32xbf16>
    %cst_126 = arith.constant dense<0.000000e+00> : vector<8x32xf32>
    %488 = tpu.matmul %480, %484, %cst_126 {dimension_numbers = #tpu.dot_dimension_numbers<[1], [0], [0], [1], [0, 0, 1, 1], [], []>} : vector<8x8xbf16>, vector<8x32xbf16>, vector<8x32xf32> -> vector<8x32xf32>
    %cst_127 = arith.constant dense<0.000000e+00> : vector<8x32xf32>
    %489 = tpu.matmul %483, %484, %cst_127 {dimension_numbers = #tpu.dot_dimension_numbers<[1], [0], [0], [1], [0, 0, 1, 1], [], []>} : vector<8x8xbf16>, vector<8x32xbf16>, vector<8x32xf32> -> vector<8x32xf32>
    %490 = arith.addf %488, %489 : vector<8x32xf32>
    %cst_128 = arith.constant dense<0.000000e+00> : vector<8x32xf32>
    %491 = tpu.matmul %480, %487, %cst_128 {dimension_numbers = #tpu.dot_dimension_numbers<[1], [0], [0], [1], [0, 0, 1, 1], [], []>} : vector<8x8xbf16>, vector<8x32xbf16>, vector<8x32xf32> -> vector<8x32xf32>
    %492 = arith.addf %490, %491 : vector<8x32xf32>
    %493 = arith.addf %439, %492 : vector<8x32xf32>
    %494 = vector.extract_strided_slice %330 {offsets = [0, 24], sizes = [8, 8], strides = [1, 1]} : vector<8x32xf32> to vector<8x8xf32>
    %495 = vector.extract_strided_slice %331 {offsets = [0, 24], sizes = [8, 8], strides = [1, 1]} : vector<8x32xf32> to vector<8x8xf32>
    %496 = vector.extract_strided_slice %332 {offsets = [0, 24], sizes = [8, 8], strides = [1, 1]} : vector<8x32xf32> to vector<8x8xf32>
    %497 = arith.truncf %494 : vector<8x8xf32> to vector<8x8xbf16>
    %498 = arith.extf %497 : vector<8x8xbf16> to vector<8x8xf32>
    %499 = arith.subf %494, %498 : vector<8x8xf32>
    %500 = arith.truncf %499 : vector<8x8xf32> to vector<8x8xbf16>
    %501 = arith.truncf %495 : vector<8x8xf32> to vector<8x8xbf16>
    %502 = arith.extf %501 : vector<8x8xbf16> to vector<8x8xf32>
    %503 = arith.subf %495, %502 : vector<8x8xf32>
    %504 = arith.truncf %503 : vector<8x8xf32> to vector<8x8xbf16>
    %cst_129 = arith.constant dense<0.000000e+00> : vector<8x8xf32>
    %505 = tpu.matmul %497, %501, %cst_129 {dimension_numbers = #tpu.dot_dimension_numbers<[1], [1], [0], [0], [0, 0, 1, 0], [], []>} : vector<8x8xbf16>, vector<8x8xbf16>, vector<8x8xf32> -> vector<8x8xf32>
    %cst_130 = arith.constant dense<0.000000e+00> : vector<8x8xf32>
    %506 = tpu.matmul %500, %501, %cst_130 {dimension_numbers = #tpu.dot_dimension_numbers<[1], [1], [0], [0], [0, 0, 1, 0], [], []>} : vector<8x8xbf16>, vector<8x8xbf16>, vector<8x8xf32> -> vector<8x8xf32>
    %507 = arith.addf %505, %506 : vector<8x8xf32>
    %cst_131 = arith.constant dense<0.000000e+00> : vector<8x8xf32>
    %508 = tpu.matmul %497, %504, %cst_131 {dimension_numbers = #tpu.dot_dimension_numbers<[1], [1], [0], [0], [0, 0, 1, 0], [], []>} : vector<8x8xbf16>, vector<8x8xbf16>, vector<8x8xf32> -> vector<8x8xf32>
    %509 = arith.addf %507, %508 : vector<8x8xf32>
    %510 = arith.addf %509, %106 : vector<8x8xf32>
    %cst_132 = arith.constant dense<0xFF800000> : vector<8xf32>
    %511 = vector.multi_reduction <maximumf>, %510, %cst_132 [1] : vector<8x8xf32> to vector<8xf32>
    %512 = vector.shape_cast %511 : vector<8xf32> to vector<8x1xf32>
    %513 = vector.broadcast %512 : vector<8x1xf32> to vector<8x8xf32>
    %514 = arith.subf %510, %513 : vector<8x8xf32>
    %515 = math.exp %514 : vector<8x8xf32>
    %cst_133 = arith.constant dense<0.000000e+00> : vector<8xf32>
    %516 = vector.multi_reduction <add>, %515, %cst_133 [1] : vector<8x8xf32> to vector<8xf32>
    %517 = vector.shape_cast %516 : vector<8xf32> to vector<8x1xf32>
    %518 = vector.broadcast %517 : vector<8x1xf32> to vector<8x8xf32>
    %519 = arith.divf %515, %518 : vector<8x8xf32>
    %520 = arith.truncf %519 : vector<8x8xf32> to vector<8x8xbf16>
    %521 = arith.extf %520 : vector<8x8xbf16> to vector<8x8xf32>
    %522 = arith.subf %519, %521 : vector<8x8xf32>
    %523 = arith.truncf %522 : vector<8x8xf32> to vector<8x8xbf16>
    %524 = arith.truncf %496 : vector<8x8xf32> to vector<8x8xbf16>
    %525 = arith.extf %524 : vector<8x8xbf16> to vector<8x8xf32>
    %526 = arith.subf %496, %525 : vector<8x8xf32>
    %527 = arith.truncf %526 : vector<8x8xf32> to vector<8x8xbf16>
    %cst_134 = arith.constant dense<0.000000e+00> : vector<8x8xf32>
    %528 = tpu.matmul %520, %524, %cst_134 {dimension_numbers = #tpu.dot_dimension_numbers<[1], [0], [0], [1], [0, 0, 1, 1], [], []>} : vector<8x8xbf16>, vector<8x8xbf16>, vector<8x8xf32> -> vector<8x8xf32>
    %cst_135 = arith.constant dense<0.000000e+00> : vector<8x8xf32>
    %529 = tpu.matmul %523, %524, %cst_135 {dimension_numbers = #tpu.dot_dimension_numbers<[1], [0], [0], [1], [0, 0, 1, 1], [], []>} : vector<8x8xbf16>, vector<8x8xbf16>, vector<8x8xf32> -> vector<8x8xf32>
    %530 = arith.addf %528, %529 : vector<8x8xf32>
    %cst_136 = arith.constant dense<0.000000e+00> : vector<8x8xf32>
    %531 = tpu.matmul %520, %527, %cst_136 {dimension_numbers = #tpu.dot_dimension_numbers<[1], [0], [0], [1], [0, 0, 1, 1], [], []>} : vector<8x8xbf16>, vector<8x8xbf16>, vector<8x8xf32> -> vector<8x8xf32>
    %532 = arith.addf %530, %531 : vector<8x8xf32>
    %533 = vector.extract_strided_slice %13 {offsets = [24, 0], sizes = [8, 32], strides = [1, 1]} : vector<32x32xf32> to vector<8x32xf32>
    %534 = arith.truncf %532 : vector<8x8xf32> to vector<8x8xbf16>
    %535 = arith.extf %534 : vector<8x8xbf16> to vector<8x8xf32>
    %536 = arith.subf %532, %535 : vector<8x8xf32>
    %537 = arith.truncf %536 : vector<8x8xf32> to vector<8x8xbf16>
    %538 = arith.truncf %533 : vector<8x32xf32> to vector<8x32xbf16>
    %539 = arith.extf %538 : vector<8x32xbf16> to vector<8x32xf32>
    %540 = arith.subf %533, %539 : vector<8x32xf32>
    %541 = arith.truncf %540 : vector<8x32xf32> to vector<8x32xbf16>
    %cst_137 = arith.constant dense<0.000000e+00> : vector<8x32xf32>
    %542 = tpu.matmul %534, %538, %cst_137 {dimension_numbers = #tpu.dot_dimension_numbers<[1], [0], [0], [1], [0, 0, 1, 1], [], []>} : vector<8x8xbf16>, vector<8x32xbf16>, vector<8x32xf32> -> vector<8x32xf32>
    %cst_138 = arith.constant dense<0.000000e+00> : vector<8x32xf32>
    %543 = tpu.matmul %537, %538, %cst_138 {dimension_numbers = #tpu.dot_dimension_numbers<[1], [0], [0], [1], [0, 0, 1, 1], [], []>} : vector<8x8xbf16>, vector<8x32xbf16>, vector<8x32xf32> -> vector<8x32xf32>
    %544 = arith.addf %542, %543 : vector<8x32xf32>
    %cst_139 = arith.constant dense<0.000000e+00> : vector<8x32xf32>
    %545 = tpu.matmul %534, %541, %cst_139 {dimension_numbers = #tpu.dot_dimension_numbers<[1], [0], [0], [1], [0, 0, 1, 1], [], []>} : vector<8x8xbf16>, vector<8x32xbf16>, vector<8x32xf32> -> vector<8x32xf32>
    %546 = arith.addf %544, %545 : vector<8x32xf32>
    %547 = arith.addf %493, %546 : vector<8x32xf32>
    %548 = vector.broadcast %19 : vector<1x32xf32> to vector<8x32xf32>
    %549 = arith.addf %547, %548 : vector<8x32xf32>
    %c1_140 = arith.constant 1 : index
    %c0_141 = arith.constant 0 : index
    %c0_142 = arith.constant 0 : index
    %550 = vector.load %arg5[%c1_140, %c0_141, %c0_142] : memref<2x8x32xf32, #tpu.memory_space<vmem>>, vector<1x8x32xf32>
    %551 = vector.shape_cast %550 : vector<1x8x32xf32> to vector<8x32xf32>
    %552 = vector.shape_cast %549 : vector<8x32xf32> to vector<1x8x32xf32>
    tpu.vector_store %arg5[%c1_140, %c0_141, %c0_142], %552 {strides = array<i32>} : memref<2x8x32xf32, #tpu.memory_space<vmem>>, vector<1x8x32xf32>,
    return
  }
  func.func @transform_0(%arg0: i32) -> (i32, i32, i32) {
    %c0_i32 = arith.constant 0 : i32
    %c0_i32_0 = arith.constant 0 : i32
    %c0_i32_1 = arith.constant 0 : i32
    %c0_i32_2 = arith.constant 0 : i32
    return %c0_i32, %c0_i32_0, %c0_i32_1 : i32, i32, i32
  }
  func.func @transform_1(%arg0: i32) -> (i32, i32, i32) {
    %c0_i32 = arith.constant 0 : i32
    %c0_i32_0 = arith.constant 0 : i32
    %c0_i32_1 = arith.constant 0 : i32
    %c0_i32_2 = arith.constant 0 : i32
    return %c0_i32, %c0_i32_0, %c0_i32_1 : i32, i32, i32
  }
  func.func @transform_2(%arg0: i32) -> (i32, i32) {
    %c0_i32 = arith.constant 0 : i32
    %c0_i32_0 = arith.constant 0 : i32
    %c0_i32_1 = arith.constant 0 : i32
    return %c0_i32, %c0_i32_0 : i32, i32
  }
  func.func @transform_3(%arg0: i32) -> (i32, i32, i32) {
    %c0_i32 = arith.constant 0 : i32
    %c0_i32_0 = arith.constant 0 : i32
    %c0_i32_1 = arith.constant 0 : i32
    %c0_i32_2 = arith.constant 0 : i32
    return %c0_i32, %c0_i32_0, %c0_i32_1 : i32, i32, i32
  }
  func.func @transform_4(%arg0: i32) -> (i32, i32, i32) {
    %c0_i32 = arith.constant 0 : i32
    %c0_i32_0 = arith.constant 0 : i32
    %c0_i32_1 = arith.constant 0 : i32
    %c0_i32_2 = arith.constant 0 : i32
    return %c0_i32, %c0_i32_0, %c0_i32_1 : i32, i32, i32
  }
}

</mosaic_0001>

<llo_original>
// kernel: tpu_custom_call.1
$region0: #{tpu_custom_call.1}
  #allocation0 [shape = 'u32[]', space=smem, size = 0x4, offset = 0x4, fixed_abs, tag = 'smem constant byte address 0x4 - core index']
  #allocation1 [shape = 'u32[144,128]{1,0:T(1,128)}', space=vmem, size = 0x12000, scoped, tag = 'internal scratch']
  %s0 = inlined_call_operand.hbm [shape: f32[3,16,32], index: 0, kind: input, shape index: {}]
  %s1 = inlined_call_operand.hbm [shape: f32[5,32,32], index: 1, kind: input, shape index: {}]
  %s2 = inlined_call_operand.vmem [shape: f32[4,32], index: 2, kind: input, shape index: {}]
  %s3 = inlined_call_operand.hbm [shape: f32[2,16,32], index: 3, kind: input, shape index: {}]
  %s4 = inlined_call_operand.hbm [shape: f32[2,8,32], index: 4, kind: output, shape index: {}]
  %s5 = sld [smem:[#allocation0]]
  $region38: #{tpu_custom_call.1} parent=0
    _
  %s7 = ssub.s32 1, %s5
  %s8 = scalar_select 0, %s7, %s5
  $region1: #{tpu_custom_call.1} parent=0
    #allocation2 [shape = 'u8[24576]{0}', space=vmem, size = 0x6000, scoped, tag = 'input window, operand 0, single buffered']
    #allocation3 [shape = 's32[1]{0}', space=sflag, size = 0x4, scoped, tag = 'scoped memory for tpu_custom_call.1']
    #allocation4 [shape = 's32[1]{0}', space=sflag, size = 0x4, scoped, tag = 'scoped memory for tpu_custom_call.1']
    #allocation5 [shape = 'u8[81920]{0}', space=vmem, size = 0x14000, scoped, tag = 'input window, operand 1, single buffered']
    #allocation6 [shape = 's32[1]{0}', space=sflag, size = 0x4, scoped, tag = 'scoped memory for tpu_custom_call.1']
    #allocation7 [shape = 'u8[16384]{0}', space=vmem, size = 0x4000, scoped, tag = 'input window, operand 3, single buffered']
    #allocation8 [shape = 'u8[8192]{0}', space=vmem, size = 0x2000, scoped, tag = 'output window, operand 0, single buffered']
    %9 = vsyncpa [#allocation3], 0
    %10 = vsyncpa [#allocation6], 0
    %11 = vsyncpa [#allocation4], 0
    // Predicated region
    $region2: #{tpu_custom_call.1} parent=1 // pred_check
      _
    $region3: #{tpu_custom_call.1} parent=1 // pred_check_branch
      %13 = sbr.rel (0) target = $region5
    $region4: #{tpu_custom_call.1} parent=1 // pred_region
      %s15 = ssub.s32 768, 768
      %16 = vsyncadd [#allocation3], %s15
      %s17 = sshll.u32 [#allocation2], 4
      %s18 = int_to_ptr.vmem [resolvable:$true] %s17
      %23 = dma.hbm_to_vmem [thread:$0]  %s0, 768, %s18, [#allocation3], 128, 128, 8
    $region5: #{tpu_custom_call.1} parent=1 // pred_fallthru
      _
    // Predicated region
    $region6: #{tpu_custom_call.1} parent=1 // pred_check
      _
    $region7: #{tpu_custom_call.1} parent=1 // pred_check_branch
      %25 = sbr.rel (0) target = $region9
    $region8: #{tpu_custom_call.1} parent=1 // pred_region
      %s27 = ssub.s32 2560, 2560
      %28 = vsyncadd [#allocation6], %s27
      %s29 = sshll.u32 [#allocation5], 4
      %s30 = int_to_ptr.vmem [resolvable:$true] %s29
      %35 = dma.hbm_to_vmem [thread:$0]  %s1, 2560, %s30, [#allocation6], 128, 128, 8
    $region9: #{tpu_custom_call.1} parent=1 // pred_fallthru
      _
    // Predicated region
    $region10: #{tpu_custom_call.1} parent=1 // pred_check
      _
    $region11: #{tpu_custom_call.1} parent=1 // pred_check_branch
      %37 = sbr.rel (0) target = $region13
    $region12: #{tpu_custom_call.1} parent=1 // pred_region
      _
    $region13: #{tpu_custom_call.1} parent=1 // pred_fallthru
      _
    // Predicated region
    $region14: #{tpu_custom_call.1} parent=1 // pred_check
      _
    $region15: #{tpu_custom_call.1} parent=1 // pred_check_branch
      %39 = sbr.rel (0) target = $region17
    $region16: #{tpu_custom_call.1} parent=1 // pred_region
      %s41 = ssub.s32 512, 512
      %42 = vsyncadd [#allocation6], %s41
      %s43 = sshll.u32 [#allocation7], 4
      %s44 = int_to_ptr.vmem [resolvable:$true] %s43
      %49 = dma.hbm_to_vmem [thread:$0]  %s3, 512, %s44, [#allocation6], 128, 128, 8
    $region17: #{tpu_custom_call.1} parent=1 // pred_fallthru
      _
    // Predicated region
    $region18: #{tpu_custom_call.1} parent=1 // pred_check
      _
    $region19: #{tpu_custom_call.1} parent=1 // pred_check_branch
      %51 = sbr.rel (0) target = $region21
    $region20: #{tpu_custom_call.1} parent=1 // pred_region
      %52 = dma.done [#allocation3], 768
    $region21: #{tpu_custom_call.1} parent=1 // pred_fallthru
      _
    // Predicated region
    $region22: #{tpu_custom_call.1} parent=1 // pred_check
      _
    $region23: #{tpu_custom_call.1} parent=1 // pred_check_branch
      %54 = sbr.rel (0) target = $region25
    $region24: #{tpu_custom_call.1} parent=1 // pred_region
      %55 = dma.done [#allocation6], 2560
    $region25: #{tpu_custom_call.1} parent=1 // pred_fallthru
      _
    // Predicated region
    $region26: #{tpu_custom_call.1} parent=1 // pred_check
      _
    $region27: #{tpu_custom_call.1} parent=1 // pred_check_branch
      %57 = sbr.rel (0) target = $region29
    $region28: #{tpu_custom_call.1} parent=1 // pred_region
      %58 = dma.done [#allocation6], 512
    $region29: #{tpu_custom_call.1} parent=1 // pred_fallthru
      _
    %v60 = vld [vmem:[#allocation2] sm:$0xff]
    %v61 = vld [vmem:[#allocation2 + $0x8] sm:$0xff]
    %s62 = scalar_lea.vmem [#allocation2], 16
    %v63 = vld [vmem:[%s62] sm:$0xff]
    %v64 = vld [vmem:[%s62 + $0x8] sm:$0xff]
    %s65 = scalar_lea.vmem [#allocation2], 32
    %v66 = vld [vmem:[%s65] sm:$0xff]
    %v67 = vld [vmem:[%s65 + $0x8] sm:$0xff]
    %v68 = vld [vmem:[#allocation5] sm:$0xff]
    %v69 = vld [vmem:[#allocation5 + $0x8] sm:$0xff]
    %v70 = vld [vmem:[#allocation5 + $0x10] sm:$0xff]
    %v71 = vld [vmem:[#allocation5 + $0x18] sm:$0xff]
    %s72 = scalar_lea.vmem [#allocation5], 32
    %v73 = vld [vmem:[%s72] sm:$0xff]
    %v74 = vld [vmem:[%s72 + $0x8] sm:$0xff]
    %v75 = vld [vmem:[%s72 + $0x10] sm:$0xff]
    %v76 = vld [vmem:[%s72 + $0x18] sm:$0xff]
    %s77 = scalar_lea.vmem [#allocation5], 64
    %v78 = vld [vmem:[%s77] sm:$0xff]
    %v79 = vld [vmem:[%s77 + $0x8] sm:$0xff]
    %v80 = vld [vmem:[%s77 + $0x10] sm:$0xff]
    %v81 = vld [vmem:[%s77 + $0x18] sm:$0xff]
    %s82 = scalar_lea.vmem [#allocation5], 96
    %v83 = vld [vmem:[%s82] sm:$0xff]
    %v84 = vld [vmem:[%s82 + $0x8] sm:$0xff]
    %v85 = vld [vmem:[%s82 + $0x10] sm:$0xff]
    %v86 = vld [vmem:[%s82 + $0x18] sm:$0xff]
    %s87 = scalar_lea.vmem [#allocation5], 128
    %v88 = vld [vmem:[%s87] sm:$0xff]
    %v89 = vld [vmem:[%s87 + $0x8] sm:$0xff]
    %v90 = vld [vmem:[%s87 + $0x10] sm:$0xff]
    %v91 = vld [vmem:[%s87 + $0x18] sm:$0xff]
    %v92 = vld [vmem:[%s2] sm:$0x1]
    %v93 = vld [vmem:[%s2 + $0x1] sm:$0x1]
    %v94 = vld [vmem:[%s2 + $0x2] sm:$0x1]
    %v95 = vld [vmem:[%s2 + $0x3] sm:$0x1]
    %v96 = vld [vmem:[#allocation7] sm:$0xff]
    %v97 = vld [vmem:[#allocation7 + $0x8] sm:$0xff]
    %s98 = scalar_lea.vmem [#allocation7], 16
    %v99 = vld [vmem:[%s98] sm:$0xff]
    %v100 = vld [vmem:[%s98 + $0x8] sm:$0xff]
    %v101 = vpack.c.bf16 %v61, %v60
    %v102 = vunpack.c.l.bf16 %v101
    %v103 = vunpack.c.h.bf16 %v101
    %v104 = vsub.f32 %v60, %v102
    %v105 = vsub.f32 %v61, %v103
    %v106 = vpack.c.bf16 %v105, %v104
    %v107 = vpack.c.bf16 %v69, %v68
    %v108 = vpack.c.bf16 %v71, %v70
    %v109 = vunpack.c.l.bf16 %v107
    %v110 = vunpack.c.h.bf16 %v107
    %v111 = vunpack.c.l.bf16 %v108
    %v112 = vunpack.c.h.bf16 %v108
    %v113 = vsub.f32 %v68, %v109
    %v114 = vsub.f32 %v69, %v110
    %v115 = vsub.f32 %v70, %v111
    %v116 = vsub.f32 %v71, %v112
    %v117 = vpack.c.bf16 %v114, %v113
    %v118 = vpack.c.bf16 %v116, %v115
    %vm119 = vcmask 261120
    %v121 = vsel %vm119, %v106, 0
    %123 = vmatprep.subr.bf16.mxu0 0
    %124 = vmatpush1.bf16.msra.mxu0 %v107
    %125 = vmatprep.subr.bf16.mxu0 0
    %126 = vmatpush1.bf16.msra.mxu0 %v108
    %127 = vmatprep.subr.bf16.mxu0 0
    %128 = vmatpush1.bf16.msra.mxu0 0
    %129 = vmatprep.subr.bf16.mxu0 0
    %130 = vmatpush1.bf16.msra.mxu0 0
    %131 = vmatprep.subr.bf16.mxu0 0
    %132 = vmatpush1.bf16.msra.mxu0 0
    %133 = vmatprep.subr.bf16.mxu0 0
    %134 = vmatpush1.bf16.msra.mxu0 0
    %135 = vmatprep.subr.bf16.mxu0 0
    %136 = vmatpush1.bf16.msra.mxu0 0
    %137 = vmatprep.subr.bf16.mxu0 0
    %138 = vmatpush1.bf16.msra.mxu0 0
    %139 = vmatprep.subr.bf16.mxu0 0
    %140 = vmatpush1.bf16.msra.mxu0 0
    %141 = vmatprep.subr.bf16.mxu0 0
    %142 = vmatpush1.bf16.msra.mxu0 0
    %143 = vmatprep.subr.bf16.mxu0 0
    %144 = vmatpush1.bf16.msra.mxu0 0
    %145 = vmatprep.subr.bf16.mxu0 0
    %146 = vmatpush1.bf16.msra.mxu0 0
    %147 = vmatprep.subr.bf16.mxu0 0
    %148 = vmatpush1.bf16.msra.mxu0 0
    %149 = vmatprep.subr.bf16.mxu0 0
    %150 = vmatpush1.bf16.msra.mxu0 0
    %151 = vmatprep.subr.bf16.mxu0 0
    %152 = vmatpush1.bf16.msra.mxu0 0
    %153 = vmatprep.subr.bf16.mxu0 0
    %154 = vmatpush1.bf16.msra.mxu0 0
    %155 = vmatprep.mubr.bf16.mxu0 0
    %156 = vmatmul.mubr.bf16.gmra.mrb[0].mxu0 %v121
    %v157 = vpop.f32.mrb[0].mxu0
    %v158 = vadd.f32 0.0, %v157
    %v159 = vpop.f32.mrb[0].mxu0
    %v160 = vpop.f32.mrb[0].mxu0
    %v161 = vadd.f32 0.0, %v160
    %v162 = vpop.f32.mrb[0].mxu0
    %163 = vdwg.mxu0
    %v165 = vsel %vm119, %v101, 0
    %167 = vmatprep.subr.bf16.mxu0 0
    %168 = vmatpush1.bf16.msra.mxu0 %v107
    %169 = vmatprep.subr.bf16.mxu0 0
    %170 = vmatpush1.bf16.msra.mxu0 %v108
    %171 = vmatprep.subr.bf16.mxu0 0
    %172 = vmatpush1.bf16.msra.mxu0 0
    %173 = vmatprep.subr.bf16.mxu0 0
    %174 = vmatpush1.bf16.msra.mxu0 0
    %175 = vmatprep.subr.bf16.mxu0 0
    %176 = vmatpush1.bf16.msra.mxu0 0
    %177 = vmatprep.subr.bf16.mxu0 0
    %178 = vmatpush1.bf16.msra.mxu0 0
    %179 = vmatprep.subr.bf16.mxu0 0
    %180 = vmatpush1.bf16.msra.mxu0 0
    %181 = vmatprep.subr.bf16.mxu0 0
    %182 = vmatpush1.bf16.msra.mxu0 0
    %183 = vmatprep.subr.bf16.mxu0 0
    %184 = vmatpush1.bf16.msra.mxu0 0
    %185 = vmatprep.subr.bf16.mxu0 0
    %186 = vmatpush1.bf16.msra.mxu0 0
    %187 = vmatprep.subr.bf16.mxu0 0
    %188 = vmatpush1.bf16.msra.mxu0 0
    %189 = vmatprep.subr.bf16.mxu0 0
    %190 = vmatpush1.bf16.msra.mxu0 0
    %191 = vmatprep.subr.bf16.mxu0 0
    %192 = vmatpush1.bf16.msra.mxu0 0
    %193 = vmatprep.subr.bf16.mxu0 0
    %194 = vmatpush1.bf16.msra.mxu0 0
    %195 = vmatprep.subr.bf16.mxu0 0
    %196 = vmatpush1.bf16.msra.mxu0 0
    %197 = vmatprep.subr.bf16.mxu0 0
    %198 = vmatpush1.bf16.msra.mxu0 0
    %199 = vmatprep.mubr.bf16.mxu0 0
    %200 = vmatmul.mubr.bf16.gmra.mrb[0].mxu0 %v165
    %v201 = vpop.f32.mrb[0].mxu0
    %v202 = vadd.f32 %v158, %v201
    %v203 = vpop.f32.mrb[0].mxu0
    %v204 = vpop.f32.mrb[0].mxu0
    %v205 = vadd.f32 %v161, %v204
    %v206 = vpop.f32.mrb[0].mxu0
    %207 = vdwg.mxu0
    %208 = vmatprep.subr.bf16.mxu0 0
    %209 = vmatpush1.bf16.msra.mxu0 %v117
    %210 = vmatprep.subr.bf16.mxu0 0
    %211 = vmatpush1.bf16.msra.mxu0 %v118
    %212 = vmatprep.subr.bf16.mxu0 0
    %213 = vmatpush1.bf16.msra.mxu0 0
    %214 = vmatprep.subr.bf16.mxu0 0
    %215 = vmatpush1.bf16.msra.mxu0 0
    %216 = vmatprep.subr.bf16.mxu0 0
    %217 = vmatpush1.bf16.msra.mxu0 0
    %218 = vmatprep.subr.bf16.mxu0 0
    %219 = vmatpush1.bf16.msra.mxu0 0
    %220 = vmatprep.subr.bf16.mxu0 0
    %221 = vmatpush1.bf16.msra.mxu0 0
    %222 = vmatprep.subr.bf16.mxu0 0
    %223 = vmatpush1.bf16.msra.mxu0 0
    %224 = vmatprep.subr.bf16.mxu0 0
    %225 = vmatpush1.bf16.msra.mxu0 0
    %226 = vmatprep.subr.bf16.mxu0 0
    %227 = vmatpush1.bf16.msra.mxu0 0
    %228 = vmatprep.subr.bf16.mxu0 0
    %229 = vmatpush1.bf16.msra.mxu0 0
    %230 = vmatprep.subr.bf16.mxu0 0
    %231 = vmatpush1.bf16.msra.mxu0 0
    %232 = vmatprep.subr.bf16.mxu0 0
    %233 = vmatpush1.bf16.msra.mxu0 0
    %234 = vmatprep.subr.bf16.mxu0 0
    %235 = vmatpush1.bf16.msra.mxu0 0
    %236 = vmatprep.subr.bf16.mxu0 0
    %237 = vmatpush1.bf16.msra.mxu0 0
    %238 = vmatprep.subr.bf16.mxu0 0
    %239 = vmatpush1.bf16.msra.mxu0 0
    %240 = vmatprep.mubr.bf16.mxu0 0
    %241 = vmatmul.mubr.bf16.gmra.mrb[0].mxu0 %v165
    %v242 = vpop.f32.mrb[0].mxu0
    %v243 = vadd.f32 0.0, %v242
    %v244 = vpop.f32.mrb[0].mxu0
    %v245 = vpop.f32.mrb[0].mxu0
    %v246 = vadd.f32 0.0, %v245
    %v247 = vpop.f32.mrb[0].mxu0
    %248 = vdwg.mxu0
    %v249 = vadd.f32 %v202, %v243
    %v250 = vadd.f32 %v205, %v246
    %v251 = vlaneseq
    %v252 = vshrl.u32 %v251, 7
    %v253 = vsub.s32 0, %v252
    %v254 = vrot.slane %v92, %v253
    %v255 = vadd.f32 %v249, %v254
    %v256 = vadd.f32 %v250, %v254
    %v257 = vpack.c.bf16 %v64, %v63
    %v258 = vunpack.c.l.bf16 %v257
    %v259 = vunpack.c.h.bf16 %v257
    %v260 = vsub.f32 %v63, %v258
    %v261 = vsub.f32 %v64, %v259
    %v262 = vpack.c.bf16 %v261, %v260
    %v263 = vpack.c.bf16 %v74, %v73
    %v264 = vpack.c.bf16 %v76, %v75
    %v265 = vunpack.c.l.bf16 %v263
    %v266 = vunpack.c.h.bf16 %v263
    %v267 = vunpack.c.l.bf16 %v264
    %v268 = vunpack.c.h.bf16 %v264
    %v269 = vsub.f32 %v73, %v265
    %v270 = vsub.f32 %v74, %v266
    %v271 = vsub.f32 %v75, %v267
    %v272 = vsub.f32 %v76, %v268
    %v273 = vpack.c.bf16 %v270, %v269
    %v274 = vpack.c.bf16 %v272, %v271
    %v276 = vsel %vm119, %v262, 0
    %278 = vmatprep.subr.bf16.mxu0 0
    %279 = vmatpush1.bf16.msra.mxu0 %v263
    %280 = vmatprep.subr.bf16.mxu0 0
    %281 = vmatpush1.bf16.msra.mxu0 %v264
    %282 = vmatprep.subr.bf16.mxu0 0
    %283 = vmatpush1.bf16.msra.mxu0 0
    %284 = vmatprep.subr.bf16.mxu0 0
    %285 = vmatpush1.bf16.msra.mxu0 0
    %286 = vmatprep.subr.bf16.mxu0 0
    %287 = vmatpush1.bf16.msra.mxu0 0
    %288 = vmatprep.subr.bf16.mxu0 0
    %289 = vmatpush1.bf16.msra.mxu0 0
    %290 = vmatprep.subr.bf16.mxu0 0
    %291 = vmatpush1.bf16.msra.mxu0 0
    %292 = vmatprep.subr.bf16.mxu0 0
    %293 = vmatpush1.bf16.msra.mxu0 0
    %294 = vmatprep.subr.bf16.mxu0 0
    %295 = vmatpush1.bf16.msra.mxu0 0
    %296 = vmatprep.subr.bf16.mxu0 0
    %297 = vmatpush1.bf16.msra.mxu0 0
    %298 = vmatprep.subr.bf16.mxu0 0
    %299 = vmatpush1.bf16.msra.mxu0 0
    %300 = vmatprep.subr.bf16.mxu0 0
    %301 = vmatpush1.bf16.msra.mxu0 0
    %302 = vmatprep.subr.bf16.mxu0 0
    %303 = vmatpush1.bf16.msra.mxu0 0
    %304 = vmatprep.subr.bf16.mxu0 0
    %305 = vmatpush1.bf16.msra.mxu0 0
    %306 = vmatprep.subr.bf16.mxu0 0
    %307 = vmatpush1.bf16.msra.mxu0 0
    %308 = vmatprep.subr.bf16.mxu0 0
    %309 = vmatpush1.bf16.msra.mxu0 0
    %310 = vmatprep.mubr.bf16.mxu0 0
    %311 = vmatmul.mubr.bf16.gmra.mrb[0].mxu0 %v276
    %v312 = vpop.f32.mrb[0].mxu0
    %v313 = vadd.f32 0.0, %v312
    %v314 = vpop.f32.mrb[0].mxu0
    %v315 = vpop.f32.mrb[0].mxu0
    %v316 = vadd.f32 0.0, %v315
    %v317 = vpop.f32.mrb[0].mxu0
    %318 = vdwg.mxu0
    %v320 = vsel %vm119, %v257, 0
    %322 = vmatprep.subr.bf16.mxu0 0
    %323 = vmatpush1.bf16.msra.mxu0 %v263
    %324 = vmatprep.subr.bf16.mxu0 0
    %325 = vmatpush1.bf16.msra.mxu0 %v264
    %326 = vmatprep.subr.bf16.mxu0 0
    %327 = vmatpush1.bf16.msra.mxu0 0
    %328 = vmatprep.subr.bf16.mxu0 0
    %329 = vmatpush1.bf16.msra.mxu0 0
    %330 = vmatprep.subr.bf16.mxu0 0
    %331 = vmatpush1.bf16.msra.mxu0 0
    %332 = vmatprep.subr.bf16.mxu0 0
    %333 = vmatpush1.bf16.msra.mxu0 0
    %334 = vmatprep.subr.bf16.mxu0 0
    %335 = vmatpush1.bf16.msra.mxu0 0
    %336 = vmatprep.subr.bf16.mxu0 0
    %337 = vmatpush1.bf16.msra.mxu0 0
    %338 = vmatprep.subr.bf16.mxu0 0
    %339 = vmatpush1.bf16.msra.mxu0 0
    %340 = vmatprep.subr.bf16.mxu0 0
    %341 = vmatpush1.bf16.msra.mxu0 0
    %342 = vmatprep.subr.bf16.mxu0 0
    %343 = vmatpush1.bf16.msra.mxu0 0
    %344 = vmatprep.subr.bf16.mxu0 0
    %345 = vmatpush1.bf16.msra.mxu0 0
    %346 = vmatprep.subr.bf16.mxu0 0
    %347 = vmatpush1.bf16.msra.mxu0 0
    %348 = vmatprep.subr.bf16.mxu0 0
    %349 = vmatpush1.bf16.msra.mxu0 0
    %350 = vmatprep.subr.bf16.mxu0 0
    %351 = vmatpush1.bf16.msra.mxu0 0
    %352 = vmatprep.subr.bf16.mxu0 0
    %353 = vmatpush1.bf16.msra.mxu0 0
    %354 = vmatprep.mubr.bf16.mxu0 0
    %355 = vmatmul.mubr.bf16.gmra.mrb[0].mxu0 %v320
    %v356 = vpop.f32.mrb[0].mxu0
    %v357 = vadd.f32 %v313, %v356
    %v358 = vpop.f32.mrb[0].mxu0
    %v359 = vpop.f32.mrb[0].mxu0
    %v360 = vadd.f32 %v316, %v359
    %v361 = vpop.f32.mrb[0].mxu0
    %362 = vdwg.mxu0
    %363 = vmatprep.subr.bf16.mxu0 0
    %364 = vmatpush1.bf16.msra.mxu0 %v273
    %365 = vmatprep.subr.bf16.mxu0 0
    %366 = vmatpush1.bf16.msra.mxu0 %v274
    %367 = vmatprep.subr.bf16.mxu0 0
    %368 = vmatpush1.bf16.msra.mxu0 0
    %369 = vmatprep.subr.bf16.mxu0 0
    %370 = vmatpush1.bf16.msra.mxu0 0
    %371 = vmatprep.subr.bf16.mxu0 0
    %372 = vmatpush1.bf16.msra.mxu0 0
    %373 = vmatprep.subr.bf16.mxu0 0
    %374 = vmatpush1.bf16.msra.mxu0 0
    %375 = vmatprep.subr.bf16.mxu0 0
    %376 = vmatpush1.bf16.msra.mxu0 0
    %377 = vmatprep.subr.bf16.mxu0 0
    %378 = vmatpush1.bf16.msra.mxu0 0
    %379 = vmatprep.subr.bf16.mxu0 0
    %380 = vmatpush1.bf16.msra.mxu0 0
    %381 = vmatprep.subr.bf16.mxu0 0
    %382 = vmatpush1.bf16.msra.mxu0 0
    %383 = vmatprep.subr.bf16.mxu0 0
    %384 = vmatpush1.bf16.msra.mxu0 0
    %385 = vmatprep.subr.bf16.mxu0 0
    %386 = vmatpush1.bf16.msra.mxu0 0
    %387 = vmatprep.subr.bf16.mxu0 0
    %388 = vmatpush1.bf16.msra.mxu0 0
    %389 = vmatprep.subr.bf16.mxu0 0
    %390 = vmatpush1.bf16.msra.mxu0 0
    %391 = vmatprep.subr.bf16.mxu0 0
    %392 = vmatpush1.bf16.msra.mxu0 0
    %393 = vmatprep.subr.bf16.mxu0 0
    %394 = vmatpush1.bf16.msra.mxu0 0
    %395 = vmatprep.mubr.bf16.mxu0 0
    %396 = vmatmul.mubr.bf16.gmra.mrb[0].mxu0 %v320
    %v397 = vpop.f32.mrb[0].mxu0
    %v398 = vadd.f32 0.0, %v397
    %v399 = vpop.f32.mrb[0].mxu0
    %v400 = vpop.f32.mrb[0].mxu0
    %v401 = vadd.f32 0.0, %v400
    %v402 = vpop.f32.mrb[0].mxu0
    %403 = vdwg.mxu0
    %v404 = vadd.f32 %v357, %v398
    %v405 = vadd.f32 %v360, %v401
    %v406 = vlaneseq
    %v407 = vshrl.u32 %v406, 7
    %v408 = vsub.s32 0, %v407
    %v409 = vrot.slane %v93, %v408
    %v410 = vadd.f32 %v404, %v409
    %v411 = vadd.f32 %v405, %v409
    %v412 = vpack.c.bf16 %v67, %v66
    %v413 = vunpack.c.l.bf16 %v412
    %v414 = vunpack.c.h.bf16 %v412
    %v415 = vsub.f32 %v66, %v413
    %v416 = vsub.f32 %v67, %v414
    %v417 = vpack.c.bf16 %v416, %v415
    %v418 = vpack.c.bf16 %v79, %v78
    %v419 = vpack.c.bf16 %v81, %v80
    %v420 = vunpack.c.l.bf16 %v418
    %v421 = vunpack.c.h.bf16 %v418
    %v422 = vunpack.c.l.bf16 %v419
    %v423 = vunpack.c.h.bf16 %v419
    %v424 = vsub.f32 %v78, %v420
    %v425 = vsub.f32 %v79, %v421
    %v426 = vsub.f32 %v80, %v422
    %v427 = vsub.f32 %v81, %v423
    %v428 = vpack.c.bf16 %v425, %v424
    %v429 = vpack.c.bf16 %v427, %v426
    %v431 = vsel %vm119, %v417, 0
    %433 = vmatprep.subr.bf16.mxu0 0
    %434 = vmatpush1.bf16.msra.mxu0 %v418
    %435 = vmatprep.subr.bf16.mxu0 0
    %436 = vmatpush1.bf16.msra.mxu0 %v419
    %437 = vmatprep.subr.bf16.mxu0 0
    %438 = vmatpush1.bf16.msra.mxu0 0
    %439 = vmatprep.subr.bf16.mxu0 0
    %440 = vmatpush1.bf16.msra.mxu0 0
    %441 = vmatprep.subr.bf16.mxu0 0
    %442 = vmatpush1.bf16.msra.mxu0 0
    %443 = vmatprep.subr.bf16.mxu0 0
    %444 = vmatpush1.bf16.msra.mxu0 0
    %445 = vmatprep.subr.bf16.mxu0 0
    %446 = vmatpush1.bf16.msra.mxu0 0
    %447 = vmatprep.subr.bf16.mxu0 0
    %448 = vmatpush1.bf16.msra.mxu0 0
    %449 = vmatprep.subr.bf16.mxu0 0
    %450 = vmatpush1.bf16.msra.mxu0 0
    %451 = vmatprep.subr.bf16.mxu0 0
    %452 = vmatpush1.bf16.msra.mxu0 0
    %453 = vmatprep.subr.bf16.mxu0 0
    %454 = vmatpush1.bf16.msra.mxu0 0
    %455 = vmatprep.subr.bf16.mxu0 0
    %456 = vmatpush1.bf16.msra.mxu0 0
    %457 = vmatprep.subr.bf16.mxu0 0
    %458 = vmatpush1.bf16.msra.mxu0 0
    %459 = vmatprep.subr.bf16.mxu0 0
    %460 = vmatpush1.bf16.msra.mxu0 0
    %461 = vmatprep.subr.bf16.mxu0 0
    %462 = vmatpush1.bf16.msra.mxu0 0
    %463 = vmatprep.subr.bf16.mxu0 0
    %464 = vmatpush1.bf16.msra.mxu0 0
    %465 = vmatprep.mubr.bf16.mxu0 0
    %466 = vmatmul.mubr.bf16.gmra.mrb[0].mxu0 %v431
    %v467 = vpop.f32.mrb[0].mxu0
    %v468 = vadd.f32 0.0, %v467
    %v469 = vpop.f32.mrb[0].mxu0
    %v470 = vpop.f32.mrb[0].mxu0
    %v471 = vadd.f32 0.0, %v470
    %v472 = vpop.f32.mrb[0].mxu0
    %473 = vdwg.mxu0
    %v475 = vsel %vm119, %v412, 0
    %477 = vmatprep.subr.bf16.mxu0 0
    %478 = vmatpush1.bf16.msra.mxu0 %v418
    %479 = vmatprep.subr.bf16.mxu0 0
    %480 = vmatpush1.bf16.msra.mxu0 %v419
    %481 = vmatprep.subr.bf16.mxu0 0
    %482 = vmatpush1.bf16.msra.mxu0 0
    %483 = vmatprep.subr.bf16.mxu0 0
    %484 = vmatpush1.bf16.msra.mxu0 0
    %485 = vmatprep.subr.bf16.mxu0 0
    %486 = vmatpush1.bf16.msra.mxu0 0
    %487 = vmatprep.subr.bf16.mxu0 0
    %488 = vmatpush1.bf16.msra.mxu0 0
    %489 = vmatprep.subr.bf16.mxu0 0
    %490 = vmatpush1.bf16.msra.mxu0 0
    %491 = vmatprep.subr.bf16.mxu0 0
    %492 = vmatpush1.bf16.msra.mxu0 0
    %493 = vmatprep.subr.bf16.mxu0 0
    %494 = vmatpush1.bf16.msra.mxu0 0
    %495 = vmatprep.subr.bf16.mxu0 0
    %496 = vmatpush1.bf16.msra.mxu0 0
    %497 = vmatprep.subr.bf16.mxu0 0
    %498 = vmatpush1.bf16.msra.mxu0 0
    %499 = vmatprep.subr.bf16.mxu0 0
    %500 = vmatpush1.bf16.msra.mxu0 0
    %501 = vmatprep.subr.bf16.mxu0 0
    %502 = vmatpush1.bf16.msra.mxu0 0
    %503 = vmatprep.subr.bf16.mxu0 0
    %504 = vmatpush1.bf16.msra.mxu0 0
    %505 = vmatprep.subr.bf16.mxu0 0
    %506 = vmatpush1.bf16.msra.mxu0 0
    %507 = vmatprep.subr.bf16.mxu0 0
    %508 = vmatpush1.bf16.msra.mxu0 0
    %509 = vmatprep.mubr.bf16.mxu0 0
    %510 = vmatmul.mubr.bf16.gmra.mrb[0].mxu0 %v475
    %v511 = vpop.f32.mrb[0].mxu0
    %v512 = vadd.f32 %v468, %v511
    %v513 = vpop.f32.mrb[0].mxu0
    %v514 = vpop.f32.mrb[0].mxu0
    %v515 = vadd.f32 %v471, %v514
    %v516 = vpop.f32.mrb[0].mxu0
    %517 = vdwg.mxu0
    %518 = vmatprep.subr.bf16.mxu0 0
    %519 = vmatpush1.bf16.msra.mxu0 %v428
    %520 = vmatprep.subr.bf16.mxu0 0
    %521 = vmatpush1.bf16.msra.mxu0 %v429
    %522 = vmatprep.subr.bf16.mxu0 0
    %523 = vmatpush1.bf16.msra.mxu0 0
    %524 = vmatprep.subr.bf16.mxu0 0
    %525 = vmatpush1.bf16.msra.mxu0 0
    %526 = vmatprep.subr.bf16.mxu0 0
    %527 = vmatpush1.bf16.msra.mxu0 0
    %528 = vmatprep.subr.bf16.mxu0 0
    %529 = vmatpush1.bf16.msra.mxu0 0
    %530 = vmatprep.subr.bf16.mxu0 0
    %531 = vmatpush1.bf16.msra.mxu0 0
    %532 = vmatprep.subr.bf16.mxu0 0
    %533 = vmatpush1.bf16.msra.mxu0 0
    %534 = vmatprep.subr.bf16.mxu0 0
    %535 = vmatpush1.bf16.msra.mxu0 0
    %536 = vmatprep.subr.bf16.mxu0 0
    %537 = vmatpush1.bf16.msra.mxu0 0
    %538 = vmatprep.subr.bf16.mxu0 0
    %539 = vmatpush1.bf16.msra.mxu0 0
    %540 = vmatprep.subr.bf16.mxu0 0
    %541 = vmatpush1.bf16.msra.mxu0 0
    %542 = vmatprep.subr.bf16.mxu0 0
    %543 = vmatpush1.bf16.msra.mxu0 0
    %544 = vmatprep.subr.bf16.mxu0 0
    %545 = vmatpush1.bf16.msra.mxu0 0
    %546 = vmatprep.subr.bf16.mxu0 0
    %547 = vmatpush1.bf16.msra.mxu0 0
    %548 = vmatprep.subr.bf16.mxu0 0
    %549 = vmatpush1.bf16.msra.mxu0 0
    %550 = vmatprep.mubr.bf16.mxu0 0
    %551 = vmatmul.mubr.bf16.gmra.mrb[0].mxu0 %v475
    %v552 = vpop.f32.mrb[0].mxu0
    %v553 = vadd.f32 0.0, %v552
    %v554 = vpop.f32.mrb[0].mxu0
    %v555 = vpop.f32.mrb[0].mxu0
    %v556 = vadd.f32 0.0, %v555
    %v557 = vpop.f32.mrb[0].mxu0
    %558 = vdwg.mxu0
    %v559 = vadd.f32 %v512, %v553
    %v560 = vadd.f32 %v515, %v556
    %v561 = vlaneseq
    %v562 = vshrl.u32 %v561, 7
    %v563 = vsub.s32 0, %v562
    %v564 = vrot.slane %v94, %v563
    %v565 = vadd.f32 %v559, %v564
    %v566 = vadd.f32 %v560, %v564
    %v567 = vmul.f32 %v255, %v96
    %v568 = vmul.f32 %v256, %v97
    %v569 = vpack.c.bf16 %v256, %v255
    %v570 = vunpack.c.l.bf16 %v569
    %v571 = vunpack.c.h.bf16 %v569
    %v572 = vsub.f32 %v255, %v570
    %v573 = vsub.f32 %v256, %v571
    %v574 = vpack.c.bf16 %v573, %v572
    %v575 = vpack.c.bf16 %v89, %v88
    %v576 = vpack.c.bf16 %v91, %v90
    %v577 = vunpack.c.l.bf16 %v575
    %v578 = vunpack.c.h.bf16 %v575
    %v579 = vunpack.c.l.bf16 %v576
    %v580 = vunpack.c.h.bf16 %v576
    %v581 = vsub.f32 %v88, %v577
    %v582 = vsub.f32 %v89, %v578
    %v583 = vsub.f32 %v90, %v579
    %v584 = vsub.f32 %v91, %v580
    %v585 = vpack.c.bf16 %v582, %v581
    %v586 = vpack.c.bf16 %v584, %v583
    %v588 = vsel %vm119, %v574, 0
    %590 = vmatprep.subr.bf16.mxu0 0
    %591 = vmatpush1.bf16.msra.mxu0 %v575
    %592 = vmatprep.subr.bf16.mxu0 0
    %593 = vmatpush1.bf16.msra.mxu0 %v576
    %594 = vmatprep.subr.bf16.mxu0 0
    %595 = vmatpush1.bf16.msra.mxu0 0
    %596 = vmatprep.subr.bf16.mxu0 0
    %597 = vmatpush1.bf16.msra.mxu0 0
    %598 = vmatprep.subr.bf16.mxu0 0
    %599 = vmatpush1.bf16.msra.mxu0 0
    %600 = vmatprep.subr.bf16.mxu0 0
    %601 = vmatpush1.bf16.msra.mxu0 0
    %602 = vmatprep.subr.bf16.mxu0 0
    %603 = vmatpush1.bf16.msra.mxu0 0
    %604 = vmatprep.subr.bf16.mxu0 0
    %605 = vmatpush1.bf16.msra.mxu0 0
    %606 = vmatprep.subr.bf16.mxu0 0
    %607 = vmatpush1.bf16.msra.mxu0 0
    %608 = vmatprep.subr.bf16.mxu0 0
    %609 = vmatpush1.bf16.msra.mxu0 0
    %610 = vmatprep.subr.bf16.mxu0 0
    %611 = vmatpush1.bf16.msra.mxu0 0
    %612 = vmatprep.subr.bf16.mxu0 0
    %613 = vmatpush1.bf16.msra.mxu0 0
    %614 = vmatprep.subr.bf16.mxu0 0
    %615 = vmatpush1.bf16.msra.mxu0 0
    %616 = vmatprep.subr.bf16.mxu0 0
    %617 = vmatpush1.bf16.msra.mxu0 0
    %618 = vmatprep.subr.bf16.mxu0 0
    %619 = vmatpush1.bf16.msra.mxu0 0
    %620 = vmatprep.subr.bf16.mxu0 0
    %621 = vmatpush1.bf16.msra.mxu0 0
    %622 = vmatprep.mubr.bf16.mxu0 0
    %623 = vmatmul.mubr.bf16.gmra.mrb[0].mxu0 %v588
    %v624 = vpop.f32.mrb[0].mxu0
    %v625 = vadd.f32 0.0, %v624
    %v626 = vpop.f32.mrb[0].mxu0
    %v627 = vpop.f32.mrb[0].mxu0
    %v628 = vadd.f32 0.0, %v627
    %v629 = vpop.f32.mrb[0].mxu0
    %630 = vdwg.mxu0
    %v632 = vsel %vm119, %v569, 0
    %634 = vmatprep.subr.bf16.mxu0 0
    %635 = vmatpush1.bf16.msra.mxu0 %v575
    %636 = vmatprep.subr.bf16.mxu0 0
    %637 = vmatpush1.bf16.msra.mxu0 %v576
    %638 = vmatprep.subr.bf16.mxu0 0
    %639 = vmatpush1.bf16.msra.mxu0 0
    %640 = vmatprep.subr.bf16.mxu0 0
    %641 = vmatpush1.bf16.msra.mxu0 0
    %642 = vmatprep.subr.bf16.mxu0 0
    %643 = vmatpush1.bf16.msra.mxu0 0
    %644 = vmatprep.subr.bf16.mxu0 0
    %645 = vmatpush1.bf16.msra.mxu0 0
    %646 = vmatprep.subr.bf16.mxu0 0
    %647 = vmatpush1.bf16.msra.mxu0 0
    %648 = vmatprep.subr.bf16.mxu0 0
    %649 = vmatpush1.bf16.msra.mxu0 0
    %650 = vmatprep.subr.bf16.mxu0 0
    %651 = vmatpush1.bf16.msra.mxu0 0
    %652 = vmatprep.subr.bf16.mxu0 0
    %653 = vmatpush1.bf16.msra.mxu0 0
    %654 = vmatprep.subr.bf16.mxu0 0
    %655 = vmatpush1.bf16.msra.mxu0 0
    %656 = vmatprep.subr.bf16.mxu0 0
    %657 = vmatpush1.bf16.msra.mxu0 0
    %658 = vmatprep.subr.bf16.mxu0 0
    %659 = vmatpush1.bf16.msra.mxu0 0
    %660 = vmatprep.subr.bf16.mxu0 0
    %661 = vmatpush1.bf16.msra.mxu0 0
    %662 = vmatprep.subr.bf16.mxu0 0
    %663 = vmatpush1.bf16.msra.mxu0 0
    %664 = vmatprep.subr.bf16.mxu0 0
    %665 = vmatpush1.bf16.msra.mxu0 0
    %666 = vmatprep.mubr.bf16.mxu0 0
    %667 = vmatmul.mubr.bf16.gmra.mrb[0].mxu0 %v632
    %v668 = vpop.f32.mrb[0].mxu0
    %v669 = vadd.f32 %v625, %v668
    %v670 = vpop.f32.mrb[0].mxu0
    %v671 = vpop.f32.mrb[0].mxu0
    %v672 = vadd.f32 %v628, %v671
    %v673 = vpop.f32.mrb[0].mxu0
    %674 = vdwg.mxu0
    %675 = vmatprep.subr.bf16.mxu0 0
    %676 = vmatpush1.bf16.msra.mxu0 %v585
    %677 = vmatprep.subr.bf16.mxu0 0
    %678 = vmatpush1.bf16.msra.mxu0 %v586
    %679 = vmatprep.subr.bf16.mxu0 0
    %680 = vmatpush1.bf16.msra.mxu0 0
    %681 = vmatprep.subr.bf16.mxu0 0
    %682 = vmatpush1.bf16.msra.mxu0 0
    %683 = vmatprep.subr.bf16.mxu0 0
    %684 = vmatpush1.bf16.msra.mxu0 0
    %685 = vmatprep.subr.bf16.mxu0 0
    %686 = vmatpush1.bf16.msra.mxu0 0
    %687 = vmatprep.subr.bf16.mxu0 0
    %688 = vmatpush1.bf16.msra.mxu0 0
    %689 = vmatprep.subr.bf16.mxu0 0
    %690 = vmatpush1.bf16.msra.mxu0 0
    %691 = vmatprep.subr.bf16.mxu0 0
    %692 = vmatpush1.bf16.msra.mxu0 0
    %693 = vmatprep.subr.bf16.mxu0 0
    %694 = vmatpush1.bf16.msra.mxu0 0
    %695 = vmatprep.subr.bf16.mxu0 0
    %696 = vmatpush1.bf16.msra.mxu0 0
    %697 = vmatprep.subr.bf16.mxu0 0
    %698 = vmatpush1.bf16.msra.mxu0 0
    %699 = vmatprep.subr.bf16.mxu0 0
    %700 = vmatpush1.bf16.msra.mxu0 0
    %701 = vmatprep.subr.bf16.mxu0 0
    %702 = vmatpush1.bf16.msra.mxu0 0
    %703 = vmatprep.subr.bf16.mxu0 0
    %704 = vmatpush1.bf16.msra.mxu0 0
    %705 = vmatprep.subr.bf16.mxu0 0
    %706 = vmatpush1.bf16.msra.mxu0 0
    %707 = vmatprep.mubr.bf16.mxu0 0
    %708 = vmatmul.mubr.bf16.gmra.mrb[0].mxu0 %v632
    %v709 = vpop.f32.mrb[0].mxu0
    %v710 = vadd.f32 0.0, %v709
    %v711 = vpop.f32.mrb[0].mxu0
    %v712 = vpop.f32.mrb[0].mxu0
    %v713 = vadd.f32 0.0, %v712
    %v714 = vpop.f32.mrb[0].mxu0
    %715 = vdwg.mxu0
    %v716 = vadd.f32 %v669, %v710
    %v717 = vadd.f32 %v672, %v713
    %v718 = vmul.f32 %v716, %v99
    %v719 = vmul.f32 %v717, %v100
    %v720 = vadd.f32 %v567, %v718
    %v721 = vadd.f32 %v568, %v719
    %v722 = vmul.f32 %v410, %v96
    %v723 = vmul.f32 %v411, %v97
    %v724 = vpack.c.bf16 %v411, %v410
    %v725 = vunpack.c.l.bf16 %v724
    %v726 = vunpack.c.h.bf16 %v724
    %v727 = vsub.f32 %v410, %v725
    %v728 = vsub.f32 %v411, %v726
    %v729 = vpack.c.bf16 %v728, %v727
    %v731 = vsel %vm119, %v729, 0
    %733 = vmatprep.subr.bf16.mxu0 0
    %734 = vmatpush1.bf16.msra.mxu0 %v575
    %735 = vmatprep.subr.bf16.mxu0 0
    %736 = vmatpush1.bf16.msra.mxu0 %v576
    %737 = vmatprep.subr.bf16.mxu0 0
    %738 = vmatpush1.bf16.msra.mxu0 0
    %739 = vmatprep.subr.bf16.mxu0 0
    %740 = vmatpush1.bf16.msra.mxu0 0
    %741 = vmatprep.subr.bf16.mxu0 0
    %742 = vmatpush1.bf16.msra.mxu0 0
    %743 = vmatprep.subr.bf16.mxu0 0
    %744 = vmatpush1.bf16.msra.mxu0 0
    %745 = vmatprep.subr.bf16.mxu0 0
    %746 = vmatpush1.bf16.msra.mxu0 0
    %747 = vmatprep.subr.bf16.mxu0 0
    %748 = vmatpush1.bf16.msra.mxu0 0
    %749 = vmatprep.subr.bf16.mxu0 0
    %750 = vmatpush1.bf16.msra.mxu0 0
    %751 = vmatprep.subr.bf16.mxu0 0
    %752 = vmatpush1.bf16.msra.mxu0 0
    %753 = vmatprep.subr.bf16.mxu0 0
    %754 = vmatpush1.bf16.msra.mxu0 0
    %755 = vmatprep.subr.bf16.mxu0 0
    %756 = vmatpush1.bf16.msra.mxu0 0
    %757 = vmatprep.subr.bf16.mxu0 0
    %758 = vmatpush1.bf16.msra.mxu0 0
    %759 = vmatprep.subr.bf16.mxu0 0
    %760 = vmatpush1.bf16.msra.mxu0 0
    %761 = vmatprep.subr.bf16.mxu0 0
    %762 = vmatpush1.bf16.msra.mxu0 0
    %763 = vmatprep.subr.bf16.mxu0 0
    %764 = vmatpush1.bf16.msra.mxu0 0
    %765 = vmatprep.mubr.bf16.mxu0 0
    %766 = vmatmul.mubr.bf16.gmra.mrb[0].mxu0 %v731
    %v767 = vpop.f32.mrb[0].mxu0
    %v768 = vadd.f32 0.0, %v767
    %v769 = vpop.f32.mrb[0].mxu0
    %v770 = vpop.f32.mrb[0].mxu0
    %v771 = vadd.f32 0.0, %v770
    %v772 = vpop.f32.mrb[0].mxu0
    %773 = vdwg.mxu0
    %v775 = vsel %vm119, %v724, 0
    %777 = vmatprep.subr.bf16.mxu0 0
    %778 = vmatpush1.bf16.msra.mxu0 %v575
    %779 = vmatprep.subr.bf16.mxu0 0
    %780 = vmatpush1.bf16.msra.mxu0 %v576
    %781 = vmatprep.subr.bf16.mxu0 0
    %782 = vmatpush1.bf16.msra.mxu0 0
    %783 = vmatprep.subr.bf16.mxu0 0
    %784 = vmatpush1.bf16.msra.mxu0 0
    %785 = vmatprep.subr.bf16.mxu0 0
    %786 = vmatpush1.bf16.msra.mxu0 0
    %787 = vmatprep.subr.bf16.mxu0 0
    %788 = vmatpush1.bf16.msra.mxu0 0
    %789 = vmatprep.subr.bf16.mxu0 0
    %790 = vmatpush1.bf16.msra.mxu0 0
    %791 = vmatprep.subr.bf16.mxu0 0
    %792 = vmatpush1.bf16.msra.mxu0 0
    %793 = vmatprep.subr.bf16.mxu0 0
    %794 = vmatpush1.bf16.msra.mxu0 0
    %795 = vmatprep.subr.bf16.mxu0 0
    %796 = vmatpush1.bf16.msra.mxu0 0
    %797 = vmatprep.subr.bf16.mxu0 0
    %798 = vmatpush1.bf16.msra.mxu0 0
    %799 = vmatprep.subr.bf16.mxu0 0
    %800 = vmatpush1.bf16.msra.mxu0 0
    %801 = vmatprep.subr.bf16.mxu0 0
    %802 = vmatpush1.bf16.msra.mxu0 0
    %803 = vmatprep.subr.bf16.mxu0 0
    %804 = vmatpush1.bf16.msra.mxu0 0
    %805 = vmatprep.subr.bf16.mxu0 0
    %806 = vmatpush1.bf16.msra.mxu0 0
    %807 = vmatprep.subr.bf16.mxu0 0
    %808 = vmatpush1.bf16.msra.mxu0 0
    %809 = vmatprep.mubr.bf16.mxu0 0
    %810 = vmatmul.mubr.bf16.gmra.mrb[0].mxu0 %v775
    %v811 = vpop.f32.mrb[0].mxu0
    %v812 = vadd.f32 %v768, %v811
    %v813 = vpop.f32.mrb[0].mxu0
    %v814 = vpop.f32.mrb[0].mxu0
    %v815 = vadd.f32 %v771, %v814
    %v816 = vpop.f32.mrb[0].mxu0
    %817 = vdwg.mxu0
    %818 = vmatprep.subr.bf16.mxu0 0
    %819 = vmatpush1.bf16.msra.mxu0 %v585
    %820 = vmatprep.subr.bf16.mxu0 0
    %821 = vmatpush1.bf16.msra.mxu0 %v586
    %822 = vmatprep.subr.bf16.mxu0 0
    %823 = vmatpush1.bf16.msra.mxu0 0
    %824 = vmatprep.subr.bf16.mxu0 0
    %825 = vmatpush1.bf16.msra.mxu0 0
    %826 = vmatprep.subr.bf16.mxu0 0
    %827 = vmatpush1.bf16.msra.mxu0 0
    %828 = vmatprep.subr.bf16.mxu0 0
    %829 = vmatpush1.bf16.msra.mxu0 0
    %830 = vmatprep.subr.bf16.mxu0 0
    %831 = vmatpush1.bf16.msra.mxu0 0
    %832 = vmatprep.subr.bf16.mxu0 0
    %833 = vmatpush1.bf16.msra.mxu0 0
    %834 = vmatprep.subr.bf16.mxu0 0
    %835 = vmatpush1.bf16.msra.mxu0 0
    %836 = vmatprep.subr.bf16.mxu0 0
    %837 = vmatpush1.bf16.msra.mxu0 0
    %838 = vmatprep.subr.bf16.mxu0 0
    %839 = vmatpush1.bf16.msra.mxu0 0
    %840 = vmatprep.subr.bf16.mxu0 0
    %841 = vmatpush1.bf16.msra.mxu0 0
    %842 = vmatprep.subr.bf16.mxu0 0
    %843 = vmatpush1.bf16.msra.mxu0 0
    %844 = vmatprep.subr.bf16.mxu0 0
    %845 = vmatpush1.bf16.msra.mxu0 0
    %846 = vmatprep.subr.bf16.mxu0 0
    %847 = vmatpush1.bf16.msra.mxu0 0
    %848 = vmatprep.subr.bf16.mxu0 0
    %849 = vmatpush1.bf16.msra.mxu0 0
    %850 = vmatprep.mubr.bf16.mxu0 0
    %851 = vmatmul.mubr.bf16.gmra.mrb[0].mxu0 %v775
    %v852 = vpop.f32.mrb[0].mxu0
    %v853 = vadd.f32 0.0, %v852
    %v854 = vpop.f32.mrb[0].mxu0
    %v855 = vpop.f32.mrb[0].mxu0
    %v856 = vadd.f32 0.0, %v855
    %v857 = vpop.f32.mrb[0].mxu0
    %858 = vdwg.mxu0
    %v859 = vadd.f32 %v812, %v853
    %v860 = vadd.f32 %v815, %v856
    %v861 = vmul.f32 %v859, %v99
    %v862 = vmul.f32 %v860, %v100
    %v863 = vadd.f32 %v722, %v861
    %v864 = vadd.f32 %v723, %v862
    %v865 = vlaneseq
    %v866 = vshrl.u32 %v865, 7
    %v867 = vlaneseq
    %v868 = vand.u32 %v867, 127
    %vm869 = vcmp.ge.s32.totalorder %v866, %v868
    %v870 = vsel %vm869, 0.0, -1e+09
    %v871 = vpack.c.bf16 %v720, %v720
    %v872 = vunpack.c.l.bf16 %v871
    %v873 = vsub.f32 %v720, %v872
    %v874 = vpack.c.bf16 %v873, %v873
    %v875 = vpack.c.bf16 %v863, %v863
    %v876 = vunpack.c.l.bf16 %v875
    %v877 = vsub.f32 %v863, %v876
    %v878 = vpack.c.bf16 %v877, %v877
    %vm879 = vcmask 64512
    %v881 = vsel %vm879, %v874, 0
    %v884 = vsel %vm879, %v875, 0
    %886 = vmatprep.subr.bf16.mxu0 0
    %887 = vmatpush1.bf16.xpose.msra.mxu0 %v884
    %888 = vmatprep.subr.bf16.mxu0 0
    %889 = vmatpush1.bf16.xpose.msra.mxu0 0
    %890 = vmatprep.subr.bf16.mxu0 0
    %891 = vmatpush1.bf16.xpose.msra.mxu0 0
    %892 = vmatprep.subr.bf16.mxu0 0
    %893 = vmatpush1.bf16.xpose.msra.mxu0 0
    %894 = vmatprep.subr.bf16.mxu0 0
    %895 = vmatpush1.bf16.xpose.msra.mxu0 0
    %896 = vmatprep.subr.bf16.mxu0 0
    %897 = vmatpush1.bf16.xpose.msra.mxu0 0
    %898 = vmatprep.subr.bf16.mxu0 0
    %899 = vmatpush1.bf16.xpose.msra.mxu0 0
    %900 = vmatprep.subr.bf16.mxu0 0
    %901 = vmatpush1.bf16.xpose.msra.mxu0 0
    %902 = vmatprep.subr.bf16.mxu0 0
    %903 = vmatpush1.bf16.xpose.msra.mxu0 0
    %904 = vmatprep.subr.bf16.mxu0 0
    %905 = vmatpush1.bf16.xpose.msra.mxu0 0
    %906 = vmatprep.subr.bf16.mxu0 0
    %907 = vmatpush1.bf16.xpose.msra.mxu0 0
    %908 = vmatprep.subr.bf16.mxu0 0
    %909 = vmatpush1.bf16.xpose.msra.mxu0 0
    %910 = vmatprep.subr.bf16.mxu0 0
    %911 = vmatpush1.bf16.xpose.msra.mxu0 0
    %912 = vmatprep.subr.bf16.mxu0 0
    %913 = vmatpush1.bf16.xpose.msra.mxu0 0
    %914 = vmatprep.subr.bf16.mxu0 0
    %915 = vmatpush1.bf16.xpose.msra.mxu0 0
    %916 = vmatprep.subr.bf16.mxu0 0
    %917 = vmatpush1.bf16.xpose.msra.mxu0 0
    %918 = vmatprep.mubr.bf16.mxu0 0
    %919 = vmatmul.mubr.bf16.gmra.mrb[0].mxu0 %v881
    %v920 = vpop.f32.mrb[0].mxu0
    %v921 = vadd.f32 0.0, %v920
    %v922 = vpop.f32.mrb[0].mxu0
    %v923 = vpop.f32.mrb[0].mxu0
    %v924 = vpop.f32.mrb[0].mxu0
    %925 = vdwg.mxu0
    %v927 = vsel %vm879, %v871, 0
    %929 = vmatprep.subr.bf16.mxu0 0
    %930 = vmatpush1.bf16.xpose.msra.mxu0 %v884
    %931 = vmatprep.subr.bf16.mxu0 0
    %932 = vmatpush1.bf16.xpose.msra.mxu0 0
    %933 = vmatprep.subr.bf16.mxu0 0
    %934 = vmatpush1.bf16.xpose.msra.mxu0 0
    %935 = vmatprep.subr.bf16.mxu0 0
    %936 = vmatpush1.bf16.xpose.msra.mxu0 0
    %937 = vmatprep.subr.bf16.mxu0 0
    %938 = vmatpush1.bf16.xpose.msra.mxu0 0
    %939 = vmatprep.subr.bf16.mxu0 0
    %940 = vmatpush1.bf16.xpose.msra.mxu0 0
    %941 = vmatprep.subr.bf16.mxu0 0
    %942 = vmatpush1.bf16.xpose.msra.mxu0 0
    %943 = vmatprep.subr.bf16.mxu0 0
    %944 = vmatpush1.bf16.xpose.msra.mxu0 0
    %945 = vmatprep.subr.bf16.mxu0 0
    %946 = vmatpush1.bf16.xpose.msra.mxu0 0
    %947 = vmatprep.subr.bf16.mxu0 0
    %948 = vmatpush1.bf16.xpose.msra.mxu0 0
    %949 = vmatprep.subr.bf16.mxu0 0
    %950 = vmatpush1.bf16.xpose.msra.mxu0 0
    %951 = vmatprep.subr.bf16.mxu0 0
    %952 = vmatpush1.bf16.xpose.msra.mxu0 0
    %953 = vmatprep.subr.bf16.mxu0 0
    %954 = vmatpush1.bf16.xpose.msra.mxu0 0
    %955 = vmatprep.subr.bf16.mxu0 0
    %956 = vmatpush1.bf16.xpose.msra.mxu0 0
    %957 = vmatprep.subr.bf16.mxu0 0
    %958 = vmatpush1.bf16.xpose.msra.mxu0 0
    %959 = vmatprep.subr.bf16.mxu0 0
    %960 = vmatpush1.bf16.xpose.msra.mxu0 0
    %961 = vmatprep.mubr.bf16.mxu0 0
    %962 = vmatmul.mubr.bf16.gmra.mrb[0].mxu0 %v927
    %v963 = vpop.f32.mrb[0].mxu0
    %v964 = vadd.f32 %v921, %v963
    %v965 = vpop.f32.mrb[0].mxu0
    %v966 = vpop.f32.mrb[0].mxu0
    %v967 = vpop.f32.mrb[0].mxu0
    %968 = vdwg.mxu0
    %v970 = vsel %vm879, %v878, 0
    %972 = vmatprep.subr.bf16.mxu0 0
    %973 = vmatpush1.bf16.xpose.msra.mxu0 %v970
    %974 = vmatprep.subr.bf16.mxu0 0
    %975 = vmatpush1.bf16.xpose.msra.mxu0 0
    %976 = vmatprep.subr.bf16.mxu0 0
    %977 = vmatpush1.bf16.xpose.msra.mxu0 0
    %978 = vmatprep.subr.bf16.mxu0 0
    %979 = vmatpush1.bf16.xpose.msra.mxu0 0
    %980 = vmatprep.subr.bf16.mxu0 0
    %981 = vmatpush1.bf16.xpose.msra.mxu0 0
    %982 = vmatprep.subr.bf16.mxu0 0
    %983 = vmatpush1.bf16.xpose.msra.mxu0 0
    %984 = vmatprep.subr.bf16.mxu0 0
    %985 = vmatpush1.bf16.xpose.msra.mxu0 0
    %986 = vmatprep.subr.bf16.mxu0 0
    %987 = vmatpush1.bf16.xpose.msra.mxu0 0
    %988 = vmatprep.subr.bf16.mxu0 0
    %989 = vmatpush1.bf16.xpose.msra.mxu0 0
    %990 = vmatprep.subr.bf16.mxu0 0
    %991 = vmatpush1.bf16.xpose.msra.mxu0 0
    %992 = vmatprep.subr.bf16.mxu0 0
    %993 = vmatpush1.bf16.xpose.msra.mxu0 0
    %994 = vmatprep.subr.bf16.mxu0 0
    %995 = vmatpush1.bf16.xpose.msra.mxu0 0
    %996 = vmatprep.subr.bf16.mxu0 0
    %997 = vmatpush1.bf16.xpose.msra.mxu0 0
    %998 = vmatprep.subr.bf16.mxu0 0
    %999 = vmatpush1.bf16.xpose.msra.mxu0 0
    %1000 = vmatprep.subr.bf16.mxu0 0
    %1001 = vmatpush1.bf16.xpose.msra.mxu0 0
    %1002 = vmatprep.subr.bf16.mxu0 0
    %1003 = vmatpush1.bf16.xpose.msra.mxu0 0
    %1004 = vmatprep.mubr.bf16.mxu0 0
    %1005 = vmatmul.mubr.bf16.gmra.mrb[0].mxu0 %v927
    %v1006 = vpop.f32.mrb[0].mxu0
    %v1007 = vadd.f32 0.0, %v1006
    %v1008 = vpop.f32.mrb[0].mxu0
    %v1009 = vpop.f32.mrb[0].mxu0
    %v1010 = vpop.f32.mrb[0].mxu0
    %1011 = vdwg.mxu0
    %v1012 = vadd.f32 %v964, %v1007
    %v1013 = vadd.f32 %v1012, %v870
    %v1014 = vsel %vm879, %v1013, -inf
    %1015 = vmax.xlane.f32.xlu0 %v1014
    %v1016 = vpop.xlane.xlu0 %1015
    %v1017 = vsub.f32 %v1013, %v1016
    %v1018 = vmul.f32 %v1017, 1.442695
    %v1019 = vpow.pop %v1018
    %v1020 = vsel %vm879, %v1019, 0.0
    %1021 = vadd.xlane.f32.xlu0 %v1020
    %v1022 = vpop.xlane.xlu0 %1021
    %v1023 = vrcp.pop %v1022
    %v1024 = vmul.f32 %v1019, %v1023
    %v1025 = vpack.c.bf16 %v1024, %v1024
    %v1026 = vunpack.c.l.bf16 %v1025
    %v1027 = vsub.f32 %v1024, %v1026
    %v1028 = vpack.c.bf16 %v1027, %v1027
    %v1029 = vpack.c.bf16 %v565, %v565
    %v1030 = vunpack.c.l.bf16 %v1029
    %v1031 = vsub.f32 %v565, %v1030
    %v1032 = vpack.c.bf16 %v1031, %v1031
    %v1034 = vsel %vm879, %v1028, 0
    %vm1036 = vcmask 1043456
    %v1038 = vsel %vm1036, %v1029, 0
    %1040 = vmatprep.subr.bf16.mxu0 0
    %1041 = vmatpush1.bf16.msra.mxu0 %v1038
    %1042 = vmatprep.subr.bf16.mxu0 0
    %1043 = vmatpush1.bf16.msra.mxu0 0
    %1044 = vmatprep.subr.bf16.mxu0 0
    %1045 = vmatpush1.bf16.msra.mxu0 0
    %1046 = vmatprep.subr.bf16.mxu0 0
    %1047 = vmatpush1.bf16.msra.mxu0 0
    %1048 = vmatprep.subr.bf16.mxu0 0
    %1049 = vmatpush1.bf16.msra.mxu0 0
    %1050 = vmatprep.subr.bf16.mxu0 0
    %1051 = vmatpush1.bf16.msra.mxu0 0
    %1052 = vmatprep.subr.bf16.mxu0 0
    %1053 = vmatpush1.bf16.msra.mxu0 0
    %1054 = vmatprep.subr.bf16.mxu0 0
    %1055 = vmatpush1.bf16.msra.mxu0 0
    %1056 = vmatprep.subr.bf16.mxu0 0
    %1057 = vmatpush1.bf16.msra.mxu0 0
    %1058 = vmatprep.subr.bf16.mxu0 0
    %1059 = vmatpush1.bf16.msra.mxu0 0
    %1060 = vmatprep.subr.bf16.mxu0 0
    %1061 = vmatpush1.bf16.msra.mxu0 0
    %1062 = vmatprep.subr.bf16.mxu0 0
    %1063 = vmatpush1.bf16.msra.mxu0 0
    %1064 = vmatprep.subr.bf16.mxu0 0
    %1065 = vmatpush1.bf16.msra.mxu0 0
    %1066 = vmatprep.subr.bf16.mxu0 0
    %1067 = vmatpush1.bf16.msra.mxu0 0
    %1068 = vmatprep.subr.bf16.mxu0 0
    %1069 = vmatpush1.bf16.msra.mxu0 0
    %1070 = vmatprep.subr.bf16.mxu0 0
    %1071 = vmatpush1.bf16.msra.mxu0 0
    %1072 = vmatprep.mubr.bf16.mxu0 0
    %1073 = vmatmul.mubr.bf16.gmra.mrb[0].mxu0 %v1034
    %v1074 = vpop.f32.mrb[0].mxu0
    %v1075 = vadd.f32 0.0, %v1074
    %v1076 = vpop.f32.mrb[0].mxu0
    %v1077 = vpop.f32.mrb[0].mxu0
    %v1078 = vpop.f32.mrb[0].mxu0
    %1079 = vdwg.mxu0
    %v1081 = vsel %vm879, %v1025, 0
    %1083 = vmatprep.subr.bf16.mxu0 0
    %1084 = vmatpush1.bf16.msra.mxu0 %v1038
    %1085 = vmatprep.subr.bf16.mxu0 0
    %1086 = vmatpush1.bf16.msra.mxu0 0
    %1087 = vmatprep.subr.bf16.mxu0 0
    %1088 = vmatpush1.bf16.msra.mxu0 0
    %1089 = vmatprep.subr.bf16.mxu0 0
    %1090 = vmatpush1.bf16.msra.mxu0 0
    %1091 = vmatprep.subr.bf16.mxu0 0
    %1092 = vmatpush1.bf16.msra.mxu0 0
    %1093 = vmatprep.subr.bf16.mxu0 0
    %1094 = vmatpush1.bf16.msra.mxu0 0
    %1095 = vmatprep.subr.bf16.mxu0 0
    %1096 = vmatpush1.bf16.msra.mxu0 0
    %1097 = vmatprep.subr.bf16.mxu0 0
    %1098 = vmatpush1.bf16.msra.mxu0 0
    %1099 = vmatprep.subr.bf16.mxu0 0
    %1100 = vmatpush1.bf16.msra.mxu0 0
    %1101 = vmatprep.subr.bf16.mxu0 0
    %1102 = vmatpush1.bf16.msra.mxu0 0
    %1103 = vmatprep.subr.bf16.mxu0 0
    %1104 = vmatpush1.bf16.msra.mxu0 0
    %1105 = vmatprep.subr.bf16.mxu0 0
    %1106 = vmatpush1.bf16.msra.mxu0 0
    %1107 = vmatprep.subr.bf16.mxu0 0
    %1108 = vmatpush1.bf16.msra.mxu0 0
    %1109 = vmatprep.subr.bf16.mxu0 0
    %1110 = vmatpush1.bf16.msra.mxu0 0
    %1111 = vmatprep.subr.bf16.mxu0 0
    %1112 = vmatpush1.bf16.msra.mxu0 0
    %1113 = vmatprep.subr.bf16.mxu0 0
    %1114 = vmatpush1.bf16.msra.mxu0 0
    %1115 = vmatprep.mubr.bf16.mxu0 0
    %1116 = vmatmul.mubr.bf16.gmra.mrb[0].mxu0 %v1081
    %v1117 = vpop.f32.mrb[0].mxu0
    %v1118 = vadd.f32 %v1075, %v1117
    %v1119 = vpop.f32.mrb[0].mxu0
    %v1120 = vpop.f32.mrb[0].mxu0
    %v1121 = vpop.f32.mrb[0].mxu0
    %1122 = vdwg.mxu0
    %v1124 = vsel %vm1036, %v1032, 0
    %1126 = vmatprep.subr.bf16.mxu0 0
    %1127 = vmatpush1.bf16.msra.mxu0 %v1124
    %1128 = vmatprep.subr.bf16.mxu0 0
    %1129 = vmatpush1.bf16.msra.mxu0 0
    %1130 = vmatprep.subr.bf16.mxu0 0
    %1131 = vmatpush1.bf16.msra.mxu0 0
    %1132 = vmatprep.subr.bf16.mxu0 0
    %1133 = vmatpush1.bf16.msra.mxu0 0
    %1134 = vmatprep.subr.bf16.mxu0 0
    %1135 = vmatpush1.bf16.msra.mxu0 0
    %1136 = vmatprep.subr.bf16.mxu0 0
    %1137 = vmatpush1.bf16.msra.mxu0 0
    %1138 = vmatprep.subr.bf16.mxu0 0
    %1139 = vmatpush1.bf16.msra.mxu0 0
    %1140 = vmatprep.subr.bf16.mxu0 0
    %1141 = vmatpush1.bf16.msra.mxu0 0
    %1142 = vmatprep.subr.bf16.mxu0 0
    %1143 = vmatpush1.bf16.msra.mxu0 0
    %1144 = vmatprep.subr.bf16.mxu0 0
    %1145 = vmatpush1.bf16.msra.mxu0 0
    %1146 = vmatprep.subr.bf16.mxu0 0
    %1147 = vmatpush1.bf16.msra.mxu0 0
    %1148 = vmatprep.subr.bf16.mxu0 0
    %1149 = vmatpush1.bf16.msra.mxu0 0
    %1150 = vmatprep.subr.bf16.mxu0 0
    %1151 = vmatpush1.bf16.msra.mxu0 0
    %1152 = vmatprep.subr.bf16.mxu0 0
    %1153 = vmatpush1.bf16.msra.mxu0 0
    %1154 = vmatprep.subr.bf16.mxu0 0
    %1155 = vmatpush1.bf16.msra.mxu0 0
    %1156 = vmatprep.subr.bf16.mxu0 0
    %1157 = vmatpush1.bf16.msra.mxu0 0
    %1158 = vmatprep.mubr.bf16.mxu0 0
    %1159 = vmatmul.mubr.bf16.gmra.mrb[0].mxu0 %v1081
    %v1160 = vpop.f32.mrb[0].mxu0
    %v1161 = vadd.f32 0.0, %v1160
    %v1162 = vpop.f32.mrb[0].mxu0
    %v1163 = vpop.f32.mrb[0].mxu0
    %v1164 = vpop.f32.mrb[0].mxu0
    %1165 = vdwg.mxu0
    %v1166 = vadd.f32 %v1118, %v1161
    %v1167 = vpack.c.bf16 %v1166, %v1166
    %v1168 = vunpack.c.l.bf16 %v1167
    %v1169 = vsub.f32 %v1166, %v1168
    %v1170 = vpack.c.bf16 %v1169, %v1169
    %v1171 = vpack.c.bf16 %v83, %v83
    %v1172 = vunpack.c.l.bf16 %v1171
    %v1173 = vsub.f32 %v83, %v1172
    %v1174 = vpack.c.bf16 %v1173, %v1173
    %v1176 = vsel %vm879, %v1170, 0
    %v1179 = vsel %vm1036, %v1171, 0
    %1181 = vmatprep.subr.bf16.mxu0 0
    %1182 = vmatpush1.bf16.msra.mxu0 %v1179
    %1183 = vmatprep.subr.bf16.mxu0 0
    %1184 = vmatpush1.bf16.msra.mxu0 0
    %1185 = vmatprep.subr.bf16.mxu0 0
    %1186 = vmatpush1.bf16.msra.mxu0 0
    %1187 = vmatprep.subr.bf16.mxu0 0
    %1188 = vmatpush1.bf16.msra.mxu0 0
    %1189 = vmatprep.subr.bf16.mxu0 0
    %1190 = vmatpush1.bf16.msra.mxu0 0
    %1191 = vmatprep.subr.bf16.mxu0 0
    %1192 = vmatpush1.bf16.msra.mxu0 0
    %1193 = vmatprep.subr.bf16.mxu0 0
    %1194 = vmatpush1.bf16.msra.mxu0 0
    %1195 = vmatprep.subr.bf16.mxu0 0
    %1196 = vmatpush1.bf16.msra.mxu0 0
    %1197 = vmatprep.subr.bf16.mxu0 0
    %1198 = vmatpush1.bf16.msra.mxu0 0
    %1199 = vmatprep.subr.bf16.mxu0 0
    %1200 = vmatpush1.bf16.msra.mxu0 0
    %1201 = vmatprep.subr.bf16.mxu0 0
    %1202 = vmatpush1.bf16.msra.mxu0 0
    %1203 = vmatprep.subr.bf16.mxu0 0
    %1204 = vmatpush1.bf16.msra.mxu0 0
    %1205 = vmatprep.subr.bf16.mxu0 0
    %1206 = vmatpush1.bf16.msra.mxu0 0
    %1207 = vmatprep.subr.bf16.mxu0 0
    %1208 = vmatpush1.bf16.msra.mxu0 0
    %1209 = vmatprep.subr.bf16.mxu0 0
    %1210 = vmatpush1.bf16.msra.mxu0 0
    %1211 = vmatprep.subr.bf16.mxu0 0
    %1212 = vmatpush1.bf16.msra.mxu0 0
    %1213 = vmatprep.mubr.bf16.mxu0 0
    %1214 = vmatmul.mubr.bf16.gmra.mrb[0].mxu0 %v1176
    %v1215 = vpop.f32.mrb[0].mxu0
    %v1216 = vadd.f32 0.0, %v1215
    %v1217 = vpop.f32.mrb[0].mxu0
    %v1218 = vpop.f32.mrb[0].mxu0
    %v1219 = vpop.f32.mrb[0].mxu0
    %1220 = vdwg.mxu0
    %v1222 = vsel %vm879, %v1167, 0
    %1224 = vmatprep.subr.bf16.mxu0 0
    %1225 = vmatpush1.bf16.msra.mxu0 %v1179
    %1226 = vmatprep.subr.bf16.mxu0 0
    %1227 = vmatpush1.bf16.msra.mxu0 0
    %1228 = vmatprep.subr.bf16.mxu0 0
    %1229 = vmatpush1.bf16.msra.mxu0 0
    %1230 = vmatprep.subr.bf16.mxu0 0
    %1231 = vmatpush1.bf16.msra.mxu0 0
    %1232 = vmatprep.subr.bf16.mxu0 0
    %1233 = vmatpush1.bf16.msra.mxu0 0
    %1234 = vmatprep.subr.bf16.mxu0 0
    %1235 = vmatpush1.bf16.msra.mxu0 0
    %1236 = vmatprep.subr.bf16.mxu0 0
    %1237 = vmatpush1.bf16.msra.mxu0 0
    %1238 = vmatprep.subr.bf16.mxu0 0
    %1239 = vmatpush1.bf16.msra.mxu0 0
    %1240 = vmatprep.subr.bf16.mxu0 0
    %1241 = vmatpush1.bf16.msra.mxu0 0
    %1242 = vmatprep.subr.bf16.mxu0 0
    %1243 = vmatpush1.bf16.msra.mxu0 0
    %1244 = vmatprep.subr.bf16.mxu0 0
    %1245 = vmatpush1.bf16.msra.mxu0 0
    %1246 = vmatprep.subr.bf16.mxu0 0
    %1247 = vmatpush1.bf16.msra.mxu0 0
    %1248 = vmatprep.subr.bf16.mxu0 0
    %1249 = vmatpush1.bf16.msra.mxu0 0
    %1250 = vmatprep.subr.bf16.mxu0 0
    %1251 = vmatpush1.bf16.msra.mxu0 0
    %1252 = vmatprep.subr.bf16.mxu0 0
    %1253 = vmatpush1.bf16.msra.mxu0 0
    %1254 = vmatprep.subr.bf16.mxu0 0
    %1255 = vmatpush1.bf16.msra.mxu0 0
    %1256 = vmatprep.mubr.bf16.mxu0 0
    %1257 = vmatmul.mubr.bf16.gmra.mrb[0].mxu0 %v1222
    %v1258 = vpop.f32.mrb[0].mxu0
    %v1259 = vadd.f32 %v1216, %v1258
    %v1260 = vpop.f32.mrb[0].mxu0
    %v1261 = vpop.f32.mrb[0].mxu0
    %v1262 = vpop.f32.mrb[0].mxu0
    %1263 = vdwg.mxu0
    %v1265 = vsel %vm1036, %v1174, 0
    %1267 = vmatprep.subr.bf16.mxu0 0
    %1268 = vmatpush1.bf16.msra.mxu0 %v1265
    %1269 = vmatprep.subr.bf16.mxu0 0
    %1270 = vmatpush1.bf16.msra.mxu0 0
    %1271 = vmatprep.subr.bf16.mxu0 0
    %1272 = vmatpush1.bf16.msra.mxu0 0
    %1273 = vmatprep.subr.bf16.mxu0 0
    %1274 = vmatpush1.bf16.msra.mxu0 0
    %1275 = vmatprep.subr.bf16.mxu0 0
    %1276 = vmatpush1.bf16.msra.mxu0 0
    %1277 = vmatprep.subr.bf16.mxu0 0
    %1278 = vmatpush1.bf16.msra.mxu0 0
    %1279 = vmatprep.subr.bf16.mxu0 0
    %1280 = vmatpush1.bf16.msra.mxu0 0
    %1281 = vmatprep.subr.bf16.mxu0 0
    %1282 = vmatpush1.bf16.msra.mxu0 0
    %1283 = vmatprep.subr.bf16.mxu0 0
    %1284 = vmatpush1.bf16.msra.mxu0 0
    %1285 = vmatprep.subr.bf16.mxu0 0
    %1286 = vmatpush1.bf16.msra.mxu0 0
    %1287 = vmatprep.subr.bf16.mxu0 0
    %1288 = vmatpush1.bf16.msra.mxu0 0
    %1289 = vmatprep.subr.bf16.mxu0 0
    %1290 = vmatpush1.bf16.msra.mxu0 0
    %1291 = vmatprep.subr.bf16.mxu0 0
    %1292 = vmatpush1.bf16.msra.mxu0 0
    %1293 = vmatprep.subr.bf16.mxu0 0
    %1294 = vmatpush1.bf16.msra.mxu0 0
    %1295 = vmatprep.subr.bf16.mxu0 0
    %1296 = vmatpush1.bf16.msra.mxu0 0
    %1297 = vmatprep.subr.bf16.mxu0 0
    %1298 = vmatpush1.bf16.msra.mxu0 0
    %1299 = vmatprep.mubr.bf16.mxu0 0
    %1300 = vmatmul.mubr.bf16.gmra.mrb[0].mxu0 %v1222
    %v1301 = vpop.f32.mrb[0].mxu0
    %v1302 = vadd.f32 0.0, %v1301
    %v1303 = vpop.f32.mrb[0].mxu0
    %v1304 = vpop.f32.mrb[0].mxu0
    %v1305 = vpop.f32.mrb[0].mxu0
    %1306 = vdwg.mxu0
    %v1307 = vadd.f32 %v1259, %v1302
    %1309 = vrot.lane.b32.xlu0 %v874, 120
    %v1310 = vpop.permute.xlu0 %1309
    %1312 = vrot.lane.b32.xlu0 %v875, 120
    %v1313 = vpop.permute.xlu0 %1312
    %v1315 = vsel %vm879, %v1310, 0
    %v1318 = vsel %vm879, %v1313, 0
    %1320 = vmatprep.subr.bf16.mxu0 0
    %1321 = vmatpush1.bf16.xpose.msra.mxu0 %v1318
    %1322 = vmatprep.subr.bf16.mxu0 0
    %1323 = vmatpush1.bf16.xpose.msra.mxu0 0
    %1324 = vmatprep.subr.bf16.mxu0 0
    %1325 = vmatpush1.bf16.xpose.msra.mxu0 0
    %1326 = vmatprep.subr.bf16.mxu0 0
    %1327 = vmatpush1.bf16.xpose.msra.mxu0 0
    %1328 = vmatprep.subr.bf16.mxu0 0
    %1329 = vmatpush1.bf16.xpose.msra.mxu0 0
    %1330 = vmatprep.subr.bf16.mxu0 0
    %1331 = vmatpush1.bf16.xpose.msra.mxu0 0
    %1332 = vmatprep.subr.bf16.mxu0 0
    %1333 = vmatpush1.bf16.xpose.msra.mxu0 0
    %1334 = vmatprep.subr.bf16.mxu0 0
    %1335 = vmatpush1.bf16.xpose.msra.mxu0 0
    %1336 = vmatprep.subr.bf16.mxu0 0
    %1337 = vmatpush1.bf16.xpose.msra.mxu0 0
    %1338 = vmatprep.subr.bf16.mxu0 0
    %1339 = vmatpush1.bf16.xpose.msra.mxu0 0
    %1340 = vmatprep.subr.bf16.mxu0 0
    %1341 = vmatpush1.bf16.xpose.msra.mxu0 0
    %1342 = vmatprep.subr.bf16.mxu0 0
    %1343 = vmatpush1.bf16.xpose.msra.mxu0 0
    %1344 = vmatprep.subr.bf16.mxu0 0
    %1345 = vmatpush1.bf16.xpose.msra.mxu0 0
    %1346 = vmatprep.subr.bf16.mxu0 0
    %1347 = vmatpush1.bf16.xpose.msra.mxu0 0
    %1348 = vmatprep.subr.bf16.mxu0 0
    %1349 = vmatpush1.bf16.xpose.msra.mxu0 0
    %1350 = vmatprep.subr.bf16.mxu0 0
    %1351 = vmatpush1.bf16.xpose.msra.mxu0 0
    %1352 = vmatprep.mubr.bf16.mxu0 0
    %1353 = vmatmul.mubr.bf16.gmra.mrb[0].mxu0 %v1315
    %v1354 = vpop.f32.mrb[0].mxu0
    %v1355 = vadd.f32 0.0, %v1354
    %v1356 = vpop.f32.mrb[0].mxu0
    %v1357 = vpop.f32.mrb[0].mxu0
    %v1358 = vpop.f32.mrb[0].mxu0
    %1359 = vdwg.mxu0
    %1361 = vrot.lane.b32.xlu0 %v871, 120
    %v1362 = vpop.permute.xlu0 %1361
    %v1364 = vsel %vm879, %v1362, 0
    %1366 = vmatprep.subr.bf16.mxu0 0
    %1367 = vmatpush1.bf16.xpose.msra.mxu0 %v1318
    %1368 = vmatprep.subr.bf16.mxu0 0
    %1369 = vmatpush1.bf16.xpose.msra.mxu0 0
    %1370 = vmatprep.subr.bf16.mxu0 0
    %1371 = vmatpush1.bf16.xpose.msra.mxu0 0
    %1372 = vmatprep.subr.bf16.mxu0 0
    %1373 = vmatpush1.bf16.xpose.msra.mxu0 0
    %1374 = vmatprep.subr.bf16.mxu0 0
    %1375 = vmatpush1.bf16.xpose.msra.mxu0 0
    %1376 = vmatprep.subr.bf16.mxu0 0
    %1377 = vmatpush1.bf16.xpose.msra.mxu0 0
    %1378 = vmatprep.subr.bf16.mxu0 0
    %1379 = vmatpush1.bf16.xpose.msra.mxu0 0
    %1380 = vmatprep.subr.bf16.mxu0 0
    %1381 = vmatpush1.bf16.xpose.msra.mxu0 0
    %1382 = vmatprep.subr.bf16.mxu0 0
    %1383 = vmatpush1.bf16.xpose.msra.mxu0 0
    %1384 = vmatprep.subr.bf16.mxu0 0
    %1385 = vmatpush1.bf16.xpose.msra.mxu0 0
    %1386 = vmatprep.subr.bf16.mxu0 0
    %1387 = vmatpush1.bf16.xpose.msra.mxu0 0
    %1388 = vmatprep.subr.bf16.mxu0 0
    %1389 = vmatpush1.bf16.xpose.msra.mxu0 0
    %1390 = vmatprep.subr.bf16.mxu0 0
    %1391 = vmatpush1.bf16.xpose.msra.mxu0 0
    %1392 = vmatprep.subr.bf16.mxu0 0
    %1393 = vmatpush1.bf16.xpose.msra.mxu0 0
    %1394 = vmatprep.subr.bf16.mxu0 0
    %1395 = vmatpush1.bf16.xpose.msra.mxu0 0
    %1396 = vmatprep.subr.bf16.mxu0 0
    %1397 = vmatpush1.bf16.xpose.msra.mxu0 0
    %1398 = vmatprep.mubr.bf16.mxu0 0
    %1399 = vmatmul.mubr.bf16.gmra.mrb[0].mxu0 %v1364
    %v1400 = vpop.f32.mrb[0].mxu0
    %v1401 = vadd.f32 %v1355, %v1400
    %v1402 = vpop.f32.mrb[0].mxu0
    %v1403 = vpop.f32.mrb[0].mxu0
    %v1404 = vpop.f32.mrb[0].mxu0
    %1405 = vdwg.mxu0
    %1407 = vrot.lane.b32.xlu0 %v878, 120
    %v1408 = vpop.permute.xlu0 %1407
    %v1410 = vsel %vm879, %v1408, 0
    %1412 = vmatprep.subr.bf16.mxu0 0
    %1413 = vmatpush1.bf16.xpose.msra.mxu0 %v1410
    %1414 = vmatprep.subr.bf16.mxu0 0
    %1415 = vmatpush1.bf16.xpose.msra.mxu0 0
    %1416 = vmatprep.subr.bf16.mxu0 0
    %1417 = vmatpush1.bf16.xpose.msra.mxu0 0
    %1418 = vmatprep.subr.bf16.mxu0 0
    %1419 = vmatpush1.bf16.xpose.msra.mxu0 0
    %1420 = vmatprep.subr.bf16.mxu0 0
    %1421 = vmatpush1.bf16.xpose.msra.mxu0 0
    %1422 = vmatprep.subr.bf16.mxu0 0
    %1423 = vmatpush1.bf16.xpose.msra.mxu0 0
    %1424 = vmatprep.subr.bf16.mxu0 0
    %1425 = vmatpush1.bf16.xpose.msra.mxu0 0
    %1426 = vmatprep.subr.bf16.mxu0 0
    %1427 = vmatpush1.bf16.xpose.msra.mxu0 0
    %1428 = vmatprep.subr.bf16.mxu0 0
    %1429 = vmatpush1.bf16.xpose.msra.mxu0 0
    %1430 = vmatprep.subr.bf16.mxu0 0
    %1431 = vmatpush1.bf16.xpose.msra.mxu0 0
    %1432 = vmatprep.subr.bf16.mxu0 0
    %1433 = vmatpush1.bf16.xpose.msra.mxu0 0
    %1434 = vmatprep.subr.bf16.mxu0 0
    %1435 = vmatpush1.bf16.xpose.msra.mxu0 0
    %1436 = vmatprep.subr.bf16.mxu0 0
    %1437 = vmatpush1.bf16.xpose.msra.mxu0 0
    %1438 = vmatprep.subr.bf16.mxu0 0
    %1439 = vmatpush1.bf16.xpose.msra.mxu0 0
    %1440 = vmatprep.subr.bf16.mxu0 0
    %1441 = vmatpush1.bf16.xpose.msra.mxu0 0
    %1442 = vmatprep.subr.bf16.mxu0 0
    %1443 = vmatpush1.bf16.xpose.msra.mxu0 0
    %1444 = vmatprep.mubr.bf16.mxu0 0
    %1445 = vmatmul.mubr.bf16.gmra.mrb[0].mxu0 %v1364
    %v1446 = vpop.f32.mrb[0].mxu0
    %v1447 = vadd.f32 0.0, %v1446
    %v1448 = vpop.f32.mrb[0].mxu0
    %v1449 = vpop.f32.mrb[0].mxu0
    %v1450 = vpop.f32.mrb[0].mxu0
    %1451 = vdwg.mxu0
    %v1452 = vadd.f32 %v1401, %v1447
    %v1453 = vadd.f32 %v1452, %v870
    %v1454 = vsel %vm879, %v1453, -inf
    %1455 = vmax.xlane.f32.xlu0 %v1454
    %v1456 = vpop.xlane.xlu0 %1455
    %v1457 = vsub.f32 %v1453, %v1456
    %v1458 = vmul.f32 %v1457, 1.442695
    %v1459 = vpow.pop %v1458
    %v1460 = vsel %vm879, %v1459, 0.0
    %1461 = vadd.xlane.f32.xlu0 %v1460
    %v1462 = vpop.xlane.xlu0 %1461
    %v1463 = vrcp.pop %v1462
    %v1464 = vmul.f32 %v1459, %v1463
    %v1465 = vpack.c.bf16 %v1464, %v1464
    %v1466 = vunpack.c.l.bf16 %v1465
    %v1467 = vsub.f32 %v1464, %v1466
    %v1468 = vpack.c.bf16 %v1467, %v1467
    %1470 = vrot.lane.b32.xlu0 %v1029, 120
    %v1471 = vpop.permute.xlu0 %1470
    %v1473 = vsel %vm879, %v1468, 0
    %v1476 = vsel %vm1036, %v1471, 0
    %1478 = vmatprep.subr.bf16.mxu0 0
    %1479 = vmatpush1.bf16.msra.mxu0 %v1476
    %1480 = vmatprep.subr.bf16.mxu0 0
    %1481 = vmatpush1.bf16.msra.mxu0 0
    %1482 = vmatprep.subr.bf16.mxu0 0
    %1483 = vmatpush1.bf16.msra.mxu0 0
    %1484 = vmatprep.subr.bf16.mxu0 0
    %1485 = vmatpush1.bf16.msra.mxu0 0
    %1486 = vmatprep.subr.bf16.mxu0 0
    %1487 = vmatpush1.bf16.msra.mxu0 0
    %1488 = vmatprep.subr.bf16.mxu0 0
    %1489 = vmatpush1.bf16.msra.mxu0 0
    %1490 = vmatprep.subr.bf16.mxu0 0
    %1491 = vmatpush1.bf16.msra.mxu0 0
    %1492 = vmatprep.subr.bf16.mxu0 0
    %1493 = vmatpush1.bf16.msra.mxu0 0
    %1494 = vmatprep.subr.bf16.mxu0 0
    %1495 = vmatpush1.bf16.msra.mxu0 0
    %1496 = vmatprep.subr.bf16.mxu0 0
    %1497 = vmatpush1.bf16.msra.mxu0 0
    %1498 = vmatprep.subr.bf16.mxu0 0
    %1499 = vmatpush1.bf16.msra.mxu0 0
    %1500 = vmatprep.subr.bf16.mxu0 0
    %1501 = vmatpush1.bf16.msra.mxu0 0
    %1502 = vmatprep.subr.bf16.mxu0 0
    %1503 = vmatpush1.bf16.msra.mxu0 0
    %1504 = vmatprep.subr.bf16.mxu0 0
    %1505 = vmatpush1.bf16.msra.mxu0 0
    %1506 = vmatprep.subr.bf16.mxu0 0
    %1507 = vmatpush1.bf16.msra.mxu0 0
    %1508 = vmatprep.subr.bf16.mxu0 0
    %1509 = vmatpush1.bf16.msra.mxu0 0
    %1510 = vmatprep.mubr.bf16.mxu0 0
    %1511 = vmatmul.mubr.bf16.gmra.mrb[0].mxu0 %v1473
    %v1512 = vpop.f32.mrb[0].mxu0
    %v1513 = vadd.f32 0.0, %v1512
    %v1514 = vpop.f32.mrb[0].mxu0
    %v1515 = vpop.f32.mrb[0].mxu0
    %v1516 = vpop.f32.mrb[0].mxu0
    %1517 = vdwg.mxu0
    %v1519 = vsel %vm879, %v1465, 0
    %1521 = vmatprep.subr.bf16.mxu0 0
    %1522 = vmatpush1.bf16.msra.mxu0 %v1476
    %1523 = vmatprep.subr.bf16.mxu0 0
    %1524 = vmatpush1.bf16.msra.mxu0 0
    %1525 = vmatprep.subr.bf16.mxu0 0
    %1526 = vmatpush1.bf16.msra.mxu0 0
    %1527 = vmatprep.subr.bf16.mxu0 0
    %1528 = vmatpush1.bf16.msra.mxu0 0
    %1529 = vmatprep.subr.bf16.mxu0 0
    %1530 = vmatpush1.bf16.msra.mxu0 0
    %1531 = vmatprep.subr.bf16.mxu0 0
    %1532 = vmatpush1.bf16.msra.mxu0 0
    %1533 = vmatprep.subr.bf16.mxu0 0
    %1534 = vmatpush1.bf16.msra.mxu0 0
    %1535 = vmatprep.subr.bf16.mxu0 0
    %1536 = vmatpush1.bf16.msra.mxu0 0
    %1537 = vmatprep.subr.bf16.mxu0 0
    %1538 = vmatpush1.bf16.msra.mxu0 0
    %1539 = vmatprep.subr.bf16.mxu0 0
    %1540 = vmatpush1.bf16.msra.mxu0 0
    %1541 = vmatprep.subr.bf16.mxu0 0
    %1542 = vmatpush1.bf16.msra.mxu0 0
    %1543 = vmatprep.subr.bf16.mxu0 0
    %1544 = vmatpush1.bf16.msra.mxu0 0
    %1545 = vmatprep.subr.bf16.mxu0 0
    %1546 = vmatpush1.bf16.msra.mxu0 0
    %1547 = vmatprep.subr.bf16.mxu0 0
    %1548 = vmatpush1.bf16.msra.mxu0 0
    %1549 = vmatprep.subr.bf16.mxu0 0
    %1550 = vmatpush1.bf16.msra.mxu0 0
    %1551 = vmatprep.subr.bf16.mxu0 0
    %1552 = vmatpush1.bf16.msra.mxu0 0
    %1553 = vmatprep.mubr.bf16.mxu0 0
    %1554 = vmatmul.mubr.bf16.gmra.mrb[0].mxu0 %v1519
    %v1555 = vpop.f32.mrb[0].mxu0
    %v1556 = vadd.f32 %v1513, %v1555
    %v1557 = vpop.f32.mrb[0].mxu0
    %v1558 = vpop.f32.mrb[0].mxu0
    %v1559 = vpop.f32.mrb[0].mxu0
    %1560 = vdwg.mxu0
    %1562 = vrot.lane.b32.xlu0 %v1032, 120
    %v1563 = vpop.permute.xlu0 %1562
    %v1565 = vsel %vm1036, %v1563, 0
    %1567 = vmatprep.subr.bf16.mxu0 0
    %1568 = vmatpush1.bf16.msra.mxu0 %v1565
    %1569 = vmatprep.subr.bf16.mxu0 0
    %1570 = vmatpush1.bf16.msra.mxu0 0
    %1571 = vmatprep.subr.bf16.mxu0 0
    %1572 = vmatpush1.bf16.msra.mxu0 0
    %1573 = vmatprep.subr.bf16.mxu0 0
    %1574 = vmatpush1.bf16.msra.mxu0 0
    %1575 = vmatprep.subr.bf16.mxu0 0
    %1576 = vmatpush1.bf16.msra.mxu0 0
    %1577 = vmatprep.subr.bf16.mxu0 0
    %1578 = vmatpush1.bf16.msra.mxu0 0
    %1579 = vmatprep.subr.bf16.mxu0 0
    %1580 = vmatpush1.bf16.msra.mxu0 0
    %1581 = vmatprep.subr.bf16.mxu0 0
    %1582 = vmatpush1.bf16.msra.mxu0 0
    %1583 = vmatprep.subr.bf16.mxu0 0
    %1584 = vmatpush1.bf16.msra.mxu0 0
    %1585 = vmatprep.subr.bf16.mxu0 0
    %1586 = vmatpush1.bf16.msra.mxu0 0
    %1587 = vmatprep.subr.bf16.mxu0 0
    %1588 = vmatpush1.bf16.msra.mxu0 0
    %1589 = vmatprep.subr.bf16.mxu0 0
    %1590 = vmatpush1.bf16.msra.mxu0 0
    %1591 = vmatprep.subr.bf16.mxu0 0
    %1592 = vmatpush1.bf16.msra.mxu0 0
    %1593 = vmatprep.subr.bf16.mxu0 0
    %1594 = vmatpush1.bf16.msra.mxu0 0
    %1595 = vmatprep.subr.bf16.mxu0 0
    %1596 = vmatpush1.bf16.msra.mxu0 0
    %1597 = vmatprep.subr.bf16.mxu0 0
    %1598 = vmatpush1.bf16.msra.mxu0 0
    %1599 = vmatprep.mubr.bf16.mxu0 0
    %1600 = vmatmul.mubr.bf16.gmra.mrb[0].mxu0 %v1519
    %v1601 = vpop.f32.mrb[0].mxu0
    %v1602 = vadd.f32 0.0, %v1601
    %v1603 = vpop.f32.mrb[0].mxu0
    %v1604 = vpop.f32.mrb[0].mxu0
    %v1605 = vpop.f32.mrb[0].mxu0
    %1606 = vdwg.mxu0
    %v1607 = vadd.f32 %v1556, %v1602
    %v1608 = vpack.c.bf16 %v1607, %v1607
    %v1609 = vunpack.c.l.bf16 %v1608
    %v1610 = vsub.f32 %v1607, %v1609
    %v1611 = vpack.c.bf16 %v1610, %v1610
    %v1612 = vpack.c.bf16 %v84, %v84
    %v1613 = vunpack.c.l.bf16 %v1612
    %v1614 = vsub.f32 %v84, %v1613
    %v1615 = vpack.c.bf16 %v1614, %v1614
    %v1617 = vsel %vm879, %v1611, 0
    %v1620 = vsel %vm1036, %v1612, 0
    %1622 = vmatprep.subr.bf16.mxu0 0
    %1623 = vmatpush1.bf16.msra.mxu0 %v1620
    %1624 = vmatprep.subr.bf16.mxu0 0
    %1625 = vmatpush1.bf16.msra.mxu0 0
    %1626 = vmatprep.subr.bf16.mxu0 0
    %1627 = vmatpush1.bf16.msra.mxu0 0
    %1628 = vmatprep.subr.bf16.mxu0 0
    %1629 = vmatpush1.bf16.msra.mxu0 0
    %1630 = vmatprep.subr.bf16.mxu0 0
    %1631 = vmatpush1.bf16.msra.mxu0 0
    %1632 = vmatprep.subr.bf16.mxu0 0
    %1633 = vmatpush1.bf16.msra.mxu0 0
    %1634 = vmatprep.subr.bf16.mxu0 0
    %1635 = vmatpush1.bf16.msra.mxu0 0
    %1636 = vmatprep.subr.bf16.mxu0 0
    %1637 = vmatpush1.bf16.msra.mxu0 0
    %1638 = vmatprep.subr.bf16.mxu0 0
    %1639 = vmatpush1.bf16.msra.mxu0 0
    %1640 = vmatprep.subr.bf16.mxu0 0
    %1641 = vmatpush1.bf16.msra.mxu0 0
    %1642 = vmatprep.subr.bf16.mxu0 0
    %1643 = vmatpush1.bf16.msra.mxu0 0
    %1644 = vmatprep.subr.bf16.mxu0 0
    %1645 = vmatpush1.bf16.msra.mxu0 0
    %1646 = vmatprep.subr.bf16.mxu0 0
    %1647 = vmatpush1.bf16.msra.mxu0 0
    %1648 = vmatprep.subr.bf16.mxu0 0
    %1649 = vmatpush1.bf16.msra.mxu0 0
    %1650 = vmatprep.subr.bf16.mxu0 0
    %1651 = vmatpush1.bf16.msra.mxu0 0
    %1652 = vmatprep.subr.bf16.mxu0 0
    %1653 = vmatpush1.bf16.msra.mxu0 0
    %1654 = vmatprep.mubr.bf16.mxu0 0
    %1655 = vmatmul.mubr.bf16.gmra.mrb[0].mxu0 %v1617
    %v1656 = vpop.f32.mrb[0].mxu0
    %v1657 = vadd.f32 0.0, %v1656
    %v1658 = vpop.f32.mrb[0].mxu0
    %v1659 = vpop.f32.mrb[0].mxu0
    %v1660 = vpop.f32.mrb[0].mxu0
    %1661 = vdwg.mxu0
    %v1663 = vsel %vm879, %v1608, 0
    %1665 = vmatprep.subr.bf16.mxu0 0
    %1666 = vmatpush1.bf16.msra.mxu0 %v1620
    %1667 = vmatprep.subr.bf16.mxu0 0
    %1668 = vmatpush1.bf16.msra.mxu0 0
    %1669 = vmatprep.subr.bf16.mxu0 0
    %1670 = vmatpush1.bf16.msra.mxu0 0
    %1671 = vmatprep.subr.bf16.mxu0 0
    %1672 = vmatpush1.bf16.msra.mxu0 0
    %1673 = vmatprep.subr.bf16.mxu0 0
    %1674 = vmatpush1.bf16.msra.mxu0 0
    %1675 = vmatprep.subr.bf16.mxu0 0
    %1676 = vmatpush1.bf16.msra.mxu0 0
    %1677 = vmatprep.subr.bf16.mxu0 0
    %1678 = vmatpush1.bf16.msra.mxu0 0
    %1679 = vmatprep.subr.bf16.mxu0 0
    %1680 = vmatpush1.bf16.msra.mxu0 0
    %1681 = vmatprep.subr.bf16.mxu0 0
    %1682 = vmatpush1.bf16.msra.mxu0 0
    %1683 = vmatprep.subr.bf16.mxu0 0
    %1684 = vmatpush1.bf16.msra.mxu0 0
    %1685 = vmatprep.subr.bf16.mxu0 0
    %1686 = vmatpush1.bf16.msra.mxu0 0
    %1687 = vmatprep.subr.bf16.mxu0 0
    %1688 = vmatpush1.bf16.msra.mxu0 0
    %1689 = vmatprep.subr.bf16.mxu0 0
    %1690 = vmatpush1.bf16.msra.mxu0 0
    %1691 = vmatprep.subr.bf16.mxu0 0
    %1692 = vmatpush1.bf16.msra.mxu0 0
    %1693 = vmatprep.subr.bf16.mxu0 0
    %1694 = vmatpush1.bf16.msra.mxu0 0
    %1695 = vmatprep.subr.bf16.mxu0 0
    %1696 = vmatpush1.bf16.msra.mxu0 0
    %1697 = vmatprep.mubr.bf16.mxu0 0
    %1698 = vmatmul.mubr.bf16.gmra.mrb[0].mxu0 %v1663
    %v1699 = vpop.f32.mrb[0].mxu0
    %v1700 = vadd.f32 %v1657, %v1699
    %v1701 = vpop.f32.mrb[0].mxu0
    %v1702 = vpop.f32.mrb[0].mxu0
    %v1703 = vpop.f32.mrb[0].mxu0
    %1704 = vdwg.mxu0
    %v1706 = vsel %vm1036, %v1615, 0
    %1708 = vmatprep.subr.bf16.mxu0 0
    %1709 = vmatpush1.bf16.msra.mxu0 %v1706
    %1710 = vmatprep.subr.bf16.mxu0 0
    %1711 = vmatpush1.bf16.msra.mxu0 0
    %1712 = vmatprep.subr.bf16.mxu0 0
    %1713 = vmatpush1.bf16.msra.mxu0 0
    %1714 = vmatprep.subr.bf16.mxu0 0
    %1715 = vmatpush1.bf16.msra.mxu0 0
    %1716 = vmatprep.subr.bf16.mxu0 0
    %1717 = vmatpush1.bf16.msra.mxu0 0
    %1718 = vmatprep.subr.bf16.mxu0 0
    %1719 = vmatpush1.bf16.msra.mxu0 0
    %1720 = vmatprep.subr.bf16.mxu0 0
    %1721 = vmatpush1.bf16.msra.mxu0 0
    %1722 = vmatprep.subr.bf16.mxu0 0
    %1723 = vmatpush1.bf16.msra.mxu0 0
    %1724 = vmatprep.subr.bf16.mxu0 0
    %1725 = vmatpush1.bf16.msra.mxu0 0
    %1726 = vmatprep.subr.bf16.mxu0 0
    %1727 = vmatpush1.bf16.msra.mxu0 0
    %1728 = vmatprep.subr.bf16.mxu0 0
    %1729 = vmatpush1.bf16.msra.mxu0 0
    %1730 = vmatprep.subr.bf16.mxu0 0
    %1731 = vmatpush1.bf16.msra.mxu0 0
    %1732 = vmatprep.subr.bf16.mxu0 0
    %1733 = vmatpush1.bf16.msra.mxu0 0
    %1734 = vmatprep.subr.bf16.mxu0 0
    %1735 = vmatpush1.bf16.msra.mxu0 0
    %1736 = vmatprep.subr.bf16.mxu0 0
    %1737 = vmatpush1.bf16.msra.mxu0 0
    %1738 = vmatprep.subr.bf16.mxu0 0
    %1739 = vmatpush1.bf16.msra.mxu0 0
    %1740 = vmatprep.mubr.bf16.mxu0 0
    %1741 = vmatmul.mubr.bf16.gmra.mrb[0].mxu0 %v1663
    %v1742 = vpop.f32.mrb[0].mxu0
    %v1743 = vadd.f32 0.0, %v1742
    %v1744 = vpop.f32.mrb[0].mxu0
    %v1745 = vpop.f32.mrb[0].mxu0
    %v1746 = vpop.f32.mrb[0].mxu0
    %1747 = vdwg.mxu0
    %v1748 = vadd.f32 %v1700, %v1743
    %v1749 = vadd.f32 %v1307, %v1748
    %1750 = vrot.lane.b32.xlu0 %v874, 112
    %v1751 = vpop.permute.xlu0 %1750
    %1752 = vrot.lane.b32.xlu0 %v875, 112
    %v1753 = vpop.permute.xlu0 %1752
    %v1755 = vsel %vm879, %v1751, 0
    %v1758 = vsel %vm879, %v1753, 0
    %1760 = vmatprep.subr.bf16.mxu0 0
    %1761 = vmatpush1.bf16.xpose.msra.mxu0 %v1758
    %1762 = vmatprep.subr.bf16.mxu0 0
    %1763 = vmatpush1.bf16.xpose.msra.mxu0 0
    %1764 = vmatprep.subr.bf16.mxu0 0
    %1765 = vmatpush1.bf16.xpose.msra.mxu0 0
    %1766 = vmatprep.subr.bf16.mxu0 0
    %1767 = vmatpush1.bf16.xpose.msra.mxu0 0
    %1768 = vmatprep.subr.bf16.mxu0 0
    %1769 = vmatpush1.bf16.xpose.msra.mxu0 0
    %1770 = vmatprep.subr.bf16.mxu0 0
    %1771 = vmatpush1.bf16.xpose.msra.mxu0 0
    %1772 = vmatprep.subr.bf16.mxu0 0
    %1773 = vmatpush1.bf16.xpose.msra.mxu0 0
    %1774 = vmatprep.subr.bf16.mxu0 0
    %1775 = vmatpush1.bf16.xpose.msra.mxu0 0
    %1776 = vmatprep.subr.bf16.mxu0 0
    %1777 = vmatpush1.bf16.xpose.msra.mxu0 0
    %1778 = vmatprep.subr.bf16.mxu0 0
    %1779 = vmatpush1.bf16.xpose.msra.mxu0 0
    %1780 = vmatprep.subr.bf16.mxu0 0
    %1781 = vmatpush1.bf16.xpose.msra.mxu0 0
    %1782 = vmatprep.subr.bf16.mxu0 0
    %1783 = vmatpush1.bf16.xpose.msra.mxu0 0
    %1784 = vmatprep.subr.bf16.mxu0 0
    %1785 = vmatpush1.bf16.xpose.msra.mxu0 0
    %1786 = vmatprep.subr.bf16.mxu0 0
    %1787 = vmatpush1.bf16.xpose.msra.mxu0 0
    %1788 = vmatprep.subr.bf16.mxu0 0
    %1789 = vmatpush1.bf16.xpose.msra.mxu0 0
    %1790 = vmatprep.subr.bf16.mxu0 0
    %1791 = vmatpush1.bf16.xpose.msra.mxu0 0
    %1792 = vmatprep.mubr.bf16.mxu0 0
    %1793 = vmatmul.mubr.bf16.gmra.mrb[0].mxu0 %v1755
    %v1794 = vpop.f32.mrb[0].mxu0
    %v1795 = vadd.f32 0.0, %v1794
    %v1796 = vpop.f32.mrb[0].mxu0
    %v1797 = vpop.f32.mrb[0].mxu0
    %v1798 = vpop.f32.mrb[0].mxu0
    %1799 = vdwg.mxu0
    %1800 = vrot.lane.b32.xlu0 %v871, 112
    %v1801 = vpop.permute.xlu0 %1800
    %v1803 = vsel %vm879, %v1801, 0
    %1805 = vmatprep.subr.bf16.mxu0 0
    %1806 = vmatpush1.bf16.xpose.msra.mxu0 %v1758
    %1807 = vmatprep.subr.bf16.mxu0 0
    %1808 = vmatpush1.bf16.xpose.msra.mxu0 0
    %1809 = vmatprep.subr.bf16.mxu0 0
    %1810 = vmatpush1.bf16.xpose.msra.mxu0 0
    %1811 = vmatprep.subr.bf16.mxu0 0
    %1812 = vmatpush1.bf16.xpose.msra.mxu0 0
    %1813 = vmatprep.subr.bf16.mxu0 0
    %1814 = vmatpush1.bf16.xpose.msra.mxu0 0
    %1815 = vmatprep.subr.bf16.mxu0 0
    %1816 = vmatpush1.bf16.xpose.msra.mxu0 0
    %1817 = vmatprep.subr.bf16.mxu0 0
    %1818 = vmatpush1.bf16.xpose.msra.mxu0 0
    %1819 = vmatprep.subr.bf16.mxu0 0
    %1820 = vmatpush1.bf16.xpose.msra.mxu0 0
    %1821 = vmatprep.subr.bf16.mxu0 0
    %1822 = vmatpush1.bf16.xpose.msra.mxu0 0
    %1823 = vmatprep.subr.bf16.mxu0 0
    %1824 = vmatpush1.bf16.xpose.msra.mxu0 0
    %1825 = vmatprep.subr.bf16.mxu0 0
    %1826 = vmatpush1.bf16.xpose.msra.mxu0 0
    %1827 = vmatprep.subr.bf16.mxu0 0
    %1828 = vmatpush1.bf16.xpose.msra.mxu0 0
    %1829 = vmatprep.subr.bf16.mxu0 0
    %1830 = vmatpush1.bf16.xpose.msra.mxu0 0
    %1831 = vmatprep.subr.bf16.mxu0 0
    %1832 = vmatpush1.bf16.xpose.msra.mxu0 0
    %1833 = vmatprep.subr.bf16.mxu0 0
    %1834 = vmatpush1.bf16.xpose.msra.mxu0 0
    %1835 = vmatprep.subr.bf16.mxu0 0
    %1836 = vmatpush1.bf16.xpose.msra.mxu0 0
    %1837 = vmatprep.mubr.bf16.mxu0 0
    %1838 = vmatmul.mubr.bf16.gmra.mrb[0].mxu0 %v1803
    %v1839 = vpop.f32.mrb[0].mxu0
    %v1840 = vadd.f32 %v1795, %v1839
    %v1841 = vpop.f32.mrb[0].mxu0
    %v1842 = vpop.f32.mrb[0].mxu0
    %v1843 = vpop.f32.mrb[0].mxu0
    %1844 = vdwg.mxu0
    %1845 = vrot.lane.b32.xlu0 %v878, 112
    %v1846 = vpop.permute.xlu0 %1845
    %v1848 = vsel %vm879, %v1846, 0
    %1850 = vmatprep.subr.bf16.mxu0 0
    %1851 = vmatpush1.bf16.xpose.msra.mxu0 %v1848
    %1852 = vmatprep.subr.bf16.mxu0 0
    %1853 = vmatpush1.bf16.xpose.msra.mxu0 0
    %1854 = vmatprep.subr.bf16.mxu0 0
    %1855 = vmatpush1.bf16.xpose.msra.mxu0 0
    %1856 = vmatprep.subr.bf16.mxu0 0
    %1857 = vmatpush1.bf16.xpose.msra.mxu0 0
    %1858 = vmatprep.subr.bf16.mxu0 0
    %1859 = vmatpush1.bf16.xpose.msra.mxu0 0
    %1860 = vmatprep.subr.bf16.mxu0 0
    %1861 = vmatpush1.bf16.xpose.msra.mxu0 0
    %1862 = vmatprep.subr.bf16.mxu0 0
    %1863 = vmatpush1.bf16.xpose.msra.mxu0 0
    %1864 = vmatprep.subr.bf16.mxu0 0
    %1865 = vmatpush1.bf16.xpose.msra.mxu0 0
    %1866 = vmatprep.subr.bf16.mxu0 0
    %1867 = vmatpush1.bf16.xpose.msra.mxu0 0
    %1868 = vmatprep.subr.bf16.mxu0 0
    %1869 = vmatpush1.bf16.xpose.msra.mxu0 0
    %1870 = vmatprep.subr.bf16.mxu0 0
    %1871 = vmatpush1.bf16.xpose.msra.mxu0 0
    %1872 = vmatprep.subr.bf16.mxu0 0
    %1873 = vmatpush1.bf16.xpose.msra.mxu0 0
    %1874 = vmatprep.subr.bf16.mxu0 0
    %1875 = vmatpush1.bf16.xpose.msra.mxu0 0
    %1876 = vmatprep.subr.bf16.mxu0 0
    %1877 = vmatpush1.bf16.xpose.msra.mxu0 0
    %1878 = vmatprep.subr.bf16.mxu0 0
    %1879 = vmatpush1.bf16.xpose.msra.mxu0 0
    %1880 = vmatprep.subr.bf16.mxu0 0
    %1881 = vmatpush1.bf16.xpose.msra.mxu0 0
    %1882 = vmatprep.mubr.bf16.mxu0 0
    %1883 = vmatmul.mubr.bf16.gmra.mrb[0].mxu0 %v1803
    %v1884 = vpop.f32.mrb[0].mxu0
    %v1885 = vadd.f32 0.0, %v1884
    %v1886 = vpop.f32.mrb[0].mxu0
    %v1887 = vpop.f32.mrb[0].mxu0
    %v1888 = vpop.f32.mrb[0].mxu0
    %1889 = vdwg.mxu0
    %v1890 = vadd.f32 %v1840, %v1885
    %v1891 = vadd.f32 %v1890, %v870
    %v1892 = vsel %vm879, %v1891, -inf
    %1893 = vmax.xlane.f32.xlu0 %v1892
    %v1894 = vpop.xlane.xlu0 %1893
    %v1895 = vsub.f32 %v1891, %v1894
    %v1896 = vmul.f32 %v1895, 1.442695
    %v1897 = vpow.pop %v1896
    %v1898 = vsel %vm879, %v1897, 0.0
    %1899 = vadd.xlane.f32.xlu0 %v1898
    %v1900 = vpop.xlane.xlu0 %1899
    %v1901 = vrcp.pop %v1900
    %v1902 = vmul.f32 %v1897, %v1901
    %v1903 = vpack.c.bf16 %v1902, %v1902
    %v1904 = vunpack.c.l.bf16 %v1903
    %v1905 = vsub.f32 %v1902, %v1904
    %v1906 = vpack.c.bf16 %v1905, %v1905
    %1907 = vrot.lane.b32.xlu0 %v1029, 112
    %v1908 = vpop.permute.xlu0 %1907
    %v1910 = vsel %vm879, %v1906, 0
    %v1913 = vsel %vm1036, %v1908, 0
    %1915 = vmatprep.subr.bf16.mxu0 0
    %1916 = vmatpush1.bf16.msra.mxu0 %v1913
    %1917 = vmatprep.subr.bf16.mxu0 0
    %1918 = vmatpush1.bf16.msra.mxu0 0
    %1919 = vmatprep.subr.bf16.mxu0 0
    %1920 = vmatpush1.bf16.msra.mxu0 0
    %1921 = vmatprep.subr.bf16.mxu0 0
    %1922 = vmatpush1.bf16.msra.mxu0 0
    %1923 = vmatprep.subr.bf16.mxu0 0
    %1924 = vmatpush1.bf16.msra.mxu0 0
    %1925 = vmatprep.subr.bf16.mxu0 0
    %1926 = vmatpush1.bf16.msra.mxu0 0
    %1927 = vmatprep.subr.bf16.mxu0 0
    %1928 = vmatpush1.bf16.msra.mxu0 0
    %1929 = vmatprep.subr.bf16.mxu0 0
    %1930 = vmatpush1.bf16.msra.mxu0 0
    %1931 = vmatprep.subr.bf16.mxu0 0
    %1932 = vmatpush1.bf16.msra.mxu0 0
    %1933 = vmatprep.subr.bf16.mxu0 0
    %1934 = vmatpush1.bf16.msra.mxu0 0
    %1935 = vmatprep.subr.bf16.mxu0 0
    %1936 = vmatpush1.bf16.msra.mxu0 0
    %1937 = vmatprep.subr.bf16.mxu0 0
    %1938 = vmatpush1.bf16.msra.mxu0 0
    %1939 = vmatprep.subr.bf16.mxu0 0
    %1940 = vmatpush1.bf16.msra.mxu0 0
    %1941 = vmatprep.subr.bf16.mxu0 0
    %1942 = vmatpush1.bf16.msra.mxu0 0
    %1943 = vmatprep.subr.bf16.mxu0 0
    %1944 = vmatpush1.bf16.msra.mxu0 0
    %1945 = vmatprep.subr.bf16.mxu0 0
    %1946 = vmatpush1.bf16.msra.mxu0 0
    %1947 = vmatprep.mubr.bf16.mxu0 0
    %1948 = vmatmul.mubr.bf16.gmra.mrb[0].mxu0 %v1910
    %v1949 = vpop.f32.mrb[0].mxu0
    %v1950 = vadd.f32 0.0, %v1949
    %v1951 = vpop.f32.mrb[0].mxu0
    %v1952 = vpop.f32.mrb[0].mxu0
    %v1953 = vpop.f32.mrb[0].mxu0
    %1954 = vdwg.mxu0
    %v1956 = vsel %vm879, %v1903, 0
    %1958 = vmatprep.subr.bf16.mxu0 0
    %1959 = vmatpush1.bf16.msra.mxu0 %v1913
    %1960 = vmatprep.subr.bf16.mxu0 0
    %1961 = vmatpush1.bf16.msra.mxu0 0
    %1962 = vmatprep.subr.bf16.mxu0 0
    %1963 = vmatpush1.bf16.msra.mxu0 0
    %1964 = vmatprep.subr.bf16.mxu0 0
    %1965 = vmatpush1.bf16.msra.mxu0 0
    %1966 = vmatprep.subr.bf16.mxu0 0
    %1967 = vmatpush1.bf16.msra.mxu0 0
    %1968 = vmatprep.subr.bf16.mxu0 0
    %1969 = vmatpush1.bf16.msra.mxu0 0
    %1970 = vmatprep.subr.bf16.mxu0 0
    %1971 = vmatpush1.bf16.msra.mxu0 0
    %1972 = vmatprep.subr.bf16.mxu0 0
    %1973 = vmatpush1.bf16.msra.mxu0 0
    %1974 = vmatprep.subr.bf16.mxu0 0
    %1975 = vmatpush1.bf16.msra.mxu0 0
    %1976 = vmatprep.subr.bf16.mxu0 0
    %1977 = vmatpush1.bf16.msra.mxu0 0
    %1978 = vmatprep.subr.bf16.mxu0 0
    %1979 = vmatpush1.bf16.msra.mxu0 0
    %1980 = vmatprep.subr.bf16.mxu0 0
    %1981 = vmatpush1.bf16.msra.mxu0 0
    %1982 = vmatprep.subr.bf16.mxu0 0
    %1983 = vmatpush1.bf16.msra.mxu0 0
    %1984 = vmatprep.subr.bf16.mxu0 0
    %1985 = vmatpush1.bf16.msra.mxu0 0
    %1986 = vmatprep.subr.bf16.mxu0 0
    %1987 = vmatpush1.bf16.msra.mxu0 0
    %1988 = vmatprep.subr.bf16.mxu0 0
    %1989 = vmatpush1.bf16.msra.mxu0 0
    %1990 = vmatprep.mubr.bf16.mxu0 0
    %1991 = vmatmul.mubr.bf16.gmra.mrb[0].mxu0 %v1956
    %v1992 = vpop.f32.mrb[0].mxu0
    %v1993 = vadd.f32 %v1950, %v1992
    %v1994 = vpop.f32.mrb[0].mxu0
    %v1995 = vpop.f32.mrb[0].mxu0
    %v1996 = vpop.f32.mrb[0].mxu0
    %1997 = vdwg.mxu0
    %1998 = vrot.lane.b32.xlu0 %v1032, 112
    %v1999 = vpop.permute.xlu0 %1998
    %v2001 = vsel %vm1036, %v1999, 0
    %2003 = vmatprep.subr.bf16.mxu0 0
    %2004 = vmatpush1.bf16.msra.mxu0 %v2001
    %2005 = vmatprep.subr.bf16.mxu0 0
    %2006 = vmatpush1.bf16.msra.mxu0 0
    %2007 = vmatprep.subr.bf16.mxu0 0
    %2008 = vmatpush1.bf16.msra.mxu0 0
    %2009 = vmatprep.subr.bf16.mxu0 0
    %2010 = vmatpush1.bf16.msra.mxu0 0
    %2011 = vmatprep.subr.bf16.mxu0 0
    %2012 = vmatpush1.bf16.msra.mxu0 0
    %2013 = vmatprep.subr.bf16.mxu0 0
    %2014 = vmatpush1.bf16.msra.mxu0 0
    %2015 = vmatprep.subr.bf16.mxu0 0
    %2016 = vmatpush1.bf16.msra.mxu0 0
    %2017 = vmatprep.subr.bf16.mxu0 0
    %2018 = vmatpush1.bf16.msra.mxu0 0
    %2019 = vmatprep.subr.bf16.mxu0 0
    %2020 = vmatpush1.bf16.msra.mxu0 0
    %2021 = vmatprep.subr.bf16.mxu0 0
    %2022 = vmatpush1.bf16.msra.mxu0 0
    %2023 = vmatprep.subr.bf16.mxu0 0
    %2024 = vmatpush1.bf16.msra.mxu0 0
    %2025 = vmatprep.subr.bf16.mxu0 0
    %2026 = vmatpush1.bf16.msra.mxu0 0
    %2027 = vmatprep.subr.bf16.mxu0 0
    %2028 = vmatpush1.bf16.msra.mxu0 0
    %2029 = vmatprep.subr.bf16.mxu0 0
    %2030 = vmatpush1.bf16.msra.mxu0 0
    %2031 = vmatprep.subr.bf16.mxu0 0
    %2032 = vmatpush1.bf16.msra.mxu0 0
    %2033 = vmatprep.subr.bf16.mxu0 0
    %2034 = vmatpush1.bf16.msra.mxu0 0
    %2035 = vmatprep.mubr.bf16.mxu0 0
    %2036 = vmatmul.mubr.bf16.gmra.mrb[0].mxu0 %v1956
    %v2037 = vpop.f32.mrb[0].mxu0
    %v2038 = vadd.f32 0.0, %v2037
    %v2039 = vpop.f32.mrb[0].mxu0
    %v2040 = vpop.f32.mrb[0].mxu0
    %v2041 = vpop.f32.mrb[0].mxu0
    %2042 = vdwg.mxu0
    %v2043 = vadd.f32 %v1993, %v2038
    %v2044 = vpack.c.bf16 %v2043, %v2043
    %v2045 = vunpack.c.l.bf16 %v2044
    %v2046 = vsub.f32 %v2043, %v2045
    %v2047 = vpack.c.bf16 %v2046, %v2046
    %v2048 = vpack.c.bf16 %v85, %v85
    %v2049 = vunpack.c.l.bf16 %v2048
    %v2050 = vsub.f32 %v85, %v2049
    %v2051 = vpack.c.bf16 %v2050, %v2050
    %v2053 = vsel %vm879, %v2047, 0
    %v2056 = vsel %vm1036, %v2048, 0
    %2058 = vmatprep.subr.bf16.mxu0 0
    %2059 = vmatpush1.bf16.msra.mxu0 %v2056
    %2060 = vmatprep.subr.bf16.mxu0 0
    %2061 = vmatpush1.bf16.msra.mxu0 0
    %2062 = vmatprep.subr.bf16.mxu0 0
    %2063 = vmatpush1.bf16.msra.mxu0 0
    %2064 = vmatprep.subr.bf16.mxu0 0
    %2065 = vmatpush1.bf16.msra.mxu0 0
    %2066 = vmatprep.subr.bf16.mxu0 0
    %2067 = vmatpush1.bf16.msra.mxu0 0
    %2068 = vmatprep.subr.bf16.mxu0 0
    %2069 = vmatpush1.bf16.msra.mxu0 0
    %2070 = vmatprep.subr.bf16.mxu0 0
    %2071 = vmatpush1.bf16.msra.mxu0 0
    %2072 = vmatprep.subr.bf16.mxu0 0
    %2073 = vmatpush1.bf16.msra.mxu0 0
    %2074 = vmatprep.subr.bf16.mxu0 0
    %2075 = vmatpush1.bf16.msra.mxu0 0
    %2076 = vmatprep.subr.bf16.mxu0 0
    %2077 = vmatpush1.bf16.msra.mxu0 0
    %2078 = vmatprep.subr.bf16.mxu0 0
    %2079 = vmatpush1.bf16.msra.mxu0 0
    %2080 = vmatprep.subr.bf16.mxu0 0
    %2081 = vmatpush1.bf16.msra.mxu0 0
    %2082 = vmatprep.subr.bf16.mxu0 0
    %2083 = vmatpush1.bf16.msra.mxu0 0
    %2084 = vmatprep.subr.bf16.mxu0 0
    %2085 = vmatpush1.bf16.msra.mxu0 0
    %2086 = vmatprep.subr.bf16.mxu0 0
    %2087 = vmatpush1.bf16.msra.mxu0 0
    %2088 = vmatprep.subr.bf16.mxu0 0
    %2089 = vmatpush1.bf16.msra.mxu0 0
    %2090 = vmatprep.mubr.bf16.mxu0 0
    %2091 = vmatmul.mubr.bf16.gmra.mrb[0].mxu0 %v2053
    %v2092 = vpop.f32.mrb[0].mxu0
    %v2093 = vadd.f32 0.0, %v2092
    %v2094 = vpop.f32.mrb[0].mxu0
    %v2095 = vpop.f32.mrb[0].mxu0
    %v2096 = vpop.f32.mrb[0].mxu0
    %2097 = vdwg.mxu0
    %v2099 = vsel %vm879, %v2044, 0
    %2101 = vmatprep.subr.bf16.mxu0 0
    %2102 = vmatpush1.bf16.msra.mxu0 %v2056
    %2103 = vmatprep.subr.bf16.mxu0 0
    %2104 = vmatpush1.bf16.msra.mxu0 0
    %2105 = vmatprep.subr.bf16.mxu0 0
    %2106 = vmatpush1.bf16.msra.mxu0 0
    %2107 = vmatprep.subr.bf16.mxu0 0
    %2108 = vmatpush1.bf16.msra.mxu0 0
    %2109 = vmatprep.subr.bf16.mxu0 0
    %2110 = vmatpush1.bf16.msra.mxu0 0
    %2111 = vmatprep.subr.bf16.mxu0 0
    %2112 = vmatpush1.bf16.msra.mxu0 0
    %2113 = vmatprep.subr.bf16.mxu0 0
    %2114 = vmatpush1.bf16.msra.mxu0 0
    %2115 = vmatprep.subr.bf16.mxu0 0
    %2116 = vmatpush1.bf16.msra.mxu0 0
    %2117 = vmatprep.subr.bf16.mxu0 0
    %2118 = vmatpush1.bf16.msra.mxu0 0
    %2119 = vmatprep.subr.bf16.mxu0 0
    %2120 = vmatpush1.bf16.msra.mxu0 0
    %2121 = vmatprep.subr.bf16.mxu0 0
    %2122 = vmatpush1.bf16.msra.mxu0 0
    %2123 = vmatprep.subr.bf16.mxu0 0
    %2124 = vmatpush1.bf16.msra.mxu0 0
    %2125 = vmatprep.subr.bf16.mxu0 0
    %2126 = vmatpush1.bf16.msra.mxu0 0
    %2127 = vmatprep.subr.bf16.mxu0 0
    %2128 = vmatpush1.bf16.msra.mxu0 0
    %2129 = vmatprep.subr.bf16.mxu0 0
    %2130 = vmatpush1.bf16.msra.mxu0 0
    %2131 = vmatprep.subr.bf16.mxu0 0
    %2132 = vmatpush1.bf16.msra.mxu0 0
    %2133 = vmatprep.mubr.bf16.mxu0 0
    %2134 = vmatmul.mubr.bf16.gmra.mrb[0].mxu0 %v2099
    %v2135 = vpop.f32.mrb[0].mxu0
    %v2136 = vadd.f32 %v2093, %v2135
    %v2137 = vpop.f32.mrb[0].mxu0
    %v2138 = vpop.f32.mrb[0].mxu0
    %v2139 = vpop.f32.mrb[0].mxu0
    %2140 = vdwg.mxu0
    %v2142 = vsel %vm1036, %v2051, 0
    %2144 = vmatprep.subr.bf16.mxu0 0
    %2145 = vmatpush1.bf16.msra.mxu0 %v2142
    %2146 = vmatprep.subr.bf16.mxu0 0
    %2147 = vmatpush1.bf16.msra.mxu0 0
    %2148 = vmatprep.subr.bf16.mxu0 0
    %2149 = vmatpush1.bf16.msra.mxu0 0
    %2150 = vmatprep.subr.bf16.mxu0 0
    %2151 = vmatpush1.bf16.msra.mxu0 0
    %2152 = vmatprep.subr.bf16.mxu0 0
    %2153 = vmatpush1.bf16.msra.mxu0 0
    %2154 = vmatprep.subr.bf16.mxu0 0
    %2155 = vmatpush1.bf16.msra.mxu0 0
    %2156 = vmatprep.subr.bf16.mxu0 0
    %2157 = vmatpush1.bf16.msra.mxu0 0
    %2158 = vmatprep.subr.bf16.mxu0 0
    %2159 = vmatpush1.bf16.msra.mxu0 0
    %2160 = vmatprep.subr.bf16.mxu0 0
    %2161 = vmatpush1.bf16.msra.mxu0 0
    %2162 = vmatprep.subr.bf16.mxu0 0
    %2163 = vmatpush1.bf16.msra.mxu0 0
    %2164 = vmatprep.subr.bf16.mxu0 0
    %2165 = vmatpush1.bf16.msra.mxu0 0
    %2166 = vmatprep.subr.bf16.mxu0 0
    %2167 = vmatpush1.bf16.msra.mxu0 0
    %2168 = vmatprep.subr.bf16.mxu0 0
    %2169 = vmatpush1.bf16.msra.mxu0 0
    %2170 = vmatprep.subr.bf16.mxu0 0
    %2171 = vmatpush1.bf16.msra.mxu0 0
    %2172 = vmatprep.subr.bf16.mxu0 0
    %2173 = vmatpush1.bf16.msra.mxu0 0
    %2174 = vmatprep.subr.bf16.mxu0 0
    %2175 = vmatpush1.bf16.msra.mxu0 0
    %2176 = vmatprep.mubr.bf16.mxu0 0
    %2177 = vmatmul.mubr.bf16.gmra.mrb[0].mxu0 %v2099
    %v2178 = vpop.f32.mrb[0].mxu0
    %v2179 = vadd.f32 0.0, %v2178
    %v2180 = vpop.f32.mrb[0].mxu0
    %v2181 = vpop.f32.mrb[0].mxu0
    %v2182 = vpop.f32.mrb[0].mxu0
    %2183 = vdwg.mxu0
    %v2184 = vadd.f32 %v2136, %v2179
    %v2185 = vadd.f32 %v1749, %v2184
    %2186 = vrot.lane.b32.xlu0 %v874, 104
    %v2187 = vpop.permute.xlu0 %2186
    %2188 = vrot.lane.b32.xlu0 %v875, 104
    %v2189 = vpop.permute.xlu0 %2188
    %v2191 = vsel %vm879, %v2187, 0
    %v2194 = vsel %vm879, %v2189, 0
    %2196 = vmatprep.subr.bf16.mxu0 0
    %2197 = vmatpush1.bf16.xpose.msra.mxu0 %v2194
    %2198 = vmatprep.subr.bf16.mxu0 0
    %2199 = vmatpush1.bf16.xpose.msra.mxu0 0
    %2200 = vmatprep.subr.bf16.mxu0 0
    %2201 = vmatpush1.bf16.xpose.msra.mxu0 0
    %2202 = vmatprep.subr.bf16.mxu0 0
    %2203 = vmatpush1.bf16.xpose.msra.mxu0 0
    %2204 = vmatprep.subr.bf16.mxu0 0
    %2205 = vmatpush1.bf16.xpose.msra.mxu0 0
    %2206 = vmatprep.subr.bf16.mxu0 0
    %2207 = vmatpush1.bf16.xpose.msra.mxu0 0
    %2208 = vmatprep.subr.bf16.mxu0 0
    %2209 = vmatpush1.bf16.xpose.msra.mxu0 0
    %2210 = vmatprep.subr.bf16.mxu0 0
    %2211 = vmatpush1.bf16.xpose.msra.mxu0 0
    %2212 = vmatprep.subr.bf16.mxu0 0
    %2213 = vmatpush1.bf16.xpose.msra.mxu0 0
    %2214 = vmatprep.subr.bf16.mxu0 0
    %2215 = vmatpush1.bf16.xpose.msra.mxu0 0
    %2216 = vmatprep.subr.bf16.mxu0 0
    %2217 = vmatpush1.bf16.xpose.msra.mxu0 0
    %2218 = vmatprep.subr.bf16.mxu0 0
    %2219 = vmatpush1.bf16.xpose.msra.mxu0 0
    %2220 = vmatprep.subr.bf16.mxu0 0
    %2221 = vmatpush1.bf16.xpose.msra.mxu0 0
    %2222 = vmatprep.subr.bf16.mxu0 0
    %2223 = vmatpush1.bf16.xpose.msra.mxu0 0
    %2224 = vmatprep.subr.bf16.mxu0 0
    %2225 = vmatpush1.bf16.xpose.msra.mxu0 0
    %2226 = vmatprep.subr.bf16.mxu0 0
    %2227 = vmatpush1.bf16.xpose.msra.mxu0 0
    %2228 = vmatprep.mubr.bf16.mxu0 0
    %2229 = vmatmul.mubr.bf16.gmra.mrb[0].mxu0 %v2191
    %v2230 = vpop.f32.mrb[0].mxu0
    %v2231 = vadd.f32 0.0, %v2230
    %v2232 = vpop.f32.mrb[0].mxu0
    %v2233 = vpop.f32.mrb[0].mxu0
    %v2234 = vpop.f32.mrb[0].mxu0
    %2235 = vdwg.mxu0
    %2236 = vrot.lane.b32.xlu0 %v871, 104
    %v2237 = vpop.permute.xlu0 %2236
    %v2239 = vsel %vm879, %v2237, 0
    %2241 = vmatprep.subr.bf16.mxu0 0
    %2242 = vmatpush1.bf16.xpose.msra.mxu0 %v2194
    %2243 = vmatprep.subr.bf16.mxu0 0
    %2244 = vmatpush1.bf16.xpose.msra.mxu0 0
    %2245 = vmatprep.subr.bf16.mxu0 0
    %2246 = vmatpush1.bf16.xpose.msra.mxu0 0
    %2247 = vmatprep.subr.bf16.mxu0 0
    %2248 = vmatpush1.bf16.xpose.msra.mxu0 0
    %2249 = vmatprep.subr.bf16.mxu0 0
    %2250 = vmatpush1.bf16.xpose.msra.mxu0 0
    %2251 = vmatprep.subr.bf16.mxu0 0
    %2252 = vmatpush1.bf16.xpose.msra.mxu0 0
    %2253 = vmatprep.subr.bf16.mxu0 0
    %2254 = vmatpush1.bf16.xpose.msra.mxu0 0
    %2255 = vmatprep.subr.bf16.mxu0 0
    %2256 = vmatpush1.bf16.xpose.msra.mxu0 0
    %2257 = vmatprep.subr.bf16.mxu0 0
    %2258 = vmatpush1.bf16.xpose.msra.mxu0 0
    %2259 = vmatprep.subr.bf16.mxu0 0
    %2260 = vmatpush1.bf16.xpose.msra.mxu0 0
    %2261 = vmatprep.subr.bf16.mxu0 0
    %2262 = vmatpush1.bf16.xpose.msra.mxu0 0
    %2263 = vmatprep.subr.bf16.mxu0 0
    %2264 = vmatpush1.bf16.xpose.msra.mxu0 0
    %2265 = vmatprep.subr.bf16.mxu0 0
    %2266 = vmatpush1.bf16.xpose.msra.mxu0 0
    %2267 = vmatprep.subr.bf16.mxu0 0
    %2268 = vmatpush1.bf16.xpose.msra.mxu0 0
    %2269 = vmatprep.subr.bf16.mxu0 0
    %2270 = vmatpush1.bf16.xpose.msra.mxu0 0
    %2271 = vmatprep.subr.bf16.mxu0 0
    %2272 = vmatpush1.bf16.xpose.msra.mxu0 0
    %2273 = vmatprep.mubr.bf16.mxu0 0
    %2274 = vmatmul.mubr.bf16.gmra.mrb[0].mxu0 %v2239
    %v2275 = vpop.f32.mrb[0].mxu0
    %v2276 = vadd.f32 %v2231, %v2275
    %v2277 = vpop.f32.mrb[0].mxu0
    %v2278 = vpop.f32.mrb[0].mxu0
    %v2279 = vpop.f32.mrb[0].mxu0
    %2280 = vdwg.mxu0
    %2281 = vrot.lane.b32.xlu0 %v878, 104
    %v2282 = vpop.permute.xlu0 %2281
    %v2284 = vsel %vm879, %v2282, 0
    %2286 = vmatprep.subr.bf16.mxu0 0
    %2287 = vmatpush1.bf16.xpose.msra.mxu0 %v2284
    %2288 = vmatprep.subr.bf16.mxu0 0
    %2289 = vmatpush1.bf16.xpose.msra.mxu0 0
    %2290 = vmatprep.subr.bf16.mxu0 0
    %2291 = vmatpush1.bf16.xpose.msra.mxu0 0
    %2292 = vmatprep.subr.bf16.mxu0 0
    %2293 = vmatpush1.bf16.xpose.msra.mxu0 0
    %2294 = vmatprep.subr.bf16.mxu0 0
    %2295 = vmatpush1.bf16.xpose.msra.mxu0 0
    %2296 = vmatprep.subr.bf16.mxu0 0
    %2297 = vmatpush1.bf16.xpose.msra.mxu0 0
    %2298 = vmatprep.subr.bf16.mxu0 0
    %2299 = vmatpush1.bf16.xpose.msra.mxu0 0
    %2300 = vmatprep.subr.bf16.mxu0 0
    %2301 = vmatpush1.bf16.xpose.msra.mxu0 0
    %2302 = vmatprep.subr.bf16.mxu0 0
    %2303 = vmatpush1.bf16.xpose.msra.mxu0 0
    %2304 = vmatprep.subr.bf16.mxu0 0
    %2305 = vmatpush1.bf16.xpose.msra.mxu0 0
    %2306 = vmatprep.subr.bf16.mxu0 0
    %2307 = vmatpush1.bf16.xpose.msra.mxu0 0
    %2308 = vmatprep.subr.bf16.mxu0 0
    %2309 = vmatpush1.bf16.xpose.msra.mxu0 0
    %2310 = vmatprep.subr.bf16.mxu0 0
    %2311 = vmatpush1.bf16.xpose.msra.mxu0 0
    %2312 = vmatprep.subr.bf16.mxu0 0
    %2313 = vmatpush1.bf16.xpose.msra.mxu0 0
    %2314 = vmatprep.subr.bf16.mxu0 0
    %2315 = vmatpush1.bf16.xpose.msra.mxu0 0
    %2316 = vmatprep.subr.bf16.mxu0 0
    %2317 = vmatpush1.bf16.xpose.msra.mxu0 0
    %2318 = vmatprep.mubr.bf16.mxu0 0
    %2319 = vmatmul.mubr.bf16.gmra.mrb[0].mxu0 %v2239
    %v2320 = vpop.f32.mrb[0].mxu0
    %v2321 = vadd.f32 0.0, %v2320
    %v2322 = vpop.f32.mrb[0].mxu0
    %v2323 = vpop.f32.mrb[0].mxu0
    %v2324 = vpop.f32.mrb[0].mxu0
    %2325 = vdwg.mxu0
    %v2326 = vadd.f32 %v2276, %v2321
    %v2327 = vadd.f32 %v2326, %v870
    %v2328 = vsel %vm879, %v2327, -inf
    %2329 = vmax.xlane.f32.xlu0 %v2328
    %v2330 = vpop.xlane.xlu0 %2329
    %v2331 = vsub.f32 %v2327, %v2330
    %v2332 = vmul.f32 %v2331, 1.442695
    %v2333 = vpow.pop %v2332
    %v2334 = vsel %vm879, %v2333, 0.0
    %2335 = vadd.xlane.f32.xlu0 %v2334
    %v2336 = vpop.xlane.xlu0 %2335
    %v2337 = vrcp.pop %v2336
    %v2338 = vmul.f32 %v2333, %v2337
    %v2339 = vpack.c.bf16 %v2338, %v2338
    %v2340 = vunpack.c.l.bf16 %v2339
    %v2341 = vsub.f32 %v2338, %v2340
    %v2342 = vpack.c.bf16 %v2341, %v2341
    %2343 = vrot.lane.b32.xlu0 %v1029, 104
    %v2344 = vpop.permute.xlu0 %2343
    %v2346 = vsel %vm879, %v2342, 0
    %v2349 = vsel %vm1036, %v2344, 0
    %2351 = vmatprep.subr.bf16.mxu0 0
    %2352 = vmatpush1.bf16.msra.mxu0 %v2349
    %2353 = vmatprep.subr.bf16.mxu0 0
    %2354 = vmatpush1.bf16.msra.mxu0 0
    %2355 = vmatprep.subr.bf16.mxu0 0
    %2356 = vmatpush1.bf16.msra.mxu0 0
    %2357 = vmatprep.subr.bf16.mxu0 0
    %2358 = vmatpush1.bf16.msra.mxu0 0
    %2359 = vmatprep.subr.bf16.mxu0 0
    %2360 = vmatpush1.bf16.msra.mxu0 0
    %2361 = vmatprep.subr.bf16.mxu0 0
    %2362 = vmatpush1.bf16.msra.mxu0 0
    %2363 = vmatprep.subr.bf16.mxu0 0
    %2364 = vmatpush1.bf16.msra.mxu0 0
    %2365 = vmatprep.subr.bf16.mxu0 0
    %2366 = vmatpush1.bf16.msra.mxu0 0
    %2367 = vmatprep.subr.bf16.mxu0 0
    %2368 = vmatpush1.bf16.msra.mxu0 0
    %2369 = vmatprep.subr.bf16.mxu0 0
    %2370 = vmatpush1.bf16.msra.mxu0 0
    %2371 = vmatprep.subr.bf16.mxu0 0
    %2372 = vmatpush1.bf16.msra.mxu0 0
    %2373 = vmatprep.subr.bf16.mxu0 0
    %2374 = vmatpush1.bf16.msra.mxu0 0
    %2375 = vmatprep.subr.bf16.mxu0 0
    %2376 = vmatpush1.bf16.msra.mxu0 0
    %2377 = vmatprep.subr.bf16.mxu0 0
    %2378 = vmatpush1.bf16.msra.mxu0 0
    %2379 = vmatprep.subr.bf16.mxu0 0
    %2380 = vmatpush1.bf16.msra.mxu0 0
    %2381 = vmatprep.subr.bf16.mxu0 0
    %2382 = vmatpush1.bf16.msra.mxu0 0
    %2383 = vmatprep.mubr.bf16.mxu0 0
    %2384 = vmatmul.mubr.bf16.gmra.mrb[0].mxu0 %v2346
    %v2385 = vpop.f32.mrb[0].mxu0
    %v2386 = vadd.f32 0.0, %v2385
    %v2387 = vpop.f32.mrb[0].mxu0
    %v2388 = vpop.f32.mrb[0].mxu0
    %v2389 = vpop.f32.mrb[0].mxu0
    %2390 = vdwg.mxu0
    %v2392 = vsel %vm879, %v2339, 0
    %2394 = vmatprep.subr.bf16.mxu0 0
    %2395 = vmatpush1.bf16.msra.mxu0 %v2349
    %2396 = vmatprep.subr.bf16.mxu0 0
    %2397 = vmatpush1.bf16.msra.mxu0 0
    %2398 = vmatprep.subr.bf16.mxu0 0
    %2399 = vmatpush1.bf16.msra.mxu0 0
    %2400 = vmatprep.subr.bf16.mxu0 0
    %2401 = vmatpush1.bf16.msra.mxu0 0
    %2402 = vmatprep.subr.bf16.mxu0 0
    %2403 = vmatpush1.bf16.msra.mxu0 0
    %2404 = vmatprep.subr.bf16.mxu0 0
    %2405 = vmatpush1.bf16.msra.mxu0 0
    %2406 = vmatprep.subr.bf16.mxu0 0
    %2407 = vmatpush1.bf16.msra.mxu0 0
    %2408 = vmatprep.subr.bf16.mxu0 0
    %2409 = vmatpush1.bf16.msra.mxu0 0
    %2410 = vmatprep.subr.bf16.mxu0 0
    %2411 = vmatpush1.bf16.msra.mxu0 0
    %2412 = vmatprep.subr.bf16.mxu0 0
    %2413 = vmatpush1.bf16.msra.mxu0 0
    %2414 = vmatprep.subr.bf16.mxu0 0
    %2415 = vmatpush1.bf16.msra.mxu0 0
    %2416 = vmatprep.subr.bf16.mxu0 0
    %2417 = vmatpush1.bf16.msra.mxu0 0
    %2418 = vmatprep.subr.bf16.mxu0 0
    %2419 = vmatpush1.bf16.msra.mxu0 0
    %2420 = vmatprep.subr.bf16.mxu0 0
    %2421 = vmatpush1.bf16.msra.mxu0 0
    %2422 = vmatprep.subr.bf16.mxu0 0
    %2423 = vmatpush1.bf16.msra.mxu0 0
    %2424 = vmatprep.subr.bf16.mxu0 0
    %2425 = vmatpush1.bf16.msra.mxu0 0
    %2426 = vmatprep.mubr.bf16.mxu0 0
    %2427 = vmatmul.mubr.bf16.gmra.mrb[0].mxu0 %v2392
    %v2428 = vpop.f32.mrb[0].mxu0
    %v2429 = vadd.f32 %v2386, %v2428
    %v2430 = vpop.f32.mrb[0].mxu0
    %v2431 = vpop.f32.mrb[0].mxu0
    %v2432 = vpop.f32.mrb[0].mxu0
    %2433 = vdwg.mxu0
    %2434 = vrot.lane.b32.xlu0 %v1032, 104
    %v2435 = vpop.permute.xlu0 %2434
    %v2437 = vsel %vm1036, %v2435, 0
    %2439 = vmatprep.subr.bf16.mxu0 0
    %2440 = vmatpush1.bf16.msra.mxu0 %v2437
    %2441 = vmatprep.subr.bf16.mxu0 0
    %2442 = vmatpush1.bf16.msra.mxu0 0
    %2443 = vmatprep.subr.bf16.mxu0 0
    %2444 = vmatpush1.bf16.msra.mxu0 0
    %2445 = vmatprep.subr.bf16.mxu0 0
    %2446 = vmatpush1.bf16.msra.mxu0 0
    %2447 = vmatprep.subr.bf16.mxu0 0
    %2448 = vmatpush1.bf16.msra.mxu0 0
    %2449 = vmatprep.subr.bf16.mxu0 0
    %2450 = vmatpush1.bf16.msra.mxu0 0
    %2451 = vmatprep.subr.bf16.mxu0 0
    %2452 = vmatpush1.bf16.msra.mxu0 0
    %2453 = vmatprep.subr.bf16.mxu0 0
    %2454 = vmatpush1.bf16.msra.mxu0 0
    %2455 = vmatprep.subr.bf16.mxu0 0
    %2456 = vmatpush1.bf16.msra.mxu0 0
    %2457 = vmatprep.subr.bf16.mxu0 0
    %2458 = vmatpush1.bf16.msra.mxu0 0
    %2459 = vmatprep.subr.bf16.mxu0 0
    %2460 = vmatpush1.bf16.msra.mxu0 0
    %2461 = vmatprep.subr.bf16.mxu0 0
    %2462 = vmatpush1.bf16.msra.mxu0 0
    %2463 = vmatprep.subr.bf16.mxu0 0
    %2464 = vmatpush1.bf16.msra.mxu0 0
    %2465 = vmatprep.subr.bf16.mxu0 0
    %2466 = vmatpush1.bf16.msra.mxu0 0
    %2467 = vmatprep.subr.bf16.mxu0 0
    %2468 = vmatpush1.bf16.msra.mxu0 0
    %2469 = vmatprep.subr.bf16.mxu0 0
    %2470 = vmatpush1.bf16.msra.mxu0 0
    %2471 = vmatprep.mubr.bf16.mxu0 0
    %2472 = vmatmul.mubr.bf16.gmra.mrb[0].mxu0 %v2392
    %v2473 = vpop.f32.mrb[0].mxu0
    %v2474 = vadd.f32 0.0, %v2473
    %v2475 = vpop.f32.mrb[0].mxu0
    %v2476 = vpop.f32.mrb[0].mxu0
    %v2477 = vpop.f32.mrb[0].mxu0
    %2478 = vdwg.mxu0
    %v2479 = vadd.f32 %v2429, %v2474
    %v2480 = vpack.c.bf16 %v2479, %v2479
    %v2481 = vunpack.c.l.bf16 %v2480
    %v2482 = vsub.f32 %v2479, %v2481
    %v2483 = vpack.c.bf16 %v2482, %v2482
    %v2484 = vpack.c.bf16 %v86, %v86
    %v2485 = vunpack.c.l.bf16 %v2484
    %v2486 = vsub.f32 %v86, %v2485
    %v2487 = vpack.c.bf16 %v2486, %v2486
    %v2489 = vsel %vm879, %v2483, 0
    %v2492 = vsel %vm1036, %v2484, 0
    %2494 = vmatprep.subr.bf16.mxu0 0
    %2495 = vmatpush1.bf16.msra.mxu0 %v2492
    %2496 = vmatprep.subr.bf16.mxu0 0
    %2497 = vmatpush1.bf16.msra.mxu0 0
    %2498 = vmatprep.subr.bf16.mxu0 0
    %2499 = vmatpush1.bf16.msra.mxu0 0
    %2500 = vmatprep.subr.bf16.mxu0 0
    %2501 = vmatpush1.bf16.msra.mxu0 0
    %2502 = vmatprep.subr.bf16.mxu0 0
    %2503 = vmatpush1.bf16.msra.mxu0 0
    %2504 = vmatprep.subr.bf16.mxu0 0
    %2505 = vmatpush1.bf16.msra.mxu0 0
    %2506 = vmatprep.subr.bf16.mxu0 0
    %2507 = vmatpush1.bf16.msra.mxu0 0
    %2508 = vmatprep.subr.bf16.mxu0 0
    %2509 = vmatpush1.bf16.msra.mxu0 0
    %2510 = vmatprep.subr.bf16.mxu0 0
    %2511 = vmatpush1.bf16.msra.mxu0 0
    %2512 = vmatprep.subr.bf16.mxu0 0
    %2513 = vmatpush1.bf16.msra.mxu0 0
    %2514 = vmatprep.subr.bf16.mxu0 0
    %2515 = vmatpush1.bf16.msra.mxu0 0
    %2516 = vmatprep.subr.bf16.mxu0 0
    %2517 = vmatpush1.bf16.msra.mxu0 0
    %2518 = vmatprep.subr.bf16.mxu0 0
    %2519 = vmatpush1.bf16.msra.mxu0 0
    %2520 = vmatprep.subr.bf16.mxu0 0
    %2521 = vmatpush1.bf16.msra.mxu0 0
    %2522 = vmatprep.subr.bf16.mxu0 0
    %2523 = vmatpush1.bf16.msra.mxu0 0
    %2524 = vmatprep.subr.bf16.mxu0 0
    %2525 = vmatpush1.bf16.msra.mxu0 0
    %2526 = vmatprep.mubr.bf16.mxu0 0
    %2527 = vmatmul.mubr.bf16.gmra.mrb[0].mxu0 %v2489
    %v2528 = vpop.f32.mrb[0].mxu0
    %v2529 = vadd.f32 0.0, %v2528
    %v2530 = vpop.f32.mrb[0].mxu0
    %v2531 = vpop.f32.mrb[0].mxu0
    %v2532 = vpop.f32.mrb[0].mxu0
    %2533 = vdwg.mxu0
    %v2535 = vsel %vm879, %v2480, 0
    %2537 = vmatprep.subr.bf16.mxu0 0
    %2538 = vmatpush1.bf16.msra.mxu0 %v2492
    %2539 = vmatprep.subr.bf16.mxu0 0
    %2540 = vmatpush1.bf16.msra.mxu0 0
    %2541 = vmatprep.subr.bf16.mxu0 0
    %2542 = vmatpush1.bf16.msra.mxu0 0
    %2543 = vmatprep.subr.bf16.mxu0 0
    %2544 = vmatpush1.bf16.msra.mxu0 0
    %2545 = vmatprep.subr.bf16.mxu0 0
    %2546 = vmatpush1.bf16.msra.mxu0 0
    %2547 = vmatprep.subr.bf16.mxu0 0
    %2548 = vmatpush1.bf16.msra.mxu0 0
    %2549 = vmatprep.subr.bf16.mxu0 0
    %2550 = vmatpush1.bf16.msra.mxu0 0
    %2551 = vmatprep.subr.bf16.mxu0 0
    %2552 = vmatpush1.bf16.msra.mxu0 0
    %2553 = vmatprep.subr.bf16.mxu0 0
    %2554 = vmatpush1.bf16.msra.mxu0 0
    %2555 = vmatprep.subr.bf16.mxu0 0
    %2556 = vmatpush1.bf16.msra.mxu0 0
    %2557 = vmatprep.subr.bf16.mxu0 0
    %2558 = vmatpush1.bf16.msra.mxu0 0
    %2559 = vmatprep.subr.bf16.mxu0 0
    %2560 = vmatpush1.bf16.msra.mxu0 0
    %2561 = vmatprep.subr.bf16.mxu0 0
    %2562 = vmatpush1.bf16.msra.mxu0 0
    %2563 = vmatprep.subr.bf16.mxu0 0
    %2564 = vmatpush1.bf16.msra.mxu0 0
    %2565 = vmatprep.subr.bf16.mxu0 0
    %2566 = vmatpush1.bf16.msra.mxu0 0
    %2567 = vmatprep.subr.bf16.mxu0 0
    %2568 = vmatpush1.bf16.msra.mxu0 0
    %2569 = vmatprep.mubr.bf16.mxu0 0
    %2570 = vmatmul.mubr.bf16.gmra.mrb[0].mxu0 %v2535
    %v2571 = vpop.f32.mrb[0].mxu0
    %v2572 = vadd.f32 %v2529, %v2571
    %v2573 = vpop.f32.mrb[0].mxu0
    %v2574 = vpop.f32.mrb[0].mxu0
    %v2575 = vpop.f32.mrb[0].mxu0
    %2576 = vdwg.mxu0
    %v2578 = vsel %vm1036, %v2487, 0
    %2580 = vmatprep.subr.bf16.mxu0 0
    %2581 = vmatpush1.bf16.msra.mxu0 %v2578
    %2582 = vmatprep.subr.bf16.mxu0 0
    %2583 = vmatpush1.bf16.msra.mxu0 0
    %2584 = vmatprep.subr.bf16.mxu0 0
    %2585 = vmatpush1.bf16.msra.mxu0 0
    %2586 = vmatprep.subr.bf16.mxu0 0
    %2587 = vmatpush1.bf16.msra.mxu0 0
    %2588 = vmatprep.subr.bf16.mxu0 0
    %2589 = vmatpush1.bf16.msra.mxu0 0
    %2590 = vmatprep.subr.bf16.mxu0 0
    %2591 = vmatpush1.bf16.msra.mxu0 0
    %2592 = vmatprep.subr.bf16.mxu0 0
    %2593 = vmatpush1.bf16.msra.mxu0 0
    %2594 = vmatprep.subr.bf16.mxu0 0
    %2595 = vmatpush1.bf16.msra.mxu0 0
    %2596 = vmatprep.subr.bf16.mxu0 0
    %2597 = vmatpush1.bf16.msra.mxu0 0
    %2598 = vmatprep.subr.bf16.mxu0 0
    %2599 = vmatpush1.bf16.msra.mxu0 0
    %2600 = vmatprep.subr.bf16.mxu0 0
    %2601 = vmatpush1.bf16.msra.mxu0 0
    %2602 = vmatprep.subr.bf16.mxu0 0
    %2603 = vmatpush1.bf16.msra.mxu0 0
    %2604 = vmatprep.subr.bf16.mxu0 0
    %2605 = vmatpush1.bf16.msra.mxu0 0
    %2606 = vmatprep.subr.bf16.mxu0 0
    %2607 = vmatpush1.bf16.msra.mxu0 0
    %2608 = vmatprep.subr.bf16.mxu0 0
    %2609 = vmatpush1.bf16.msra.mxu0 0
    %2610 = vmatprep.subr.bf16.mxu0 0
    %2611 = vmatpush1.bf16.msra.mxu0 0
    %2612 = vmatprep.mubr.bf16.mxu0 0
    %2613 = vmatmul.mubr.bf16.gmra.mrb[0].mxu0 %v2535
    %v2614 = vpop.f32.mrb[0].mxu0
    %v2615 = vadd.f32 0.0, %v2614
    %v2616 = vpop.f32.mrb[0].mxu0
    %v2617 = vpop.f32.mrb[0].mxu0
    %v2618 = vpop.f32.mrb[0].mxu0
    %2619 = vdwg.mxu0
    %v2620 = vadd.f32 %v2572, %v2615
    %v2621 = vadd.f32 %v2185, %v2620
    %v2622 = vlaneseq
    %v2623 = vshrl.u32 %v2622, 7
    %v2624 = vsub.s32 0, %v2623
    %v2625 = vrot.slane %v95, %v2624
    %v2626 = vadd.f32 %v2621, %v2625
    %2627 = vst.msk [vmem:[#allocation8] sm:$0xff] %vm119, %v2626
    %v2628 = vpack.c.bf16 %v721, %v721
    %v2629 = vunpack.c.l.bf16 %v2628
    %v2630 = vsub.f32 %v721, %v2629
    %v2631 = vpack.c.bf16 %v2630, %v2630
    %v2632 = vpack.c.bf16 %v864, %v864
    %v2633 = vunpack.c.l.bf16 %v2632
    %v2634 = vsub.f32 %v864, %v2633
    %v2635 = vpack.c.bf16 %v2634, %v2634
    %v2637 = vsel %vm879, %v2631, 0
    %v2640 = vsel %vm879, %v2632, 0
    %2642 = vmatprep.subr.bf16.mxu0 0
    %2643 = vmatpush1.bf16.xpose.msra.mxu0 %v2640
    %2644 = vmatprep.subr.bf16.mxu0 0
    %2645 = vmatpush1.bf16.xpose.msra.mxu0 0
    %2646 = vmatprep.subr.bf16.mxu0 0
    %2647 = vmatpush1.bf16.xpose.msra.mxu0 0
    %2648 = vmatprep.subr.bf16.mxu0 0
    %2649 = vmatpush1.bf16.xpose.msra.mxu0 0
    %2650 = vmatprep.subr.bf16.mxu0 0
    %2651 = vmatpush1.bf16.xpose.msra.mxu0 0
    %2652 = vmatprep.subr.bf16.mxu0 0
    %2653 = vmatpush1.bf16.xpose.msra.mxu0 0
    %2654 = vmatprep.subr.bf16.mxu0 0
    %2655 = vmatpush1.bf16.xpose.msra.mxu0 0
    %2656 = vmatprep.subr.bf16.mxu0 0
    %2657 = vmatpush1.bf16.xpose.msra.mxu0 0
    %2658 = vmatprep.subr.bf16.mxu0 0
    %2659 = vmatpush1.bf16.xpose.msra.mxu0 0
    %2660 = vmatprep.subr.bf16.mxu0 0
    %2661 = vmatpush1.bf16.xpose.msra.mxu0 0
    %2662 = vmatprep.subr.bf16.mxu0 0
    %2663 = vmatpush1.bf16.xpose.msra.mxu0 0
    %2664 = vmatprep.subr.bf16.mxu0 0
    %2665 = vmatpush1.bf16.xpose.msra.mxu0 0
    %2666 = vmatprep.subr.bf16.mxu0 0
    %2667 = vmatpush1.bf16.xpose.msra.mxu0 0
    %2668 = vmatprep.subr.bf16.mxu0 0
    %2669 = vmatpush1.bf16.xpose.msra.mxu0 0
    %2670 = vmatprep.subr.bf16.mxu0 0
    %2671 = vmatpush1.bf16.xpose.msra.mxu0 0
    %2672 = vmatprep.subr.bf16.mxu0 0
    %2673 = vmatpush1.bf16.xpose.msra.mxu0 0
    %2674 = vmatprep.mubr.bf16.mxu0 0
    %2675 = vmatmul.mubr.bf16.gmra.mrb[0].mxu0 %v2637
    %v2676 = vpop.f32.mrb[0].mxu0
    %v2677 = vadd.f32 0.0, %v2676
    %v2678 = vpop.f32.mrb[0].mxu0
    %v2679 = vpop.f32.mrb[0].mxu0
    %v2680 = vpop.f32.mrb[0].mxu0
    %2681 = vdwg.mxu0
    %v2683 = vsel %vm879, %v2628, 0
    %2685 = vmatprep.subr.bf16.mxu0 0
    %2686 = vmatpush1.bf16.xpose.msra.mxu0 %v2640
    %2687 = vmatprep.subr.bf16.mxu0 0
    %2688 = vmatpush1.bf16.xpose.msra.mxu0 0
    %2689 = vmatprep.subr.bf16.mxu0 0
    %2690 = vmatpush1.bf16.xpose.msra.mxu0 0
    %2691 = vmatprep.subr.bf16.mxu0 0
    %2692 = vmatpush1.bf16.xpose.msra.mxu0 0
    %2693 = vmatprep.subr.bf16.mxu0 0
    %2694 = vmatpush1.bf16.xpose.msra.mxu0 0
    %2695 = vmatprep.subr.bf16.mxu0 0
    %2696 = vmatpush1.bf16.xpose.msra.mxu0 0
    %2697 = vmatprep.subr.bf16.mxu0 0
    %2698 = vmatpush1.bf16.xpose.msra.mxu0 0
    %2699 = vmatprep.subr.bf16.mxu0 0
    %2700 = vmatpush1.bf16.xpose.msra.mxu0 0
    %2701 = vmatprep.subr.bf16.mxu0 0
    %2702 = vmatpush1.bf16.xpose.msra.mxu0 0
    %2703 = vmatprep.subr.bf16.mxu0 0
    %2704 = vmatpush1.bf16.xpose.msra.mxu0 0
    %2705 = vmatprep.subr.bf16.mxu0 0
    %2706 = vmatpush1.bf16.xpose.msra.mxu0 0
    %2707 = vmatprep.subr.bf16.mxu0 0
    %2708 = vmatpush1.bf16.xpose.msra.mxu0 0
    %2709 = vmatprep.subr.bf16.mxu0 0
    %2710 = vmatpush1.bf16.xpose.msra.mxu0 0
    %2711 = vmatprep.subr.bf16.mxu0 0
    %2712 = vmatpush1.bf16.xpose.msra.mxu0 0
    %2713 = vmatprep.subr.bf16.mxu0 0
    %2714 = vmatpush1.bf16.xpose.msra.mxu0 0
    %2715 = vmatprep.subr.bf16.mxu0 0
    %2716 = vmatpush1.bf16.xpose.msra.mxu0 0
    %2717 = vmatprep.mubr.bf16.mxu0 0
    %2718 = vmatmul.mubr.bf16.gmra.mrb[0].mxu0 %v2683
    %v2719 = vpop.f32.mrb[0].mxu0
    %v2720 = vadd.f32 %v2677, %v2719
    %v2721 = vpop.f32.mrb[0].mxu0
    %v2722 = vpop.f32.mrb[0].mxu0
    %v2723 = vpop.f32.mrb[0].mxu0
    %2724 = vdwg.mxu0
    %v2726 = vsel %vm879, %v2635, 0
    %2728 = vmatprep.subr.bf16.mxu0 0
    %2729 = vmatpush1.bf16.xpose.msra.mxu0 %v2726
    %2730 = vmatprep.subr.bf16.mxu0 0
    %2731 = vmatpush1.bf16.xpose.msra.mxu0 0
    %2732 = vmatprep.subr.bf16.mxu0 0
    %2733 = vmatpush1.bf16.xpose.msra.mxu0 0
    %2734 = vmatprep.subr.bf16.mxu0 0
    %2735 = vmatpush1.bf16.xpose.msra.mxu0 0
    %2736 = vmatprep.subr.bf16.mxu0 0
    %2737 = vmatpush1.bf16.xpose.msra.mxu0 0
    %2738 = vmatprep.subr.bf16.mxu0 0
    %2739 = vmatpush1.bf16.xpose.msra.mxu0 0
    %2740 = vmatprep.subr.bf16.mxu0 0
    %2741 = vmatpush1.bf16.xpose.msra.mxu0 0
    %2742 = vmatprep.subr.bf16.mxu0 0
    %2743 = vmatpush1.bf16.xpose.msra.mxu0 0
    %2744 = vmatprep.subr.bf16.mxu0 0
    %2745 = vmatpush1.bf16.xpose.msra.mxu0 0
    %2746 = vmatprep.subr.bf16.mxu0 0
    %2747 = vmatpush1.bf16.xpose.msra.mxu0 0
    %2748 = vmatprep.subr.bf16.mxu0 0
    %2749 = vmatpush1.bf16.xpose.msra.mxu0 0
    %2750 = vmatprep.subr.bf16.mxu0 0
    %2751 = vmatpush1.bf16.xpose.msra.mxu0 0
    %2752 = vmatprep.subr.bf16.mxu0 0
    %2753 = vmatpush1.bf16.xpose.msra.mxu0 0
    %2754 = vmatprep.subr.bf16.mxu0 0
    %2755 = vmatpush1.bf16.xpose.msra.mxu0 0
    %2756 = vmatprep.subr.bf16.mxu0 0
    %2757 = vmatpush1.bf16.xpose.msra.mxu0 0
    %2758 = vmatprep.subr.bf16.mxu0 0
    %2759 = vmatpush1.bf16.xpose.msra.mxu0 0
    %2760 = vmatprep.mubr.bf16.mxu0 0
    %2761 = vmatmul.mubr.bf16.gmra.mrb[0].mxu0 %v2683
    %v2762 = vpop.f32.mrb[0].mxu0
    %v2763 = vadd.f32 0.0, %v2762
    %v2764 = vpop.f32.mrb[0].mxu0
    %v2765 = vpop.f32.mrb[0].mxu0
    %v2766 = vpop.f32.mrb[0].mxu0
    %2767 = vdwg.mxu0
    %v2768 = vadd.f32 %v2720, %v2763
    %v2769 = vadd.f32 %v2768, %v870
    %v2770 = vsel %vm879, %v2769, -inf
    %2771 = vmax.xlane.f32.xlu0 %v2770
    %v2772 = vpop.xlane.xlu0 %2771
    %v2773 = vsub.f32 %v2769, %v2772
    %v2774 = vmul.f32 %v2773, 1.442695
    %v2775 = vpow.pop %v2774
    %v2776 = vsel %vm879, %v2775, 0.0
    %2777 = vadd.xlane.f32.xlu0 %v2776
    %v2778 = vpop.xlane.xlu0 %2777
    %v2779 = vrcp.pop %v2778
    %v2780 = vmul.f32 %v2775, %v2779
    %v2781 = vpack.c.bf16 %v2780, %v2780
    %v2782 = vunpack.c.l.bf16 %v2781
    %v2783 = vsub.f32 %v2780, %v2782
    %v2784 = vpack.c.bf16 %v2783, %v2783
    %v2785 = vpack.c.bf16 %v566, %v566
    %v2786 = vunpack.c.l.bf16 %v2785
    %v2787 = vsub.f32 %v566, %v2786
    %v2788 = vpack.c.bf16 %v2787, %v2787
    %v2790 = vsel %vm879, %v2784, 0
    %v2793 = vsel %vm1036, %v2785, 0
    %2795 = vmatprep.subr.bf16.mxu0 0
    %2796 = vmatpush1.bf16.msra.mxu0 %v2793
    %2797 = vmatprep.subr.bf16.mxu0 0
    %2798 = vmatpush1.bf16.msra.mxu0 0
    %2799 = vmatprep.subr.bf16.mxu0 0
    %2800 = vmatpush1.bf16.msra.mxu0 0
    %2801 = vmatprep.subr.bf16.mxu0 0
    %2802 = vmatpush1.bf16.msra.mxu0 0
    %2803 = vmatprep.subr.bf16.mxu0 0
    %2804 = vmatpush1.bf16.msra.mxu0 0
    %2805 = vmatprep.subr.bf16.mxu0 0
    %2806 = vmatpush1.bf16.msra.mxu0 0
    %2807 = vmatprep.subr.bf16.mxu0 0
    %2808 = vmatpush1.bf16.msra.mxu0 0
    %2809 = vmatprep.subr.bf16.mxu0 0
    %2810 = vmatpush1.bf16.msra.mxu0 0
    %2811 = vmatprep.subr.bf16.mxu0 0
    %2812 = vmatpush1.bf16.msra.mxu0 0
    %2813 = vmatprep.subr.bf16.mxu0 0
    %2814 = vmatpush1.bf16.msra.mxu0 0
    %2815 = vmatprep.subr.bf16.mxu0 0
    %2816 = vmatpush1.bf16.msra.mxu0 0
    %2817 = vmatprep.subr.bf16.mxu0 0
    %2818 = vmatpush1.bf16.msra.mxu0 0
    %2819 = vmatprep.subr.bf16.mxu0 0
    %2820 = vmatpush1.bf16.msra.mxu0 0
    %2821 = vmatprep.subr.bf16.mxu0 0
    %2822 = vmatpush1.bf16.msra.mxu0 0
    %2823 = vmatprep.subr.bf16.mxu0 0
    %2824 = vmatpush1.bf16.msra.mxu0 0
    %2825 = vmatprep.subr.bf16.mxu0 0
    %2826 = vmatpush1.bf16.msra.mxu0 0
    %2827 = vmatprep.mubr.bf16.mxu0 0
    %2828 = vmatmul.mubr.bf16.gmra.mrb[0].mxu0 %v2790
    %v2829 = vpop.f32.mrb[0].mxu0
    %v2830 = vadd.f32 0.0, %v2829
    %v2831 = vpop.f32.mrb[0].mxu0
    %v2832 = vpop.f32.mrb[0].mxu0
    %v2833 = vpop.f32.mrb[0].mxu0
    %2834 = vdwg.mxu0
    %v2836 = vsel %vm879, %v2781, 0
    %2838 = vmatprep.subr.bf16.mxu0 0
    %2839 = vmatpush1.bf16.msra.mxu0 %v2793
    %2840 = vmatprep.subr.bf16.mxu0 0
    %2841 = vmatpush1.bf16.msra.mxu0 0
    %2842 = vmatprep.subr.bf16.mxu0 0
    %2843 = vmatpush1.bf16.msra.mxu0 0
    %2844 = vmatprep.subr.bf16.mxu0 0
    %2845 = vmatpush1.bf16.msra.mxu0 0
    %2846 = vmatprep.subr.bf16.mxu0 0
    %2847 = vmatpush1.bf16.msra.mxu0 0
    %2848 = vmatprep.subr.bf16.mxu0 0
    %2849 = vmatpush1.bf16.msra.mxu0 0
    %2850 = vmatprep.subr.bf16.mxu0 0
    %2851 = vmatpush1.bf16.msra.mxu0 0
    %2852 = vmatprep.subr.bf16.mxu0 0
    %2853 = vmatpush1.bf16.msra.mxu0 0
    %2854 = vmatprep.subr.bf16.mxu0 0
    %2855 = vmatpush1.bf16.msra.mxu0 0
    %2856 = vmatprep.subr.bf16.mxu0 0
    %2857 = vmatpush1.bf16.msra.mxu0 0
    %2858 = vmatprep.subr.bf16.mxu0 0
    %2859 = vmatpush1.bf16.msra.mxu0 0
    %2860 = vmatprep.subr.bf16.mxu0 0
    %2861 = vmatpush1.bf16.msra.mxu0 0
    %2862 = vmatprep.subr.bf16.mxu0 0
    %2863 = vmatpush1.bf16.msra.mxu0 0
    %2864 = vmatprep.subr.bf16.mxu0 0
    %2865 = vmatpush1.bf16.msra.mxu0 0
    %2866 = vmatprep.subr.bf16.mxu0 0
    %2867 = vmatpush1.bf16.msra.mxu0 0
    %2868 = vmatprep.subr.bf16.mxu0 0
    %2869 = vmatpush1.bf16.msra.mxu0 0
    %2870 = vmatprep.mubr.bf16.mxu0 0
    %2871 = vmatmul.mubr.bf16.gmra.mrb[0].mxu0 %v2836
    %v2872 = vpop.f32.mrb[0].mxu0
    %v2873 = vadd.f32 %v2830, %v2872
    %v2874 = vpop.f32.mrb[0].mxu0
    %v2875 = vpop.f32.mrb[0].mxu0
    %v2876 = vpop.f32.mrb[0].mxu0
    %2877 = vdwg.mxu0
    %v2879 = vsel %vm1036, %v2788, 0
    %2881 = vmatprep.subr.bf16.mxu0 0
    %2882 = vmatpush1.bf16.msra.mxu0 %v2879
    %2883 = vmatprep.subr.bf16.mxu0 0
    %2884 = vmatpush1.bf16.msra.mxu0 0
    %2885 = vmatprep.subr.bf16.mxu0 0
    %2886 = vmatpush1.bf16.msra.mxu0 0
    %2887 = vmatprep.subr.bf16.mxu0 0
    %2888 = vmatpush1.bf16.msra.mxu0 0
    %2889 = vmatprep.subr.bf16.mxu0 0
    %2890 = vmatpush1.bf16.msra.mxu0 0
    %2891 = vmatprep.subr.bf16.mxu0 0
    %2892 = vmatpush1.bf16.msra.mxu0 0
    %2893 = vmatprep.subr.bf16.mxu0 0
    %2894 = vmatpush1.bf16.msra.mxu0 0
    %2895 = vmatprep.subr.bf16.mxu0 0
    %2896 = vmatpush1.bf16.msra.mxu0 0
    %2897 = vmatprep.subr.bf16.mxu0 0
    %2898 = vmatpush1.bf16.msra.mxu0 0
    %2899 = vmatprep.subr.bf16.mxu0 0
    %2900 = vmatpush1.bf16.msra.mxu0 0
    %2901 = vmatprep.subr.bf16.mxu0 0
    %2902 = vmatpush1.bf16.msra.mxu0 0
    %2903 = vmatprep.subr.bf16.mxu0 0
    %2904 = vmatpush1.bf16.msra.mxu0 0
    %2905 = vmatprep.subr.bf16.mxu0 0
    %2906 = vmatpush1.bf16.msra.mxu0 0
    %2907 = vmatprep.subr.bf16.mxu0 0
    %2908 = vmatpush1.bf16.msra.mxu0 0
    %2909 = vmatprep.subr.bf16.mxu0 0
    %2910 = vmatpush1.bf16.msra.mxu0 0
    %2911 = vmatprep.subr.bf16.mxu0 0
    %2912 = vmatpush1.bf16.msra.mxu0 0
    %2913 = vmatprep.mubr.bf16.mxu0 0
    %2914 = vmatmul.mubr.bf16.gmra.mrb[0].mxu0 %v2836
    %v2915 = vpop.f32.mrb[0].mxu0
    %v2916 = vadd.f32 0.0, %v2915
    %v2917 = vpop.f32.mrb[0].mxu0
    %v2918 = vpop.f32.mrb[0].mxu0
    %v2919 = vpop.f32.mrb[0].mxu0
    %2920 = vdwg.mxu0
    %v2921 = vadd.f32 %v2873, %v2916
    %v2922 = vpack.c.bf16 %v2921, %v2921
    %v2923 = vunpack.c.l.bf16 %v2922
    %v2924 = vsub.f32 %v2921, %v2923
    %v2925 = vpack.c.bf16 %v2924, %v2924
    %v2927 = vsel %vm879, %v2925, 0
    %2929 = vmatprep.subr.bf16.mxu0 0
    %2930 = vmatpush1.bf16.msra.mxu0 %v1179
    %2931 = vmatprep.subr.bf16.mxu0 0
    %2932 = vmatpush1.bf16.msra.mxu0 0
    %2933 = vmatprep.subr.bf16.mxu0 0
    %2934 = vmatpush1.bf16.msra.mxu0 0
    %2935 = vmatprep.subr.bf16.mxu0 0
    %2936 = vmatpush1.bf16.msra.mxu0 0
    %2937 = vmatprep.subr.bf16.mxu0 0
    %2938 = vmatpush1.bf16.msra.mxu0 0
    %2939 = vmatprep.subr.bf16.mxu0 0
    %2940 = vmatpush1.bf16.msra.mxu0 0
    %2941 = vmatprep.subr.bf16.mxu0 0
    %2942 = vmatpush1.bf16.msra.mxu0 0
    %2943 = vmatprep.subr.bf16.mxu0 0
    %2944 = vmatpush1.bf16.msra.mxu0 0
    %2945 = vmatprep.subr.bf16.mxu0 0
    %2946 = vmatpush1.bf16.msra.mxu0 0
    %2947 = vmatprep.subr.bf16.mxu0 0
    %2948 = vmatpush1.bf16.msra.mxu0 0
    %2949 = vmatprep.subr.bf16.mxu0 0
    %2950 = vmatpush1.bf16.msra.mxu0 0
    %2951 = vmatprep.subr.bf16.mxu0 0
    %2952 = vmatpush1.bf16.msra.mxu0 0
    %2953 = vmatprep.subr.bf16.mxu0 0
    %2954 = vmatpush1.bf16.msra.mxu0 0
    %2955 = vmatprep.subr.bf16.mxu0 0
    %2956 = vmatpush1.bf16.msra.mxu0 0
    %2957 = vmatprep.subr.bf16.mxu0 0
    %2958 = vmatpush1.bf16.msra.mxu0 0
    %2959 = vmatprep.subr.bf16.mxu0 0
    %2960 = vmatpush1.bf16.msra.mxu0 0
    %2961 = vmatprep.mubr.bf16.mxu0 0
    %2962 = vmatmul.mubr.bf16.gmra.mrb[0].mxu0 %v2927
    %v2963 = vpop.f32.mrb[0].mxu0
    %v2964 = vadd.f32 0.0, %v2963
    %v2965 = vpop.f32.mrb[0].mxu0
    %v2966 = vpop.f32.mrb[0].mxu0
    %v2967 = vpop.f32.mrb[0].mxu0
    %2968 = vdwg.mxu0
    %v2970 = vsel %vm879, %v2922, 0
    %2972 = vmatprep.subr.bf16.mxu0 0
    %2973 = vmatpush1.bf16.msra.mxu0 %v1179
    %2974 = vmatprep.subr.bf16.mxu0 0
    %2975 = vmatpush1.bf16.msra.mxu0 0
    %2976 = vmatprep.subr.bf16.mxu0 0
    %2977 = vmatpush1.bf16.msra.mxu0 0
    %2978 = vmatprep.subr.bf16.mxu0 0
    %2979 = vmatpush1.bf16.msra.mxu0 0
    %2980 = vmatprep.subr.bf16.mxu0 0
    %2981 = vmatpush1.bf16.msra.mxu0 0
    %2982 = vmatprep.subr.bf16.mxu0 0
    %2983 = vmatpush1.bf16.msra.mxu0 0
    %2984 = vmatprep.subr.bf16.mxu0 0
    %2985 = vmatpush1.bf16.msra.mxu0 0
    %2986 = vmatprep.subr.bf16.mxu0 0
    %2987 = vmatpush1.bf16.msra.mxu0 0
    %2988 = vmatprep.subr.bf16.mxu0 0
    %2989 = vmatpush1.bf16.msra.mxu0 0
    %2990 = vmatprep.subr.bf16.mxu0 0
    %2991 = vmatpush1.bf16.msra.mxu0 0
    %2992 = vmatprep.subr.bf16.mxu0 0
    %2993 = vmatpush1.bf16.msra.mxu0 0
    %2994 = vmatprep.subr.bf16.mxu0 0
    %2995 = vmatpush1.bf16.msra.mxu0 0
    %2996 = vmatprep.subr.bf16.mxu0 0
    %2997 = vmatpush1.bf16.msra.mxu0 0
    %2998 = vmatprep.subr.bf16.mxu0 0
    %2999 = vmatpush1.bf16.msra.mxu0 0
    %3000 = vmatprep.subr.bf16.mxu0 0
    %3001 = vmatpush1.bf16.msra.mxu0 0
    %3002 = vmatprep.subr.bf16.mxu0 0
    %3003 = vmatpush1.bf16.msra.mxu0 0
    %3004 = vmatprep.mubr.bf16.mxu0 0
    %3005 = vmatmul.mubr.bf16.gmra.mrb[0].mxu0 %v2970
    %v3006 = vpop.f32.mrb[0].mxu0
    %v3007 = vadd.f32 %v2964, %v3006
    %v3008 = vpop.f32.mrb[0].mxu0
    %v3009 = vpop.f32.mrb[0].mxu0
    %v3010 = vpop.f32.mrb[0].mxu0
    %3011 = vdwg.mxu0
    %3012 = vmatprep.subr.bf16.mxu0 0
    %3013 = vmatpush1.bf16.msra.mxu0 %v1265
    %3014 = vmatprep.subr.bf16.mxu0 0
    %3015 = vmatpush1.bf16.msra.mxu0 0
    %3016 = vmatprep.subr.bf16.mxu0 0
    %3017 = vmatpush1.bf16.msra.mxu0 0
    %3018 = vmatprep.subr.bf16.mxu0 0
    %3019 = vmatpush1.bf16.msra.mxu0 0
    %3020 = vmatprep.subr.bf16.mxu0 0
    %3021 = vmatpush1.bf16.msra.mxu0 0
    %3022 = vmatprep.subr.bf16.mxu0 0
    %3023 = vmatpush1.bf16.msra.mxu0 0
    %3024 = vmatprep.subr.bf16.mxu0 0
    %3025 = vmatpush1.bf16.msra.mxu0 0
    %3026 = vmatprep.subr.bf16.mxu0 0
    %3027 = vmatpush1.bf16.msra.mxu0 0
    %3028 = vmatprep.subr.bf16.mxu0 0
    %3029 = vmatpush1.bf16.msra.mxu0 0
    %3030 = vmatprep.subr.bf16.mxu0 0
    %3031 = vmatpush1.bf16.msra.mxu0 0
    %3032 = vmatprep.subr.bf16.mxu0 0
    %3033 = vmatpush1.bf16.msra.mxu0 0
    %3034 = vmatprep.subr.bf16.mxu0 0
    %3035 = vmatpush1.bf16.msra.mxu0 0
    %3036 = vmatprep.subr.bf16.mxu0 0
    %3037 = vmatpush1.bf16.msra.mxu0 0
    %3038 = vmatprep.subr.bf16.mxu0 0
    %3039 = vmatpush1.bf16.msra.mxu0 0
    %3040 = vmatprep.subr.bf16.mxu0 0
    %3041 = vmatpush1.bf16.msra.mxu0 0
    %3042 = vmatprep.subr.bf16.mxu0 0
    %3043 = vmatpush1.bf16.msra.mxu0 0
    %3044 = vmatprep.mubr.bf16.mxu0 0
    %3045 = vmatmul.mubr.bf16.gmra.mrb[0].mxu0 %v2970
    %v3046 = vpop.f32.mrb[0].mxu0
    %v3047 = vadd.f32 0.0, %v3046
    %v3048 = vpop.f32.mrb[0].mxu0
    %v3049 = vpop.f32.mrb[0].mxu0
    %v3050 = vpop.f32.mrb[0].mxu0
    %3051 = vdwg.mxu0
    %v3052 = vadd.f32 %v3007, %v3047
    %3054 = vrot.lane.b32.xlu0 %v2631, 120
    %v3055 = vpop.permute.xlu0 %3054
    %3057 = vrot.lane.b32.xlu0 %v2632, 120
    %v3058 = vpop.permute.xlu0 %3057
    %v3060 = vsel %vm879, %v3055, 0
    %v3063 = vsel %vm879, %v3058, 0
    %3065 = vmatprep.subr.bf16.mxu0 0
    %3066 = vmatpush1.bf16.xpose.msra.mxu0 %v3063
    %3067 = vmatprep.subr.bf16.mxu0 0
    %3068 = vmatpush1.bf16.xpose.msra.mxu0 0
    %3069 = vmatprep.subr.bf16.mxu0 0
    %3070 = vmatpush1.bf16.xpose.msra.mxu0 0
    %3071 = vmatprep.subr.bf16.mxu0 0
    %3072 = vmatpush1.bf16.xpose.msra.mxu0 0
    %3073 = vmatprep.subr.bf16.mxu0 0
    %3074 = vmatpush1.bf16.xpose.msra.mxu0 0
    %3075 = vmatprep.subr.bf16.mxu0 0
    %3076 = vmatpush1.bf16.xpose.msra.mxu0 0
    %3077 = vmatprep.subr.bf16.mxu0 0
    %3078 = vmatpush1.bf16.xpose.msra.mxu0 0
    %3079 = vmatprep.subr.bf16.mxu0 0
    %3080 = vmatpush1.bf16.xpose.msra.mxu0 0
    %3081 = vmatprep.subr.bf16.mxu0 0
    %3082 = vmatpush1.bf16.xpose.msra.mxu0 0
    %3083 = vmatprep.subr.bf16.mxu0 0
    %3084 = vmatpush1.bf16.xpose.msra.mxu0 0
    %3085 = vmatprep.subr.bf16.mxu0 0
    %3086 = vmatpush1.bf16.xpose.msra.mxu0 0
    %3087 = vmatprep.subr.bf16.mxu0 0
    %3088 = vmatpush1.bf16.xpose.msra.mxu0 0
    %3089 = vmatprep.subr.bf16.mxu0 0
    %3090 = vmatpush1.bf16.xpose.msra.mxu0 0
    %3091 = vmatprep.subr.bf16.mxu0 0
    %3092 = vmatpush1.bf16.xpose.msra.mxu0 0
    %3093 = vmatprep.subr.bf16.mxu0 0
    %3094 = vmatpush1.bf16.xpose.msra.mxu0 0
    %3095 = vmatprep.subr.bf16.mxu0 0
    %3096 = vmatpush1.bf16.xpose.msra.mxu0 0
    %3097 = vmatprep.mubr.bf16.mxu0 0
    %3098 = vmatmul.mubr.bf16.gmra.mrb[0].mxu0 %v3060
    %v3099 = vpop.f32.mrb[0].mxu0
    %v3100 = vadd.f32 0.0, %v3099
    %v3101 = vpop.f32.mrb[0].mxu0
    %v3102 = vpop.f32.mrb[0].mxu0
    %v3103 = vpop.f32.mrb[0].mxu0
    %3104 = vdwg.mxu0
    %3106 = vrot.lane.b32.xlu0 %v2628, 120
    %v3107 = vpop.permute.xlu0 %3106
    %v3109 = vsel %vm879, %v3107, 0
    %3111 = vmatprep.subr.bf16.mxu0 0
    %3112 = vmatpush1.bf16.xpose.msra.mxu0 %v3063
    %3113 = vmatprep.subr.bf16.mxu0 0
    %3114 = vmatpush1.bf16.xpose.msra.mxu0 0
    %3115 = vmatprep.subr.bf16.mxu0 0
    %3116 = vmatpush1.bf16.xpose.msra.mxu0 0
    %3117 = vmatprep.subr.bf16.mxu0 0
    %3118 = vmatpush1.bf16.xpose.msra.mxu0 0
    %3119 = vmatprep.subr.bf16.mxu0 0
    %3120 = vmatpush1.bf16.xpose.msra.mxu0 0
    %3121 = vmatprep.subr.bf16.mxu0 0
    %3122 = vmatpush1.bf16.xpose.msra.mxu0 0
    %3123 = vmatprep.subr.bf16.mxu0 0
    %3124 = vmatpush1.bf16.xpose.msra.mxu0 0
    %3125 = vmatprep.subr.bf16.mxu0 0
    %3126 = vmatpush1.bf16.xpose.msra.mxu0 0
    %3127 = vmatprep.subr.bf16.mxu0 0
    %3128 = vmatpush1.bf16.xpose.msra.mxu0 0
    %3129 = vmatprep.subr.bf16.mxu0 0
    %3130 = vmatpush1.bf16.xpose.msra.mxu0 0
    %3131 = vmatprep.subr.bf16.mxu0 0
    %3132 = vmatpush1.bf16.xpose.msra.mxu0 0
    %3133 = vmatprep.subr.bf16.mxu0 0
    %3134 = vmatpush1.bf16.xpose.msra.mxu0 0
    %3135 = vmatprep.subr.bf16.mxu0 0
    %3136 = vmatpush1.bf16.xpose.msra.mxu0 0
    %3137 = vmatprep.subr.bf16.mxu0 0
    %3138 = vmatpush1.bf16.xpose.msra.mxu0 0
    %3139 = vmatprep.subr.bf16.mxu0 0
    %3140 = vmatpush1.bf16.xpose.msra.mxu0 0
    %3141 = vmatprep.subr.bf16.mxu0 0
    %3142 = vmatpush1.bf16.xpose.msra.mxu0 0
    %3143 = vmatprep.mubr.bf16.mxu0 0
    %3144 = vmatmul.mubr.bf16.gmra.mrb[0].mxu0 %v3109
    %v3145 = vpop.f32.mrb[0].mxu0
    %v3146 = vadd.f32 %v3100, %v3145
    %v3147 = vpop.f32.mrb[0].mxu0
    %v3148 = vpop.f32.mrb[0].mxu0
    %v3149 = vpop.f32.mrb[0].mxu0
    %3150 = vdwg.mxu0
    %3152 = vrot.lane.b32.xlu0 %v2635, 120
    %v3153 = vpop.permute.xlu0 %3152
    %v3155 = vsel %vm879, %v3153, 0
    %3157 = vmatprep.subr.bf16.mxu0 0
    %3158 = vmatpush1.bf16.xpose.msra.mxu0 %v3155
    %3159 = vmatprep.subr.bf16.mxu0 0
    %3160 = vmatpush1.bf16.xpose.msra.mxu0 0
    %3161 = vmatprep.subr.bf16.mxu0 0
    %3162 = vmatpush1.bf16.xpose.msra.mxu0 0
    %3163 = vmatprep.subr.bf16.mxu0 0
    %3164 = vmatpush1.bf16.xpose.msra.mxu0 0
    %3165 = vmatprep.subr.bf16.mxu0 0
    %3166 = vmatpush1.bf16.xpose.msra.mxu0 0
    %3167 = vmatprep.subr.bf16.mxu0 0
    %3168 = vmatpush1.bf16.xpose.msra.mxu0 0
    %3169 = vmatprep.subr.bf16.mxu0 0
    %3170 = vmatpush1.bf16.xpose.msra.mxu0 0
    %3171 = vmatprep.subr.bf16.mxu0 0
    %3172 = vmatpush1.bf16.xpose.msra.mxu0 0
    %3173 = vmatprep.subr.bf16.mxu0 0
    %3174 = vmatpush1.bf16.xpose.msra.mxu0 0
    %3175 = vmatprep.subr.bf16.mxu0 0
    %3176 = vmatpush1.bf16.xpose.msra.mxu0 0
    %3177 = vmatprep.subr.bf16.mxu0 0
    %3178 = vmatpush1.bf16.xpose.msra.mxu0 0
    %3179 = vmatprep.subr.bf16.mxu0 0
    %3180 = vmatpush1.bf16.xpose.msra.mxu0 0
    %3181 = vmatprep.subr.bf16.mxu0 0
    %3182 = vmatpush1.bf16.xpose.msra.mxu0 0
    %3183 = vmatprep.subr.bf16.mxu0 0
    %3184 = vmatpush1.bf16.xpose.msra.mxu0 0
    %3185 = vmatprep.subr.bf16.mxu0 0
    %3186 = vmatpush1.bf16.xpose.msra.mxu0 0
    %3187 = vmatprep.subr.bf16.mxu0 0
    %3188 = vmatpush1.bf16.xpose.msra.mxu0 0
    %3189 = vmatprep.mubr.bf16.mxu0 0
    %3190 = vmatmul.mubr.bf16.gmra.mrb[0].mxu0 %v3109
    %v3191 = vpop.f32.mrb[0].mxu0
    %v3192 = vadd.f32 0.0, %v3191
    %v3193 = vpop.f32.mrb[0].mxu0
    %v3194 = vpop.f32.mrb[0].mxu0
    %v3195 = vpop.f32.mrb[0].mxu0
    %3196 = vdwg.mxu0
    %v3197 = vadd.f32 %v3146, %v3192
    %v3198 = vadd.f32 %v3197, %v870
    %v3199 = vsel %vm879, %v3198, -inf
    %3200 = vmax.xlane.f32.xlu0 %v3199
    %v3201 = vpop.xlane.xlu0 %3200
    %v3202 = vsub.f32 %v3198, %v3201
    %v3203 = vmul.f32 %v3202, 1.442695
    %v3204 = vpow.pop %v3203
    %v3205 = vsel %vm879, %v3204, 0.0
    %3206 = vadd.xlane.f32.xlu0 %v3205
    %v3207 = vpop.xlane.xlu0 %3206
    %v3208 = vrcp.pop %v3207
    %v3209 = vmul.f32 %v3204, %v3208
    %v3210 = vpack.c.bf16 %v3209, %v3209
    %v3211 = vunpack.c.l.bf16 %v3210
    %v3212 = vsub.f32 %v3209, %v3211
    %v3213 = vpack.c.bf16 %v3212, %v3212
    %3215 = vrot.lane.b32.xlu0 %v2785, 120
    %v3216 = vpop.permute.xlu0 %3215
    %v3218 = vsel %vm879, %v3213, 0
    %v3221 = vsel %vm1036, %v3216, 0
    %3223 = vmatprep.subr.bf16.mxu0 0
    %3224 = vmatpush1.bf16.msra.mxu0 %v3221
    %3225 = vmatprep.subr.bf16.mxu0 0
    %3226 = vmatpush1.bf16.msra.mxu0 0
    %3227 = vmatprep.subr.bf16.mxu0 0
    %3228 = vmatpush1.bf16.msra.mxu0 0
    %3229 = vmatprep.subr.bf16.mxu0 0
    %3230 = vmatpush1.bf16.msra.mxu0 0
    %3231 = vmatprep.subr.bf16.mxu0 0
    %3232 = vmatpush1.bf16.msra.mxu0 0
    %3233 = vmatprep.subr.bf16.mxu0 0
    %3234 = vmatpush1.bf16.msra.mxu0 0
    %3235 = vmatprep.subr.bf16.mxu0 0
    %3236 = vmatpush1.bf16.msra.mxu0 0
    %3237 = vmatprep.subr.bf16.mxu0 0
    %3238 = vmatpush1.bf16.msra.mxu0 0
    %3239 = vmatprep.subr.bf16.mxu0 0
    %3240 = vmatpush1.bf16.msra.mxu0 0
    %3241 = vmatprep.subr.bf16.mxu0 0
    %3242 = vmatpush1.bf16.msra.mxu0 0
    %3243 = vmatprep.subr.bf16.mxu0 0
    %3244 = vmatpush1.bf16.msra.mxu0 0
    %3245 = vmatprep.subr.bf16.mxu0 0
    %3246 = vmatpush1.bf16.msra.mxu0 0
    %3247 = vmatprep.subr.bf16.mxu0 0
    %3248 = vmatpush1.bf16.msra.mxu0 0
    %3249 = vmatprep.subr.bf16.mxu0 0
    %3250 = vmatpush1.bf16.msra.mxu0 0
    %3251 = vmatprep.subr.bf16.mxu0 0
    %3252 = vmatpush1.bf16.msra.mxu0 0
    %3253 = vmatprep.subr.bf16.mxu0 0
    %3254 = vmatpush1.bf16.msra.mxu0 0
    %3255 = vmatprep.mubr.bf16.mxu0 0
    %3256 = vmatmul.mubr.bf16.gmra.mrb[0].mxu0 %v3218
    %v3257 = vpop.f32.mrb[0].mxu0
    %v3258 = vadd.f32 0.0, %v3257
    %v3259 = vpop.f32.mrb[0].mxu0
    %v3260 = vpop.f32.mrb[0].mxu0
    %v3261 = vpop.f32.mrb[0].mxu0
    %3262 = vdwg.mxu0
    %v3264 = vsel %vm879, %v3210, 0
    %3266 = vmatprep.subr.bf16.mxu0 0
    %3267 = vmatpush1.bf16.msra.mxu0 %v3221
    %3268 = vmatprep.subr.bf16.mxu0 0
    %3269 = vmatpush1.bf16.msra.mxu0 0
    %3270 = vmatprep.subr.bf16.mxu0 0
    %3271 = vmatpush1.bf16.msra.mxu0 0
    %3272 = vmatprep.subr.bf16.mxu0 0
    %3273 = vmatpush1.bf16.msra.mxu0 0
    %3274 = vmatprep.subr.bf16.mxu0 0
    %3275 = vmatpush1.bf16.msra.mxu0 0
    %3276 = vmatprep.subr.bf16.mxu0 0
    %3277 = vmatpush1.bf16.msra.mxu0 0
    %3278 = vmatprep.subr.bf16.mxu0 0
    %3279 = vmatpush1.bf16.msra.mxu0 0
    %3280 = vmatprep.subr.bf16.mxu0 0
    %3281 = vmatpush1.bf16.msra.mxu0 0
    %3282 = vmatprep.subr.bf16.mxu0 0
    %3283 = vmatpush1.bf16.msra.mxu0 0
    %3284 = vmatprep.subr.bf16.mxu0 0
    %3285 = vmatpush1.bf16.msra.mxu0 0
    %3286 = vmatprep.subr.bf16.mxu0 0
    %3287 = vmatpush1.bf16.msra.mxu0 0
    %3288 = vmatprep.subr.bf16.mxu0 0
    %3289 = vmatpush1.bf16.msra.mxu0 0
    %3290 = vmatprep.subr.bf16.mxu0 0
    %3291 = vmatpush1.bf16.msra.mxu0 0
    %3292 = vmatprep.subr.bf16.mxu0 0
    %3293 = vmatpush1.bf16.msra.mxu0 0
    %3294 = vmatprep.subr.bf16.mxu0 0
    %3295 = vmatpush1.bf16.msra.mxu0 0
    %3296 = vmatprep.subr.bf16.mxu0 0
    %3297 = vmatpush1.bf16.msra.mxu0 0
    %3298 = vmatprep.mubr.bf16.mxu0 0
    %3299 = vmatmul.mubr.bf16.gmra.mrb[0].mxu0 %v3264
    %v3300 = vpop.f32.mrb[0].mxu0
    %v3301 = vadd.f32 %v3258, %v3300
    %v3302 = vpop.f32.mrb[0].mxu0
    %v3303 = vpop.f32.mrb[0].mxu0
    %v3304 = vpop.f32.mrb[0].mxu0
    %3305 = vdwg.mxu0
    %3307 = vrot.lane.b32.xlu0 %v2788, 120
    %v3308 = vpop.permute.xlu0 %3307
    %v3310 = vsel %vm1036, %v3308, 0
    %3312 = vmatprep.subr.bf16.mxu0 0
    %3313 = vmatpush1.bf16.msra.mxu0 %v3310
    %3314 = vmatprep.subr.bf16.mxu0 0
    %3315 = vmatpush1.bf16.msra.mxu0 0
    %3316 = vmatprep.subr.bf16.mxu0 0
    %3317 = vmatpush1.bf16.msra.mxu0 0
    %3318 = vmatprep.subr.bf16.mxu0 0
    %3319 = vmatpush1.bf16.msra.mxu0 0
    %3320 = vmatprep.subr.bf16.mxu0 0
    %3321 = vmatpush1.bf16.msra.mxu0 0
    %3322 = vmatprep.subr.bf16.mxu0 0
    %3323 = vmatpush1.bf16.msra.mxu0 0
    %3324 = vmatprep.subr.bf16.mxu0 0
    %3325 = vmatpush1.bf16.msra.mxu0 0
    %3326 = vmatprep.subr.bf16.mxu0 0
    %3327 = vmatpush1.bf16.msra.mxu0 0
    %3328 = vmatprep.subr.bf16.mxu0 0
    %3329 = vmatpush1.bf16.msra.mxu0 0
    %3330 = vmatprep.subr.bf16.mxu0 0
    %3331 = vmatpush1.bf16.msra.mxu0 0
    %3332 = vmatprep.subr.bf16.mxu0 0
    %3333 = vmatpush1.bf16.msra.mxu0 0
    %3334 = vmatprep.subr.bf16.mxu0 0
    %3335 = vmatpush1.bf16.msra.mxu0 0
    %3336 = vmatprep.subr.bf16.mxu0 0
    %3337 = vmatpush1.bf16.msra.mxu0 0
    %3338 = vmatprep.subr.bf16.mxu0 0
    %3339 = vmatpush1.bf16.msra.mxu0 0
    %3340 = vmatprep.subr.bf16.mxu0 0
    %3341 = vmatpush1.bf16.msra.mxu0 0
    %3342 = vmatprep.subr.bf16.mxu0 0
    %3343 = vmatpush1.bf16.msra.mxu0 0
    %3344 = vmatprep.mubr.bf16.mxu0 0
    %3345 = vmatmul.mubr.bf16.gmra.mrb[0].mxu0 %v3264
    %v3346 = vpop.f32.mrb[0].mxu0
    %v3347 = vadd.f32 0.0, %v3346
    %v3348 = vpop.f32.mrb[0].mxu0
    %v3349 = vpop.f32.mrb[0].mxu0
    %v3350 = vpop.f32.mrb[0].mxu0
    %3351 = vdwg.mxu0
    %v3352 = vadd.f32 %v3301, %v3347
    %v3353 = vpack.c.bf16 %v3352, %v3352
    %v3354 = vunpack.c.l.bf16 %v3353
    %v3355 = vsub.f32 %v3352, %v3354
    %v3356 = vpack.c.bf16 %v3355, %v3355
    %v3358 = vsel %vm879, %v3356, 0
    %3360 = vmatprep.subr.bf16.mxu0 0
    %3361 = vmatpush1.bf16.msra.mxu0 %v1620
    %3362 = vmatprep.subr.bf16.mxu0 0
    %3363 = vmatpush1.bf16.msra.mxu0 0
    %3364 = vmatprep.subr.bf16.mxu0 0
    %3365 = vmatpush1.bf16.msra.mxu0 0
    %3366 = vmatprep.subr.bf16.mxu0 0
    %3367 = vmatpush1.bf16.msra.mxu0 0
    %3368 = vmatprep.subr.bf16.mxu0 0
    %3369 = vmatpush1.bf16.msra.mxu0 0
    %3370 = vmatprep.subr.bf16.mxu0 0
    %3371 = vmatpush1.bf16.msra.mxu0 0
    %3372 = vmatprep.subr.bf16.mxu0 0
    %3373 = vmatpush1.bf16.msra.mxu0 0
    %3374 = vmatprep.subr.bf16.mxu0 0
    %3375 = vmatpush1.bf16.msra.mxu0 0
    %3376 = vmatprep.subr.bf16.mxu0 0
    %3377 = vmatpush1.bf16.msra.mxu0 0
    %3378 = vmatprep.subr.bf16.mxu0 0
    %3379 = vmatpush1.bf16.msra.mxu0 0
    %3380 = vmatprep.subr.bf16.mxu0 0
    %3381 = vmatpush1.bf16.msra.mxu0 0
    %3382 = vmatprep.subr.bf16.mxu0 0
    %3383 = vmatpush1.bf16.msra.mxu0 0
    %3384 = vmatprep.subr.bf16.mxu0 0
    %3385 = vmatpush1.bf16.msra.mxu0 0
    %3386 = vmatprep.subr.bf16.mxu0 0
    %3387 = vmatpush1.bf16.msra.mxu0 0
    %3388 = vmatprep.subr.bf16.mxu0 0
    %3389 = vmatpush1.bf16.msra.mxu0 0
    %3390 = vmatprep.subr.bf16.mxu0 0
    %3391 = vmatpush1.bf16.msra.mxu0 0
    %3392 = vmatprep.mubr.bf16.mxu0 0
    %3393 = vmatmul.mubr.bf16.gmra.mrb[0].mxu0 %v3358
    %v3394 = vpop.f32.mrb[0].mxu0
    %v3395 = vadd.f32 0.0, %v3394
    %v3396 = vpop.f32.mrb[0].mxu0
    %v3397 = vpop.f32.mrb[0].mxu0
    %v3398 = vpop.f32.mrb[0].mxu0
    %3399 = vdwg.mxu0
    %v3401 = vsel %vm879, %v3353, 0
    %3403 = vmatprep.subr.bf16.mxu0 0
    %3404 = vmatpush1.bf16.msra.mxu0 %v1620
    %3405 = vmatprep.subr.bf16.mxu0 0
    %3406 = vmatpush1.bf16.msra.mxu0 0
    %3407 = vmatprep.subr.bf16.mxu0 0
    %3408 = vmatpush1.bf16.msra.mxu0 0
    %3409 = vmatprep.subr.bf16.mxu0 0
    %3410 = vmatpush1.bf16.msra.mxu0 0
    %3411 = vmatprep.subr.bf16.mxu0 0
    %3412 = vmatpush1.bf16.msra.mxu0 0
    %3413 = vmatprep.subr.bf16.mxu0 0
    %3414 = vmatpush1.bf16.msra.mxu0 0
    %3415 = vmatprep.subr.bf16.mxu0 0
    %3416 = vmatpush1.bf16.msra.mxu0 0
    %3417 = vmatprep.subr.bf16.mxu0 0
    %3418 = vmatpush1.bf16.msra.mxu0 0
    %3419 = vmatprep.subr.bf16.mxu0 0
    %3420 = vmatpush1.bf16.msra.mxu0 0
    %3421 = vmatprep.subr.bf16.mxu0 0
    %3422 = vmatpush1.bf16.msra.mxu0 0
    %3423 = vmatprep.subr.bf16.mxu0 0
    %3424 = vmatpush1.bf16.msra.mxu0 0
    %3425 = vmatprep.subr.bf16.mxu0 0
    %3426 = vmatpush1.bf16.msra.mxu0 0
    %3427 = vmatprep.subr.bf16.mxu0 0
    %3428 = vmatpush1.bf16.msra.mxu0 0
    %3429 = vmatprep.subr.bf16.mxu0 0
    %3430 = vmatpush1.bf16.msra.mxu0 0
    %3431 = vmatprep.subr.bf16.mxu0 0
    %3432 = vmatpush1.bf16.msra.mxu0 0
    %3433 = vmatprep.subr.bf16.mxu0 0
    %3434 = vmatpush1.bf16.msra.mxu0 0
    %3435 = vmatprep.mubr.bf16.mxu0 0
    %3436 = vmatmul.mubr.bf16.gmra.mrb[0].mxu0 %v3401
    %v3437 = vpop.f32.mrb[0].mxu0
    %v3438 = vadd.f32 %v3395, %v3437
    %v3439 = vpop.f32.mrb[0].mxu0
    %v3440 = vpop.f32.mrb[0].mxu0
    %v3441 = vpop.f32.mrb[0].mxu0
    %3442 = vdwg.mxu0
    %3443 = vmatprep.subr.bf16.mxu0 0
    %3444 = vmatpush1.bf16.msra.mxu0 %v1706
    %3445 = vmatprep.subr.bf16.mxu0 0
    %3446 = vmatpush1.bf16.msra.mxu0 0
    %3447 = vmatprep.subr.bf16.mxu0 0
    %3448 = vmatpush1.bf16.msra.mxu0 0
    %3449 = vmatprep.subr.bf16.mxu0 0
    %3450 = vmatpush1.bf16.msra.mxu0 0
    %3451 = vmatprep.subr.bf16.mxu0 0
    %3452 = vmatpush1.bf16.msra.mxu0 0
    %3453 = vmatprep.subr.bf16.mxu0 0
    %3454 = vmatpush1.bf16.msra.mxu0 0
    %3455 = vmatprep.subr.bf16.mxu0 0
    %3456 = vmatpush1.bf16.msra.mxu0 0
    %3457 = vmatprep.subr.bf16.mxu0 0
    %3458 = vmatpush1.bf16.msra.mxu0 0
    %3459 = vmatprep.subr.bf16.mxu0 0
    %3460 = vmatpush1.bf16.msra.mxu0 0
    %3461 = vmatprep.subr.bf16.mxu0 0
    %3462 = vmatpush1.bf16.msra.mxu0 0
    %3463 = vmatprep.subr.bf16.mxu0 0
    %3464 = vmatpush1.bf16.msra.mxu0 0
    %3465 = vmatprep.subr.bf16.mxu0 0
    %3466 = vmatpush1.bf16.msra.mxu0 0
    %3467 = vmatprep.subr.bf16.mxu0 0
    %3468 = vmatpush1.bf16.msra.mxu0 0
    %3469 = vmatprep.subr.bf16.mxu0 0
    %3470 = vmatpush1.bf16.msra.mxu0 0
    %3471 = vmatprep.subr.bf16.mxu0 0
    %3472 = vmatpush1.bf16.msra.mxu0 0
    %3473 = vmatprep.subr.bf16.mxu0 0
    %3474 = vmatpush1.bf16.msra.mxu0 0
    %3475 = vmatprep.mubr.bf16.mxu0 0
    %3476 = vmatmul.mubr.bf16.gmra.mrb[0].mxu0 %v3401
    %v3477 = vpop.f32.mrb[0].mxu0
    %v3478 = vadd.f32 0.0, %v3477
    %v3479 = vpop.f32.mrb[0].mxu0
    %v3480 = vpop.f32.mrb[0].mxu0
    %v3481 = vpop.f32.mrb[0].mxu0
    %3482 = vdwg.mxu0
    %v3483 = vadd.f32 %v3438, %v3478
    %v3484 = vadd.f32 %v3052, %v3483
    %3485 = vrot.lane.b32.xlu0 %v2631, 112
    %v3486 = vpop.permute.xlu0 %3485
    %3487 = vrot.lane.b32.xlu0 %v2632, 112
    %v3488 = vpop.permute.xlu0 %3487
    %v3490 = vsel %vm879, %v3486, 0
    %v3493 = vsel %vm879, %v3488, 0
    %3495 = vmatprep.subr.bf16.mxu0 0
    %3496 = vmatpush1.bf16.xpose.msra.mxu0 %v3493
    %3497 = vmatprep.subr.bf16.mxu0 0
    %3498 = vmatpush1.bf16.xpose.msra.mxu0 0
    %3499 = vmatprep.subr.bf16.mxu0 0
    %3500 = vmatpush1.bf16.xpose.msra.mxu0 0
    %3501 = vmatprep.subr.bf16.mxu0 0
    %3502 = vmatpush1.bf16.xpose.msra.mxu0 0
    %3503 = vmatprep.subr.bf16.mxu0 0
    %3504 = vmatpush1.bf16.xpose.msra.mxu0 0
    %3505 = vmatprep.subr.bf16.mxu0 0
    %3506 = vmatpush1.bf16.xpose.msra.mxu0 0
    %3507 = vmatprep.subr.bf16.mxu0 0
    %3508 = vmatpush1.bf16.xpose.msra.mxu0 0
    %3509 = vmatprep.subr.bf16.mxu0 0
    %3510 = vmatpush1.bf16.xpose.msra.mxu0 0
    %3511 = vmatprep.subr.bf16.mxu0 0
    %3512 = vmatpush1.bf16.xpose.msra.mxu0 0
    %3513 = vmatprep.subr.bf16.mxu0 0
    %3514 = vmatpush1.bf16.xpose.msra.mxu0 0
    %3515 = vmatprep.subr.bf16.mxu0 0
    %3516 = vmatpush1.bf16.xpose.msra.mxu0 0
    %3517 = vmatprep.subr.bf16.mxu0 0
    %3518 = vmatpush1.bf16.xpose.msra.mxu0 0
    %3519 = vmatprep.subr.bf16.mxu0 0
    %3520 = vmatpush1.bf16.xpose.msra.mxu0 0
    %3521 = vmatprep.subr.bf16.mxu0 0
    %3522 = vmatpush1.bf16.xpose.msra.mxu0 0
    %3523 = vmatprep.subr.bf16.mxu0 0
    %3524 = vmatpush1.bf16.xpose.msra.mxu0 0
    %3525 = vmatprep.subr.bf16.mxu0 0
    %3526 = vmatpush1.bf16.xpose.msra.mxu0 0
    %3527 = vmatprep.mubr.bf16.mxu0 0
    %3528 = vmatmul.mubr.bf16.gmra.mrb[0].mxu0 %v3490
    %v3529 = vpop.f32.mrb[0].mxu0
    %v3530 = vadd.f32 0.0, %v3529
    %v3531 = vpop.f32.mrb[0].mxu0
    %v3532 = vpop.f32.mrb[0].mxu0
    %v3533 = vpop.f32.mrb[0].mxu0
    %3534 = vdwg.mxu0
    %3535 = vrot.lane.b32.xlu0 %v2628, 112
    %v3536 = vpop.permute.xlu0 %3535
    %v3538 = vsel %vm879, %v3536, 0
    %3540 = vmatprep.subr.bf16.mxu0 0
    %3541 = vmatpush1.bf16.xpose.msra.mxu0 %v3493
    %3542 = vmatprep.subr.bf16.mxu0 0
    %3543 = vmatpush1.bf16.xpose.msra.mxu0 0
    %3544 = vmatprep.subr.bf16.mxu0 0
    %3545 = vmatpush1.bf16.xpose.msra.mxu0 0
    %3546 = vmatprep.subr.bf16.mxu0 0
    %3547 = vmatpush1.bf16.xpose.msra.mxu0 0
    %3548 = vmatprep.subr.bf16.mxu0 0
    %3549 = vmatpush1.bf16.xpose.msra.mxu0 0
    %3550 = vmatprep.subr.bf16.mxu0 0
    %3551 = vmatpush1.bf16.xpose.msra.mxu0 0
    %3552 = vmatprep.subr.bf16.mxu0 0
    %3553 = vmatpush1.bf16.xpose.msra.mxu0 0
    %3554 = vmatprep.subr.bf16.mxu0 0
    %3555 = vmatpush1.bf16.xpose.msra.mxu0 0
    %3556 = vmatprep.subr.bf16.mxu0 0
    %3557 = vmatpush1.bf16.xpose.msra.mxu0 0
    %3558 = vmatprep.subr.bf16.mxu0 0
    %3559 = vmatpush1.bf16.xpose.msra.mxu0 0
    %3560 = vmatprep.subr.bf16.mxu0 0
    %3561 = vmatpush1.bf16.xpose.msra.mxu0 0
    %3562 = vmatprep.subr.bf16.mxu0 0
    %3563 = vmatpush1.bf16.xpose.msra.mxu0 0
    %3564 = vmatprep.subr.bf16.mxu0 0
    %3565 = vmatpush1.bf16.xpose.msra.mxu0 0
    %3566 = vmatprep.subr.bf16.mxu0 0
    %3567 = vmatpush1.bf16.xpose.msra.mxu0 0
    %3568 = vmatprep.subr.bf16.mxu0 0
    %3569 = vmatpush1.bf16.xpose.msra.mxu0 0
    %3570 = vmatprep.subr.bf16.mxu0 0
    %3571 = vmatpush1.bf16.xpose.msra.mxu0 0
    %3572 = vmatprep.mubr.bf16.mxu0 0
    %3573 = vmatmul.mubr.bf16.gmra.mrb[0].mxu0 %v3538
    %v3574 = vpop.f32.mrb[0].mxu0
    %v3575 = vadd.f32 %v3530, %v3574
    %v3576 = vpop.f32.mrb[0].mxu0
    %v3577 = vpop.f32.mrb[0].mxu0
    %v3578 = vpop.f32.mrb[0].mxu0
    %3579 = vdwg.mxu0
    %3580 = vrot.lane.b32.xlu0 %v2635, 112
    %v3581 = vpop.permute.xlu0 %3580
    %v3583 = vsel %vm879, %v3581, 0
    %3585 = vmatprep.subr.bf16.mxu0 0
    %3586 = vmatpush1.bf16.xpose.msra.mxu0 %v3583
    %3587 = vmatprep.subr.bf16.mxu0 0
    %3588 = vmatpush1.bf16.xpose.msra.mxu0 0
    %3589 = vmatprep.subr.bf16.mxu0 0
    %3590 = vmatpush1.bf16.xpose.msra.mxu0 0
    %3591 = vmatprep.subr.bf16.mxu0 0
    %3592 = vmatpush1.bf16.xpose.msra.mxu0 0
    %3593 = vmatprep.subr.bf16.mxu0 0
    %3594 = vmatpush1.bf16.xpose.msra.mxu0 0
    %3595 = vmatprep.subr.bf16.mxu0 0
    %3596 = vmatpush1.bf16.xpose.msra.mxu0 0
    %3597 = vmatprep.subr.bf16.mxu0 0
    %3598 = vmatpush1.bf16.xpose.msra.mxu0 0
    %3599 = vmatprep.subr.bf16.mxu0 0
    %3600 = vmatpush1.bf16.xpose.msra.mxu0 0
    %3601 = vmatprep.subr.bf16.mxu0 0
    %3602 = vmatpush1.bf16.xpose.msra.mxu0 0
    %3603 = vmatprep.subr.bf16.mxu0 0
    %3604 = vmatpush1.bf16.xpose.msra.mxu0 0
    %3605 = vmatprep.subr.bf16.mxu0 0
    %3606 = vmatpush1.bf16.xpose.msra.mxu0 0
    %3607 = vmatprep.subr.bf16.mxu0 0
    %3608 = vmatpush1.bf16.xpose.msra.mxu0 0
    %3609 = vmatprep.subr.bf16.mxu0 0
    %3610 = vmatpush1.bf16.xpose.msra.mxu0 0
    %3611 = vmatprep.subr.bf16.mxu0 0
    %3612 = vmatpush1.bf16.xpose.msra.mxu0 0
    %3613 = vmatprep.subr.bf16.mxu0 0
    %3614 = vmatpush1.bf16.xpose.msra.mxu0 0
    %3615 = vmatprep.subr.bf16.mxu0 0
    %3616 = vmatpush1.bf16.xpose.msra.mxu0 0
    %3617 = vmatprep.mubr.bf16.mxu0 0
    %3618 = vmatmul.mubr.bf16.gmra.mrb[0].mxu0 %v3538
    %v3619 = vpop.f32.mrb[0].mxu0
    %v3620 = vadd.f32 0.0, %v3619
    %v3621 = vpop.f32.mrb[0].mxu0
    %v3622 = vpop.f32.mrb[0].mxu0
    %v3623 = vpop.f32.mrb[0].mxu0
    %3624 = vdwg.mxu0
    %v3625 = vadd.f32 %v3575, %v3620
    %v3626 = vadd.f32 %v3625, %v870
    %v3627 = vsel %vm879, %v3626, -inf
    %3628 = vmax.xlane.f32.xlu0 %v3627
    %v3629 = vpop.xlane.xlu0 %3628
    %v3630 = vsub.f32 %v3626, %v3629
    %v3631 = vmul.f32 %v3630, 1.442695
    %v3632 = vpow.pop %v3631
    %v3633 = vsel %vm879, %v3632, 0.0
    %3634 = vadd.xlane.f32.xlu0 %v3633
    %v3635 = vpop.xlane.xlu0 %3634
    %v3636 = vrcp.pop %v3635
    %v3637 = vmul.f32 %v3632, %v3636
    %v3638 = vpack.c.bf16 %v3637, %v3637
    %v3639 = vunpack.c.l.bf16 %v3638
    %v3640 = vsub.f32 %v3637, %v3639
    %v3641 = vpack.c.bf16 %v3640, %v3640
    %3642 = vrot.lane.b32.xlu0 %v2785, 112
    %v3643 = vpop.permute.xlu0 %3642
    %v3645 = vsel %vm879, %v3641, 0
    %v3648 = vsel %vm1036, %v3643, 0
    %3650 = vmatprep.subr.bf16.mxu0 0
    %3651 = vmatpush1.bf16.msra.mxu0 %v3648
    %3652 = vmatprep.subr.bf16.mxu0 0
    %3653 = vmatpush1.bf16.msra.mxu0 0
    %3654 = vmatprep.subr.bf16.mxu0 0
    %3655 = vmatpush1.bf16.msra.mxu0 0
    %3656 = vmatprep.subr.bf16.mxu0 0
    %3657 = vmatpush1.bf16.msra.mxu0 0
    %3658 = vmatprep.subr.bf16.mxu0 0
    %3659 = vmatpush1.bf16.msra.mxu0 0
    %3660 = vmatprep.subr.bf16.mxu0 0
    %3661 = vmatpush1.bf16.msra.mxu0 0
    %3662 = vmatprep.subr.bf16.mxu0 0
    %3663 = vmatpush1.bf16.msra.mxu0 0
    %3664 = vmatprep.subr.bf16.mxu0 0
    %3665 = vmatpush1.bf16.msra.mxu0 0
    %3666 = vmatprep.subr.bf16.mxu0 0
    %3667 = vmatpush1.bf16.msra.mxu0 0
    %3668 = vmatprep.subr.bf16.mxu0 0
    %3669 = vmatpush1.bf16.msra.mxu0 0
    %3670 = vmatprep.subr.bf16.mxu0 0
    %3671 = vmatpush1.bf16.msra.mxu0 0
    %3672 = vmatprep.subr.bf16.mxu0 0
    %3673 = vmatpush1.bf16.msra.mxu0 0
    %3674 = vmatprep.subr.bf16.mxu0 0
    %3675 = vmatpush1.bf16.msra.mxu0 0
    %3676 = vmatprep.subr.bf16.mxu0 0
    %3677 = vmatpush1.bf16.msra.mxu0 0
    %3678 = vmatprep.subr.bf16.mxu0 0
    %3679 = vmatpush1.bf16.msra.mxu0 0
    %3680 = vmatprep.subr.bf16.mxu0 0
    %3681 = vmatpush1.bf16.msra.mxu0 0
    %3682 = vmatprep.mubr.bf16.mxu0 0
    %3683 = vmatmul.mubr.bf16.gmra.mrb[0].mxu0 %v3645
    %v3684 = vpop.f32.mrb[0].mxu0
    %v3685 = vadd.f32 0.0, %v3684
    %v3686 = vpop.f32.mrb[0].mxu0
    %v3687 = vpop.f32.mrb[0].mxu0
    %v3688 = vpop.f32.mrb[0].mxu0
    %3689 = vdwg.mxu0
    %v3691 = vsel %vm879, %v3638, 0
    %3693 = vmatprep.subr.bf16.mxu0 0
    %3694 = vmatpush1.bf16.msra.mxu0 %v3648
    %3695 = vmatprep.subr.bf16.mxu0 0
    %3696 = vmatpush1.bf16.msra.mxu0 0
    %3697 = vmatprep.subr.bf16.mxu0 0
    %3698 = vmatpush1.bf16.msra.mxu0 0
    %3699 = vmatprep.subr.bf16.mxu0 0
    %3700 = vmatpush1.bf16.msra.mxu0 0
    %3701 = vmatprep.subr.bf16.mxu0 0
    %3702 = vmatpush1.bf16.msra.mxu0 0
    %3703 = vmatprep.subr.bf16.mxu0 0
    %3704 = vmatpush1.bf16.msra.mxu0 0
    %3705 = vmatprep.subr.bf16.mxu0 0
    %3706 = vmatpush1.bf16.msra.mxu0 0
    %3707 = vmatprep.subr.bf16.mxu0 0
    %3708 = vmatpush1.bf16.msra.mxu0 0
    %3709 = vmatprep.subr.bf16.mxu0 0
    %3710 = vmatpush1.bf16.msra.mxu0 0
    %3711 = vmatprep.subr.bf16.mxu0 0
    %3712 = vmatpush1.bf16.msra.mxu0 0
    %3713 = vmatprep.subr.bf16.mxu0 0
    %3714 = vmatpush1.bf16.msra.mxu0 0
    %3715 = vmatprep.subr.bf16.mxu0 0
    %3716 = vmatpush1.bf16.msra.mxu0 0
    %3717 = vmatprep.subr.bf16.mxu0 0
    %3718 = vmatpush1.bf16.msra.mxu0 0
    %3719 = vmatprep.subr.bf16.mxu0 0
    %3720 = vmatpush1.bf16.msra.mxu0 0
    %3721 = vmatprep.subr.bf16.mxu0 0
    %3722 = vmatpush1.bf16.msra.mxu0 0
    %3723 = vmatprep.subr.bf16.mxu0 0
    %3724 = vmatpush1.bf16.msra.mxu0 0
    %3725 = vmatprep.mubr.bf16.mxu0 0
    %3726 = vmatmul.mubr.bf16.gmra.mrb[0].mxu0 %v3691
    %v3727 = vpop.f32.mrb[0].mxu0
    %v3728 = vadd.f32 %v3685, %v3727
    %v3729 = vpop.f32.mrb[0].mxu0
    %v3730 = vpop.f32.mrb[0].mxu0
    %v3731 = vpop.f32.mrb[0].mxu0
    %3732 = vdwg.mxu0
    %3733 = vrot.lane.b32.xlu0 %v2788, 112
    %v3734 = vpop.permute.xlu0 %3733
    %v3736 = vsel %vm1036, %v3734, 0
    %3738 = vmatprep.subr.bf16.mxu0 0
    %3739 = vmatpush1.bf16.msra.mxu0 %v3736
    %3740 = vmatprep.subr.bf16.mxu0 0
    %3741 = vmatpush1.bf16.msra.mxu0 0
    %3742 = vmatprep.subr.bf16.mxu0 0
    %3743 = vmatpush1.bf16.msra.mxu0 0
    %3744 = vmatprep.subr.bf16.mxu0 0
    %3745 = vmatpush1.bf16.msra.mxu0 0
    %3746 = vmatprep.subr.bf16.mxu0 0
    %3747 = vmatpush1.bf16.msra.mxu0 0
    %3748 = vmatprep.subr.bf16.mxu0 0
    %3749 = vmatpush1.bf16.msra.mxu0 0
    %3750 = vmatprep.subr.bf16.mxu0 0
    %3751 = vmatpush1.bf16.msra.mxu0 0
    %3752 = vmatprep.subr.bf16.mxu0 0
    %3753 = vmatpush1.bf16.msra.mxu0 0
    %3754 = vmatprep.subr.bf16.mxu0 0
    %3755 = vmatpush1.bf16.msra.mxu0 0
    %3756 = vmatprep.subr.bf16.mxu0 0
    %3757 = vmatpush1.bf16.msra.mxu0 0
    %3758 = vmatprep.subr.bf16.mxu0 0
    %3759 = vmatpush1.bf16.msra.mxu0 0
    %3760 = vmatprep.subr.bf16.mxu0 0
    %3761 = vmatpush1.bf16.msra.mxu0 0
    %3762 = vmatprep.subr.bf16.mxu0 0
    %3763 = vmatpush1.bf16.msra.mxu0 0
    %3764 = vmatprep.subr.bf16.mxu0 0
    %3765 = vmatpush1.bf16.msra.mxu0 0
    %3766 = vmatprep.subr.bf16.mxu0 0
    %3767 = vmatpush1.bf16.msra.mxu0 0
    %3768 = vmatprep.subr.bf16.mxu0 0
    %3769 = vmatpush1.bf16.msra.mxu0 0
    %3770 = vmatprep.mubr.bf16.mxu0 0
    %3771 = vmatmul.mubr.bf16.gmra.mrb[0].mxu0 %v3691
    %v3772 = vpop.f32.mrb[0].mxu0
    %v3773 = vadd.f32 0.0, %v3772
    %v3774 = vpop.f32.mrb[0].mxu0
    %v3775 = vpop.f32.mrb[0].mxu0
    %v3776 = vpop.f32.mrb[0].mxu0
    %3777 = vdwg.mxu0
    %v3778 = vadd.f32 %v3728, %v3773
    %v3779 = vpack.c.bf16 %v3778, %v3778
    %v3780 = vunpack.c.l.bf16 %v3779
    %v3781 = vsub.f32 %v3778, %v3780
    %v3782 = vpack.c.bf16 %v3781, %v3781
    %v3784 = vsel %vm879, %v3782, 0
    %3786 = vmatprep.subr.bf16.mxu0 0
    %3787 = vmatpush1.bf16.msra.mxu0 %v2056
    %3788 = vmatprep.subr.bf16.mxu0 0
    %3789 = vmatpush1.bf16.msra.mxu0 0
    %3790 = vmatprep.subr.bf16.mxu0 0
    %3791 = vmatpush1.bf16.msra.mxu0 0
    %3792 = vmatprep.subr.bf16.mxu0 0
    %3793 = vmatpush1.bf16.msra.mxu0 0
    %3794 = vmatprep.subr.bf16.mxu0 0
    %3795 = vmatpush1.bf16.msra.mxu0 0
    %3796 = vmatprep.subr.bf16.mxu0 0
    %3797 = vmatpush1.bf16.msra.mxu0 0
    %3798 = vmatprep.subr.bf16.mxu0 0
    %3799 = vmatpush1.bf16.msra.mxu0 0
    %3800 = vmatprep.subr.bf16.mxu0 0
    %3801 = vmatpush1.bf16.msra.mxu0 0
    %3802 = vmatprep.subr.bf16.mxu0 0
    %3803 = vmatpush1.bf16.msra.mxu0 0
    %3804 = vmatprep.subr.bf16.mxu0 0
    %3805 = vmatpush1.bf16.msra.mxu0 0
    %3806 = vmatprep.subr.bf16.mxu0 0
    %3807 = vmatpush1.bf16.msra.mxu0 0
    %3808 = vmatprep.subr.bf16.mxu0 0
    %3809 = vmatpush1.bf16.msra.mxu0 0
    %3810 = vmatprep.subr.bf16.mxu0 0
    %3811 = vmatpush1.bf16.msra.mxu0 0
    %3812 = vmatprep.subr.bf16.mxu0 0
    %3813 = vmatpush1.bf16.msra.mxu0 0
    %3814 = vmatprep.subr.bf16.mxu0 0
    %3815 = vmatpush1.bf16.msra.mxu0 0
    %3816 = vmatprep.subr.bf16.mxu0 0
    %3817 = vmatpush1.bf16.msra.mxu0 0
    %3818 = vmatprep.mubr.bf16.mxu0 0
    %3819 = vmatmul.mubr.bf16.gmra.mrb[0].mxu0 %v3784
    %v3820 = vpop.f32.mrb[0].mxu0
    %v3821 = vadd.f32 0.0, %v3820
    %v3822 = vpop.f32.mrb[0].mxu0
    %v3823 = vpop.f32.mrb[0].mxu0
    %v3824 = vpop.f32.mrb[0].mxu0
    %3825 = vdwg.mxu0
    %v3827 = vsel %vm879, %v3779, 0
    %3829 = vmatprep.subr.bf16.mxu0 0
    %3830 = vmatpush1.bf16.msra.mxu0 %v2056
    %3831 = vmatprep.subr.bf16.mxu0 0
    %3832 = vmatpush1.bf16.msra.mxu0 0
    %3833 = vmatprep.subr.bf16.mxu0 0
    %3834 = vmatpush1.bf16.msra.mxu0 0
    %3835 = vmatprep.subr.bf16.mxu0 0
    %3836 = vmatpush1.bf16.msra.mxu0 0
    %3837 = vmatprep.subr.bf16.mxu0 0
    %3838 = vmatpush1.bf16.msra.mxu0 0
    %3839 = vmatprep.subr.bf16.mxu0 0
    %3840 = vmatpush1.bf16.msra.mxu0 0
    %3841 = vmatprep.subr.bf16.mxu0 0
    %3842 = vmatpush1.bf16.msra.mxu0 0
    %3843 = vmatprep.subr.bf16.mxu0 0
    %3844 = vmatpush1.bf16.msra.mxu0 0
    %3845 = vmatprep.subr.bf16.mxu0 0
    %3846 = vmatpush1.bf16.msra.mxu0 0
    %3847 = vmatprep.subr.bf16.mxu0 0
    %3848 = vmatpush1.bf16.msra.mxu0 0
    %3849 = vmatprep.subr.bf16.mxu0 0
    %3850 = vmatpush1.bf16.msra.mxu0 0
    %3851 = vmatprep.subr.bf16.mxu0 0
    %3852 = vmatpush1.bf16.msra.mxu0 0
    %3853 = vmatprep.subr.bf16.mxu0 0
    %3854 = vmatpush1.bf16.msra.mxu0 0
    %3855 = vmatprep.subr.bf16.mxu0 0
    %3856 = vmatpush1.bf16.msra.mxu0 0
    %3857 = vmatprep.subr.bf16.mxu0 0
    %3858 = vmatpush1.bf16.msra.mxu0 0
    %3859 = vmatprep.subr.bf16.mxu0 0
    %3860 = vmatpush1.bf16.msra.mxu0 0
    %3861 = vmatprep.mubr.bf16.mxu0 0
    %3862 = vmatmul.mubr.bf16.gmra.mrb[0].mxu0 %v3827
    %v3863 = vpop.f32.mrb[0].mxu0
    %v3864 = vadd.f32 %v3821, %v3863
    %v3865 = vpop.f32.mrb[0].mxu0
    %v3866 = vpop.f32.mrb[0].mxu0
    %v3867 = vpop.f32.mrb[0].mxu0
    %3868 = vdwg.mxu0
    %3869 = vmatprep.subr.bf16.mxu0 0
    %3870 = vmatpush1.bf16.msra.mxu0 %v2142
    %3871 = vmatprep.subr.bf16.mxu0 0
    %3872 = vmatpush1.bf16.msra.mxu0 0
    %3873 = vmatprep.subr.bf16.mxu0 0
    %3874 = vmatpush1.bf16.msra.mxu0 0
    %3875 = vmatprep.subr.bf16.mxu0 0
    %3876 = vmatpush1.bf16.msra.mxu0 0
    %3877 = vmatprep.subr.bf16.mxu0 0
    %3878 = vmatpush1.bf16.msra.mxu0 0
    %3879 = vmatprep.subr.bf16.mxu0 0
    %3880 = vmatpush1.bf16.msra.mxu0 0
    %3881 = vmatprep.subr.bf16.mxu0 0
    %3882 = vmatpush1.bf16.msra.mxu0 0
    %3883 = vmatprep.subr.bf16.mxu0 0
    %3884 = vmatpush1.bf16.msra.mxu0 0
    %3885 = vmatprep.subr.bf16.mxu0 0
    %3886 = vmatpush1.bf16.msra.mxu0 0
    %3887 = vmatprep.subr.bf16.mxu0 0
    %3888 = vmatpush1.bf16.msra.mxu0 0
    %3889 = vmatprep.subr.bf16.mxu0 0
    %3890 = vmatpush1.bf16.msra.mxu0 0
    %3891 = vmatprep.subr.bf16.mxu0 0
    %3892 = vmatpush1.bf16.msra.mxu0 0
    %3893 = vmatprep.subr.bf16.mxu0 0
    %3894 = vmatpush1.bf16.msra.mxu0 0
    %3895 = vmatprep.subr.bf16.mxu0 0
    %3896 = vmatpush1.bf16.msra.mxu0 0
    %3897 = vmatprep.subr.bf16.mxu0 0
    %3898 = vmatpush1.bf16.msra.mxu0 0
    %3899 = vmatprep.subr.bf16.mxu0 0
    %3900 = vmatpush1.bf16.msra.mxu0 0
    %3901 = vmatprep.mubr.bf16.mxu0 0
    %3902 = vmatmul.mubr.bf16.gmra.mrb[0].mxu0 %v3827
    %v3903 = vpop.f32.mrb[0].mxu0
    %v3904 = vadd.f32 0.0, %v3903
    %v3905 = vpop.f32.mrb[0].mxu0
    %v3906 = vpop.f32.mrb[0].mxu0
    %v3907 = vpop.f32.mrb[0].mxu0
    %3908 = vdwg.mxu0
    %v3909 = vadd.f32 %v3864, %v3904
    %v3910 = vadd.f32 %v3484, %v3909
    %3911 = vrot.lane.b32.xlu0 %v2631, 104
    %v3912 = vpop.permute.xlu0 %3911
    %3913 = vrot.lane.b32.xlu0 %v2632, 104
    %v3914 = vpop.permute.xlu0 %3913
    %v3916 = vsel %vm879, %v3912, 0
    %v3919 = vsel %vm879, %v3914, 0
    %3921 = vmatprep.subr.bf16.mxu0 0
    %3922 = vmatpush1.bf16.xpose.msra.mxu0 %v3919
    %3923 = vmatprep.subr.bf16.mxu0 0
    %3924 = vmatpush1.bf16.xpose.msra.mxu0 0
    %3925 = vmatprep.subr.bf16.mxu0 0
    %3926 = vmatpush1.bf16.xpose.msra.mxu0 0
    %3927 = vmatprep.subr.bf16.mxu0 0
    %3928 = vmatpush1.bf16.xpose.msra.mxu0 0
    %3929 = vmatprep.subr.bf16.mxu0 0
    %3930 = vmatpush1.bf16.xpose.msra.mxu0 0
    %3931 = vmatprep.subr.bf16.mxu0 0
    %3932 = vmatpush1.bf16.xpose.msra.mxu0 0
    %3933 = vmatprep.subr.bf16.mxu0 0
    %3934 = vmatpush1.bf16.xpose.msra.mxu0 0
    %3935 = vmatprep.subr.bf16.mxu0 0
    %3936 = vmatpush1.bf16.xpose.msra.mxu0 0
    %3937 = vmatprep.subr.bf16.mxu0 0
    %3938 = vmatpush1.bf16.xpose.msra.mxu0 0
    %3939 = vmatprep.subr.bf16.mxu0 0
    %3940 = vmatpush1.bf16.xpose.msra.mxu0 0
    %3941 = vmatprep.subr.bf16.mxu0 0
    %3942 = vmatpush1.bf16.xpose.msra.mxu0 0
    %3943 = vmatprep.subr.bf16.mxu0 0
    %3944 = vmatpush1.bf16.xpose.msra.mxu0 0
    %3945 = vmatprep.subr.bf16.mxu0 0
    %3946 = vmatpush1.bf16.xpose.msra.mxu0 0
    %3947 = vmatprep.subr.bf16.mxu0 0
    %3948 = vmatpush1.bf16.xpose.msra.mxu0 0
    %3949 = vmatprep.subr.bf16.mxu0 0
    %3950 = vmatpush1.bf16.xpose.msra.mxu0 0
    %3951 = vmatprep.subr.bf16.mxu0 0
    %3952 = vmatpush1.bf16.xpose.msra.mxu0 0
    %3953 = vmatprep.mubr.bf16.mxu0 0
    %3954 = vmatmul.mubr.bf16.gmra.mrb[0].mxu0 %v3916
    %v3955 = vpop.f32.mrb[0].mxu0
    %v3956 = vadd.f32 0.0, %v3955
    %v3957 = vpop.f32.mrb[0].mxu0
    %v3958 = vpop.f32.mrb[0].mxu0
    %v3959 = vpop.f32.mrb[0].mxu0
    %3960 = vdwg.mxu0
    %3961 = vrot.lane.b32.xlu0 %v2628, 104
    %v3962 = vpop.permute.xlu0 %3961
    %v3964 = vsel %vm879, %v3962, 0
    %3966 = vmatprep.subr.bf16.mxu0 0
    %3967 = vmatpush1.bf16.xpose.msra.mxu0 %v3919
    %3968 = vmatprep.subr.bf16.mxu0 0
    %3969 = vmatpush1.bf16.xpose.msra.mxu0 0
    %3970 = vmatprep.subr.bf16.mxu0 0
    %3971 = vmatpush1.bf16.xpose.msra.mxu0 0
    %3972 = vmatprep.subr.bf16.mxu0 0
    %3973 = vmatpush1.bf16.xpose.msra.mxu0 0
    %3974 = vmatprep.subr.bf16.mxu0 0
    %3975 = vmatpush1.bf16.xpose.msra.mxu0 0
    %3976 = vmatprep.subr.bf16.mxu0 0
    %3977 = vmatpush1.bf16.xpose.msra.mxu0 0
    %3978 = vmatprep.subr.bf16.mxu0 0
    %3979 = vmatpush1.bf16.xpose.msra.mxu0 0
    %3980 = vmatprep.subr.bf16.mxu0 0
    %3981 = vmatpush1.bf16.xpose.msra.mxu0 0
    %3982 = vmatprep.subr.bf16.mxu0 0
    %3983 = vmatpush1.bf16.xpose.msra.mxu0 0
    %3984 = vmatprep.subr.bf16.mxu0 0
    %3985 = vmatpush1.bf16.xpose.msra.mxu0 0
    %3986 = vmatprep.subr.bf16.mxu0 0
    %3987 = vmatpush1.bf16.xpose.msra.mxu0 0
    %3988 = vmatprep.subr.bf16.mxu0 0
    %3989 = vmatpush1.bf16.xpose.msra.mxu0 0
    %3990 = vmatprep.subr.bf16.mxu0 0
    %3991 = vmatpush1.bf16.xpose.msra.mxu0 0
    %3992 = vmatprep.subr.bf16.mxu0 0
    %3993 = vmatpush1.bf16.xpose.msra.mxu0 0
    %3994 = vmatprep.subr.bf16.mxu0 0
    %3995 = vmatpush1.bf16.xpose.msra.mxu0 0
    %3996 = vmatprep.subr.bf16.mxu0 0
    %3997 = vmatpush1.bf16.xpose.msra.mxu0 0
    %3998 = vmatprep.mubr.bf16.mxu0 0
    %3999 = vmatmul.mubr.bf16.gmra.mrb[0].mxu0 %v3964
    %v4000 = vpop.f32.mrb[0].mxu0
    %v4001 = vadd.f32 %v3956, %v4000
    %v4002 = vpop.f32.mrb[0].mxu0
    %v4003 = vpop.f32.mrb[0].mxu0
    %v4004 = vpop.f32.mrb[0].mxu0
    %4005 = vdwg.mxu0
    %4006 = vrot.lane.b32.xlu0 %v2635, 104
    %v4007 = vpop.permute.xlu0 %4006
    %v4009 = vsel %vm879, %v4007, 0
    %4011 = vmatprep.subr.bf16.mxu0 0
    %4012 = vmatpush1.bf16.xpose.msra.mxu0 %v4009
    %4013 = vmatprep.subr.bf16.mxu0 0
    %4014 = vmatpush1.bf16.xpose.msra.mxu0 0
    %4015 = vmatprep.subr.bf16.mxu0 0
    %4016 = vmatpush1.bf16.xpose.msra.mxu0 0
    %4017 = vmatprep.subr.bf16.mxu0 0
    %4018 = vmatpush1.bf16.xpose.msra.mxu0 0
    %4019 = vmatprep.subr.bf16.mxu0 0
    %4020 = vmatpush1.bf16.xpose.msra.mxu0 0
    %4021 = vmatprep.subr.bf16.mxu0 0
    %4022 = vmatpush1.bf16.xpose.msra.mxu0 0
    %4023 = vmatprep.subr.bf16.mxu0 0
    %4024 = vmatpush1.bf16.xpose.msra.mxu0 0
    %4025 = vmatprep.subr.bf16.mxu0 0
    %4026 = vmatpush1.bf16.xpose.msra.mxu0 0
    %4027 = vmatprep.subr.bf16.mxu0 0
    %4028 = vmatpush1.bf16.xpose.msra.mxu0 0
    %4029 = vmatprep.subr.bf16.mxu0 0
    %4030 = vmatpush1.bf16.xpose.msra.mxu0 0
    %4031 = vmatprep.subr.bf16.mxu0 0
    %4032 = vmatpush1.bf16.xpose.msra.mxu0 0
    %4033 = vmatprep.subr.bf16.mxu0 0
    %4034 = vmatpush1.bf16.xpose.msra.mxu0 0
    %4035 = vmatprep.subr.bf16.mxu0 0
    %4036 = vmatpush1.bf16.xpose.msra.mxu0 0
    %4037 = vmatprep.subr.bf16.mxu0 0
    %4038 = vmatpush1.bf16.xpose.msra.mxu0 0
    %4039 = vmatprep.subr.bf16.mxu0 0
    %4040 = vmatpush1.bf16.xpose.msra.mxu0 0
    %4041 = vmatprep.subr.bf16.mxu0 0
    %4042 = vmatpush1.bf16.xpose.msra.mxu0 0
    %4043 = vmatprep.mubr.bf16.mxu0 0
    %4044 = vmatmul.mubr.bf16.gmra.mrb[0].mxu0 %v3964
    %v4045 = vpop.f32.mrb[0].mxu0
    %v4046 = vadd.f32 0.0, %v4045
    %v4047 = vpop.f32.mrb[0].mxu0
    %v4048 = vpop.f32.mrb[0].mxu0
    %v4049 = vpop.f32.mrb[0].mxu0
    %4050 = vdwg.mxu0
    %v4051 = vadd.f32 %v4001, %v4046
    %v4052 = vadd.f32 %v4051, %v870
    %v4053 = vsel %vm879, %v4052, -inf
    %4054 = vmax.xlane.f32.xlu0 %v4053
    %v4055 = vpop.xlane.xlu0 %4054
    %v4056 = vsub.f32 %v4052, %v4055
    %v4057 = vmul.f32 %v4056, 1.442695
    %v4058 = vpow.pop %v4057
    %v4059 = vsel %vm879, %v4058, 0.0
    %4060 = vadd.xlane.f32.xlu0 %v4059
    %v4061 = vpop.xlane.xlu0 %4060
    %v4062 = vrcp.pop %v4061
    %v4063 = vmul.f32 %v4058, %v4062
    %v4064 = vpack.c.bf16 %v4063, %v4063
    %v4065 = vunpack.c.l.bf16 %v4064
    %v4066 = vsub.f32 %v4063, %v4065
    %v4067 = vpack.c.bf16 %v4066, %v4066
    %4068 = vrot.lane.b32.xlu0 %v2785, 104
    %v4069 = vpop.permute.xlu0 %4068
    %v4071 = vsel %vm879, %v4067, 0
    %v4074 = vsel %vm1036, %v4069, 0
    %4076 = vmatprep.subr.bf16.mxu0 0
    %4077 = vmatpush1.bf16.msra.mxu0 %v4074
    %4078 = vmatprep.subr.bf16.mxu0 0
    %4079 = vmatpush1.bf16.msra.mxu0 0
    %4080 = vmatprep.subr.bf16.mxu0 0
    %4081 = vmatpush1.bf16.msra.mxu0 0
    %4082 = vmatprep.subr.bf16.mxu0 0
    %4083 = vmatpush1.bf16.msra.mxu0 0
    %4084 = vmatprep.subr.bf16.mxu0 0
    %4085 = vmatpush1.bf16.msra.mxu0 0
    %4086 = vmatprep.subr.bf16.mxu0 0
    %4087 = vmatpush1.bf16.msra.mxu0 0
    %4088 = vmatprep.subr.bf16.mxu0 0
    %4089 = vmatpush1.bf16.msra.mxu0 0
    %4090 = vmatprep.subr.bf16.mxu0 0
    %4091 = vmatpush1.bf16.msra.mxu0 0
    %4092 = vmatprep.subr.bf16.mxu0 0
    %4093 = vmatpush1.bf16.msra.mxu0 0
    %4094 = vmatprep.subr.bf16.mxu0 0
    %4095 = vmatpush1.bf16.msra.mxu0 0
    %4096 = vmatprep.subr.bf16.mxu0 0
    %4097 = vmatpush1.bf16.msra.mxu0 0
    %4098 = vmatprep.subr.bf16.mxu0 0
    %4099 = vmatpush1.bf16.msra.mxu0 0
    %4100 = vmatprep.subr.bf16.mxu0 0
    %4101 = vmatpush1.bf16.msra.mxu0 0
    %4102 = vmatprep.subr.bf16.mxu0 0
    %4103 = vmatpush1.bf16.msra.mxu0 0
    %4104 = vmatprep.subr.bf16.mxu0 0
    %4105 = vmatpush1.bf16.msra.mxu0 0
    %4106 = vmatprep.subr.bf16.mxu0 0
    %4107 = vmatpush1.bf16.msra.mxu0 0
    %4108 = vmatprep.mubr.bf16.mxu0 0
    %4109 = vmatmul.mubr.bf16.gmra.mrb[0].mxu0 %v4071
    %v4110 = vpop.f32.mrb[0].mxu0
    %v4111 = vadd.f32 0.0, %v4110
    %v4112 = vpop.f32.mrb[0].mxu0
    %v4113 = vpop.f32.mrb[0].mxu0
    %v4114 = vpop.f32.mrb[0].mxu0
    %4115 = vdwg.mxu0
    %v4117 = vsel %vm879, %v4064, 0
    %4119 = vmatprep.subr.bf16.mxu0 0
    %4120 = vmatpush1.bf16.msra.mxu0 %v4074
    %4121 = vmatprep.subr.bf16.mxu0 0
    %4122 = vmatpush1.bf16.msra.mxu0 0
    %4123 = vmatprep.subr.bf16.mxu0 0
    %4124 = vmatpush1.bf16.msra.mxu0 0
    %4125 = vmatprep.subr.bf16.mxu0 0
    %4126 = vmatpush1.bf16.msra.mxu0 0
    %4127 = vmatprep.subr.bf16.mxu0 0
    %4128 = vmatpush1.bf16.msra.mxu0 0
    %4129 = vmatprep.subr.bf16.mxu0 0
    %4130 = vmatpush1.bf16.msra.mxu0 0
    %4131 = vmatprep.subr.bf16.mxu0 0
    %4132 = vmatpush1.bf16.msra.mxu0 0
    %4133 = vmatprep.subr.bf16.mxu0 0
    %4134 = vmatpush1.bf16.msra.mxu0 0
    %4135 = vmatprep.subr.bf16.mxu0 0
    %4136 = vmatpush1.bf16.msra.mxu0 0
    %4137 = vmatprep.subr.bf16.mxu0 0
    %4138 = vmatpush1.bf16.msra.mxu0 0
    %4139 = vmatprep.subr.bf16.mxu0 0
    %4140 = vmatpush1.bf16.msra.mxu0 0
    %4141 = vmatprep.subr.bf16.mxu0 0
    %4142 = vmatpush1.bf16.msra.mxu0 0
    %4143 = vmatprep.subr.bf16.mxu0 0
    %4144 = vmatpush1.bf16.msra.mxu0 0
    %4145 = vmatprep.subr.bf16.mxu0 0
    %4146 = vmatpush1.bf16.msra.mxu0 0
    %4147 = vmatprep.subr.bf16.mxu0 0
    %4148 = vmatpush1.bf16.msra.mxu0 0
    %4149 = vmatprep.subr.bf16.mxu0 0
    %4150 = vmatpush1.bf16.msra.mxu0 0
    %4151 = vmatprep.mubr.bf16.mxu0 0
    %4152 = vmatmul.mubr.bf16.gmra.mrb[0].mxu0 %v4117
    %v4153 = vpop.f32.mrb[0].mxu0
    %v4154 = vadd.f32 %v4111, %v4153
    %v4155 = vpop.f32.mrb[0].mxu0
    %v4156 = vpop.f32.mrb[0].mxu0
    %v4157 = vpop.f32.mrb[0].mxu0
    %4158 = vdwg.mxu0
    %4159 = vrot.lane.b32.xlu0 %v2788, 104
    %v4160 = vpop.permute.xlu0 %4159
    %v4162 = vsel %vm1036, %v4160, 0
    %4164 = vmatprep.subr.bf16.mxu0 0
    %4165 = vmatpush1.bf16.msra.mxu0 %v4162
    %4166 = vmatprep.subr.bf16.mxu0 0
    %4167 = vmatpush1.bf16.msra.mxu0 0
    %4168 = vmatprep.subr.bf16.mxu0 0
    %4169 = vmatpush1.bf16.msra.mxu0 0
    %4170 = vmatprep.subr.bf16.mxu0 0
    %4171 = vmatpush1.bf16.msra.mxu0 0
    %4172 = vmatprep.subr.bf16.mxu0 0
    %4173 = vmatpush1.bf16.msra.mxu0 0
    %4174 = vmatprep.subr.bf16.mxu0 0
    %4175 = vmatpush1.bf16.msra.mxu0 0
    %4176 = vmatprep.subr.bf16.mxu0 0
    %4177 = vmatpush1.bf16.msra.mxu0 0
    %4178 = vmatprep.subr.bf16.mxu0 0
    %4179 = vmatpush1.bf16.msra.mxu0 0
    %4180 = vmatprep.subr.bf16.mxu0 0
    %4181 = vmatpush1.bf16.msra.mxu0 0
    %4182 = vmatprep.subr.bf16.mxu0 0
    %4183 = vmatpush1.bf16.msra.mxu0 0
    %4184 = vmatprep.subr.bf16.mxu0 0
    %4185 = vmatpush1.bf16.msra.mxu0 0
    %4186 = vmatprep.subr.bf16.mxu0 0
    %4187 = vmatpush1.bf16.msra.mxu0 0
    %4188 = vmatprep.subr.bf16.mxu0 0
    %4189 = vmatpush1.bf16.msra.mxu0 0
    %4190 = vmatprep.subr.bf16.mxu0 0
    %4191 = vmatpush1.bf16.msra.mxu0 0
    %4192 = vmatprep.subr.bf16.mxu0 0
    %4193 = vmatpush1.bf16.msra.mxu0 0
    %4194 = vmatprep.subr.bf16.mxu0 0
    %4195 = vmatpush1.bf16.msra.mxu0 0
    %4196 = vmatprep.mubr.bf16.mxu0 0
    %4197 = vmatmul.mubr.bf16.gmra.mrb[0].mxu0 %v4117
    %v4198 = vpop.f32.mrb[0].mxu0
    %v4199 = vadd.f32 0.0, %v4198
    %v4200 = vpop.f32.mrb[0].mxu0
    %v4201 = vpop.f32.mrb[0].mxu0
    %v4202 = vpop.f32.mrb[0].mxu0
    %4203 = vdwg.mxu0
    %v4204 = vadd.f32 %v4154, %v4199
    %v4205 = vpack.c.bf16 %v4204, %v4204
    %v4206 = vunpack.c.l.bf16 %v4205
    %v4207 = vsub.f32 %v4204, %v4206
    %v4208 = vpack.c.bf16 %v4207, %v4207
    %v4210 = vsel %vm879, %v4208, 0
    %4212 = vmatprep.subr.bf16.mxu0 0
    %4213 = vmatpush1.bf16.msra.mxu0 %v2492
    %4214 = vmatprep.subr.bf16.mxu0 0
    %4215 = vmatpush1.bf16.msra.mxu0 0
    %4216 = vmatprep.subr.bf16.mxu0 0
    %4217 = vmatpush1.bf16.msra.mxu0 0
    %4218 = vmatprep.subr.bf16.mxu0 0
    %4219 = vmatpush1.bf16.msra.mxu0 0
    %4220 = vmatprep.subr.bf16.mxu0 0
    %4221 = vmatpush1.bf16.msra.mxu0 0
    %4222 = vmatprep.subr.bf16.mxu0 0
    %4223 = vmatpush1.bf16.msra.mxu0 0
    %4224 = vmatprep.subr.bf16.mxu0 0
    %4225 = vmatpush1.bf16.msra.mxu0 0
    %4226 = vmatprep.subr.bf16.mxu0 0
    %4227 = vmatpush1.bf16.msra.mxu0 0
    %4228 = vmatprep.subr.bf16.mxu0 0
    %4229 = vmatpush1.bf16.msra.mxu0 0
    %4230 = vmatprep.subr.bf16.mxu0 0
    %4231 = vmatpush1.bf16.msra.mxu0 0
    %4232 = vmatprep.subr.bf16.mxu0 0
    %4233 = vmatpush1.bf16.msra.mxu0 0
    %4234 = vmatprep.subr.bf16.mxu0 0
    %4235 = vmatpush1.bf16.msra.mxu0 0
    %4236 = vmatprep.subr.bf16.mxu0 0
    %4237 = vmatpush1.bf16.msra.mxu0 0
    %4238 = vmatprep.subr.bf16.mxu0 0
    %4239 = vmatpush1.bf16.msra.mxu0 0
    %4240 = vmatprep.subr.bf16.mxu0 0
    %4241 = vmatpush1.bf16.msra.mxu0 0
    %4242 = vmatprep.subr.bf16.mxu0 0
    %4243 = vmatpush1.bf16.msra.mxu0 0
    %4244 = vmatprep.mubr.bf16.mxu0 0
    %4245 = vmatmul.mubr.bf16.gmra.mrb[0].mxu0 %v4210
    %v4246 = vpop.f32.mrb[0].mxu0
    %v4247 = vadd.f32 0.0, %v4246
    %v4248 = vpop.f32.mrb[0].mxu0
    %v4249 = vpop.f32.mrb[0].mxu0
    %v4250 = vpop.f32.mrb[0].mxu0
    %4251 = vdwg.mxu0
    %v4253 = vsel %vm879, %v4205, 0
    %4255 = vmatprep.subr.bf16.mxu0 0
    %4256 = vmatpush1.bf16.msra.mxu0 %v2492
    %4257 = vmatprep.subr.bf16.mxu0 0
    %4258 = vmatpush1.bf16.msra.mxu0 0
    %4259 = vmatprep.subr.bf16.mxu0 0
    %4260 = vmatpush1.bf16.msra.mxu0 0
    %4261 = vmatprep.subr.bf16.mxu0 0
    %4262 = vmatpush1.bf16.msra.mxu0 0
    %4263 = vmatprep.subr.bf16.mxu0 0
    %4264 = vmatpush1.bf16.msra.mxu0 0
    %4265 = vmatprep.subr.bf16.mxu0 0
    %4266 = vmatpush1.bf16.msra.mxu0 0
    %4267 = vmatprep.subr.bf16.mxu0 0
    %4268 = vmatpush1.bf16.msra.mxu0 0
    %4269 = vmatprep.subr.bf16.mxu0 0
    %4270 = vmatpush1.bf16.msra.mxu0 0
    %4271 = vmatprep.subr.bf16.mxu0 0
    %4272 = vmatpush1.bf16.msra.mxu0 0
    %4273 = vmatprep.subr.bf16.mxu0 0
    %4274 = vmatpush1.bf16.msra.mxu0 0
    %4275 = vmatprep.subr.bf16.mxu0 0
    %4276 = vmatpush1.bf16.msra.mxu0 0
    %4277 = vmatprep.subr.bf16.mxu0 0
    %4278 = vmatpush1.bf16.msra.mxu0 0
    %4279 = vmatprep.subr.bf16.mxu0 0
    %4280 = vmatpush1.bf16.msra.mxu0 0
    %4281 = vmatprep.subr.bf16.mxu0 0
    %4282 = vmatpush1.bf16.msra.mxu0 0
    %4283 = vmatprep.subr.bf16.mxu0 0
    %4284 = vmatpush1.bf16.msra.mxu0 0
    %4285 = vmatprep.subr.bf16.mxu0 0
    %4286 = vmatpush1.bf16.msra.mxu0 0
    %4287 = vmatprep.mubr.bf16.mxu0 0
    %4288 = vmatmul.mubr.bf16.gmra.mrb[0].mxu0 %v4253
    %v4289 = vpop.f32.mrb[0].mxu0
    %v4290 = vadd.f32 %v4247, %v4289
    %v4291 = vpop.f32.mrb[0].mxu0
    %v4292 = vpop.f32.mrb[0].mxu0
    %v4293 = vpop.f32.mrb[0].mxu0
    %4294 = vdwg.mxu0
    %4295 = vmatprep.subr.bf16.mxu0 0
    %4296 = vmatpush1.bf16.msra.mxu0 %v2578
    %4297 = vmatprep.subr.bf16.mxu0 0
    %4298 = vmatpush1.bf16.msra.mxu0 0
    %4299 = vmatprep.subr.bf16.mxu0 0
    %4300 = vmatpush1.bf16.msra.mxu0 0
    %4301 = vmatprep.subr.bf16.mxu0 0
    %4302 = vmatpush1.bf16.msra.mxu0 0
    %4303 = vmatprep.subr.bf16.mxu0 0
    %4304 = vmatpush1.bf16.msra.mxu0 0
    %4305 = vmatprep.subr.bf16.mxu0 0
    %4306 = vmatpush1.bf16.msra.mxu0 0
    %4307 = vmatprep.subr.bf16.mxu0 0
    %4308 = vmatpush1.bf16.msra.mxu0 0
    %4309 = vmatprep.subr.bf16.mxu0 0
    %4310 = vmatpush1.bf16.msra.mxu0 0
    %4311 = vmatprep.subr.bf16.mxu0 0
    %4312 = vmatpush1.bf16.msra.mxu0 0
    %4313 = vmatprep.subr.bf16.mxu0 0
    %4314 = vmatpush1.bf16.msra.mxu0 0
    %4315 = vmatprep.subr.bf16.mxu0 0
    %4316 = vmatpush1.bf16.msra.mxu0 0
    %4317 = vmatprep.subr.bf16.mxu0 0
    %4318 = vmatpush1.bf16.msra.mxu0 0
    %4319 = vmatprep.subr.bf16.mxu0 0
    %4320 = vmatpush1.bf16.msra.mxu0 0
    %4321 = vmatprep.subr.bf16.mxu0 0
    %4322 = vmatpush1.bf16.msra.mxu0 0
    %4323 = vmatprep.subr.bf16.mxu0 0
    %4324 = vmatpush1.bf16.msra.mxu0 0
    %4325 = vmatprep.subr.bf16.mxu0 0
    %4326 = vmatpush1.bf16.msra.mxu0 0
    %4327 = vmatprep.mubr.bf16.mxu0 0
    %4328 = vmatmul.mubr.bf16.gmra.mrb[0].mxu0 %v4253
    %v4329 = vpop.f32.mrb[0].mxu0
    %v4330 = vadd.f32 0.0, %v4329
    %v4331 = vpop.f32.mrb[0].mxu0
    %v4332 = vpop.f32.mrb[0].mxu0
    %v4333 = vpop.f32.mrb[0].mxu0
    %4334 = vdwg.mxu0
    %v4335 = vadd.f32 %v4290, %v4330
    %v4336 = vadd.f32 %v3910, %v4335
    %v4337 = vadd.f32 %v4336, %v2625
    %s4338 = scalar_lea.vmem [#allocation8], 8
    %4339 = vst.msk [vmem:[%s4338] sm:$0xff] %vm119, %v4337
    // Predicated region
    $region30: #{tpu_custom_call.1} parent=1 // pred_check
      _
    $region31: #{tpu_custom_call.1} parent=1 // pred_check_branch
      %4341 = sbr.rel (0) target = $region33
    $region32: #{tpu_custom_call.1} parent=1 // pred_region
      %s4343 = ssub.s32 256, 256
      %4344 = vsyncadd [#allocation4], %s4343
      %s4345 = sshll.u32 [#allocation8], 4
      %s4346 = int_to_ptr.vmem [resolvable:$true] %s4345
      %4351 = dma.vmem_to_hbm [thread:$0]  %s4346, 256, %s4, [#allocation4], 128, 128, 8
    $region33: #{tpu_custom_call.1} parent=1 // pred_fallthru
      _
    // Predicated region
    $region34: #{tpu_custom_call.1} parent=1 // pred_check
      _
    $region35: #{tpu_custom_call.1} parent=1 // pred_check_branch
      %4353 = sbr.rel (0) target = $region37
    $region36: #{tpu_custom_call.1} parent=1 // pred_region
      %4354 = dma.done [#allocation4], 256
    $region37: #{tpu_custom_call.1} parent=1 // pred_fallthru
      _
    %4355 = vsyncpa [#allocation3], 1
    %4356 = vsyncpa [#allocation6], 1
    %4357 = vsyncpa [#allocation4], 1

</llo_original>
